<compile_context>
chip_gen: v7x
topology: tpu7x:2x2x1
jax: 0.10.0
libtpu: 0.0.40
codegen_flags: <defaults>
</compile_context>

<pallas_src>
import functools

import jax
import jax.numpy as jnp
from jax import lax
from jax.experimental import pallas as pl
from jax.experimental.pallas import tpu as pltpu


# ----------------------------------------------------------------------------
# Fused kernel: single grid step, batch folded into lanes, all stages in VMEM.
# ----------------------------------------------------------------------------
def _chan_attn_fused_kernel(x_ref, wqkv_ref, wdw_ref, wproj_ref,
                            temp_ref, mask_ref, bias_ref, o_ref, *, H, W, nb):
    # x_ref:    (C, B*N)   flattened input, batch folded into lanes, N = D*H*W
    # wqkv_ref: (3C, C)    1x1x1 qkv conv weight            (tap compute dtype)
    # wdw_ref:  (3C, 27)   depthwise 3x3x3 weight, tap = kd*9+kh*3+kw (tap dtype)
    # wproj_ref:(C, C)     1x1x1 projection weight          (f32)
    # temp_ref: (C, 1)     temperature[head] repeated Ch times (f32)
    # mask_ref: (27, B*N)  per-tap zero-padding boundary masks (tap dtype)
    # bias_ref: (C, C)     0 within a head, -1e30 across heads (f32)
    # o_ref:    (C, B*N)
    C, BN = x_ref.shape
    N = BN // nb
    HW = H * W
    tap_dtype = wdw_ref.dtype

    # ---- Stage 1: qkv = Conv3d(dim, 3*dim, 1) == (3C, C) @ (C, B*N) on MXU ---
    qkv = jnp.dot(wqkv_ref[...], x_ref[...], preferred_element_type=jnp.float32)
    qkv_c = qkv.astype(tap_dtype)        # tap-loop operand (bf16 on v6e/v7x)

    # ---- Stage 2: depthwise 3x3x3 conv (stride 1, zero pad 1) on flattened N:
    # tap (kd,kh,kw) == lane roll by (kd-1)*H*W + (kh-1)*W + (kw-1); wrap-around
    # / out-of-bounds positions (including any cross-batch read, since batch
    # boundaries coincide with d boundaries) are zeroed by the precomputed
    # boundary masks.  Fully unrolled; two independent f32 accumulators for
    # add-level ILP; the center tap seeds an accumulator and skips roll+mask. --
    wd = wdw_ref[...]                                         # (3C, 27)
    accs = [None, None]
    slot = 0
    for kd in range(3):
        for kh in range(3):
            for kw in range(3):
                t = kd * 9 + kh * 3 + kw
                off = (kd - 1) * HW + (kh - 1) * W + (kw - 1)
                w_col = wd[:, t:t + 1]                        # (3C, 1)
                if kd == 1 and kh == 1 and kw == 1:
                    # Center tap: zero offset, never out of bounds.
                    term = qkv_c * w_col
                else:
                    # want shifted[n] = qkv[n + off]  (mod B*N, then masked)
                    shifted = pltpu.roll(qkv_c, shift=(-off) % BN, axis=1)
                    term = (shifted * mask_ref[t:t + 1, :]) * w_col
                if accs[slot] is None:
                    accs[slot] = term.astype(jnp.float32)     # seed, no zeros
                else:
                    accs[slot] = accs[slot] + term            # bf16 term -> f32 add
                slot ^= 1
    acc = accs[0] + accs[1]                                   # (3C, B*N) f32

    # ---- Stage 3+4: per-head channel attention + reassociated projection ----
    eps = jnp.float32(1e-12)                                  # F.normalize default

    def l2_inv_norm(t_):
        s = jnp.maximum(jnp.sum(t_ * t_, axis=-1, keepdims=True), eps * eps)
        r = lax.rsqrt(s)                                      # EUP
        return 0.5 * r * (3.0 - s * r * r)                    # Newton -> f32-accurate

    wproj = wproj_ref[...]
    for b in range(nb):                                       # unrolled, lane-aligned
        lo = b * N
        q = acc[0:C, lo:lo + N]
        k = acc[C:2 * C, lo:lo + N]
        v = acc[2 * C:3 * C, lo:lo + N]

        # Per-head temperature as a per-row scale of q (== scaling attn rows).
        qs = (q * l2_inv_norm(q)) * temp_ref[...]
        kn = k * l2_inv_norm(k)

        # (C, C) scores; cross-head entries get -1e30 so the full-row softmax
        # equals the per-head softmax exactly.  (At production dims check the
        # bundle for a materialized transpose of kn — negligible at C=8.)
        s_mat = lax.dot_general(qs, kn, (((1,), (1,)), ((), ())),
                                preferred_element_type=jnp.float32)
        s_mat = s_mat + bias_ref[...]

        m = jnp.max(s_mat, axis=-1, keepdims=True)
        e = jnp.exp(s_mat - m)
        denom = jnp.sum(e, axis=-1, keepdims=True)
        r = pl.reciprocal(denom, approx=True)                 # EUP
        r = r * (2.0 - denom * r)                             # Newton -> f32-accurate
        p = e * r

        # Reassociated projection: (wproj @ p) @ v == wproj @ (p @ v), but one
        # CxCxC + one CxCxN MXU product and no (C, N) attn_out intermediate.
        wp = jnp.dot(wproj, p, preferred_element_type=jnp.float32)     # (C, C)
        out_b = jnp.dot(wp, v, preferred_element_type=jnp.float32)     # (C, N)
        o_ref[:, lo:lo + N] = out_b.astype(o_ref.dtype)


# ----------------------------------------------------------------------------
# Host-side (trace-time) constant helpers — hoisted out of the kernel.
# ----------------------------------------------------------------------------
def _tap_masks(D, H, W):
    d = jnp.arange(D)[:, None, None]
    h = jnp.arange(H)[None, :, None]
    w = jnp.arange(W)[None, None, :]
    rows = []
    for kd in range(3):
        for kh in range(3):
            for kw in range(3):
                ok = ((d + (kd - 1) >= 0) & (d + (kd - 1) < D) &
                      (h + (kh - 1) >= 0) & (h + (kh - 1) < H) &
                      (w + (kw - 1) >= 0) & (w + (kw - 1) < W))
                rows.append(ok.reshape(-1))
    return jnp.stack(rows, axis=0).astype(jnp.float32)        # (27, D*H*W)


def _head_bias(C, num_heads):
    Ch = C // num_heads
    hid = jnp.arange(C) // Ch
    same = hid[:, None] == hid[None, :]
    return jnp.where(same, 0.0, -1e30).astype(jnp.float32)    # (C, C)


def _vpu_has_bf16():
    """bf16 elementwise path only on v6e / v7x (v5e/v4 VPU has no bf16)."""
    try:
        kind = jax.devices()[0].device_kind.lower()
    except Exception:
        return False
    return any(tag in kind for tag in ("v6", "v7", "7x"))


# ----------------------------------------------------------------------------
# Full forward pass: ONE fused pallas_call, single grid step.
# ----------------------------------------------------------------------------
@functools.partial(jax.jit, static_argnames=("num_heads", "use_bf16"))
def chan_attention_forward(x, w_qkv, w_dw, w_proj, temperature, num_heads,
                           use_bf16=False):
    B, C, D, H, W = x.shape
    N = D * H * W
    BN = B * N
    C3 = 3 * C
    Ch = C // num_heads
    tap_dtype = jnp.bfloat16 if use_bf16 else jnp.float32

    # Batch folded into the lane axis: column index = b*N + n.
    x2 = jnp.transpose(x.reshape(B, C, N), (1, 0, 2)).reshape(C, BN).astype(tap_dtype)
    w_qkv_c = w_qkv.astype(tap_dtype)
    w_dw_flat = w_dw.reshape(C3, 27).astype(tap_dtype)        # tap = kd*9 + kh*3 + kw
    temp_col = jnp.repeat(temperature, Ch)[:, None].astype(jnp.float32)   # (C, 1)
    masks = jnp.tile(_tap_masks(D, H, W), (1, B)).astype(tap_dtype)       # (27, B*N)
    bias = _head_bias(C, num_heads)                                        # (C, C)

    kernel = functools.partial(_chan_attn_fused_kernel, H=H, W=W, nb=B)

    out = pl.pallas_call(
        kernel,
        out_shape=jax.ShapeDtypeStruct((C, BN), x.dtype),
        grid=(1,),
        in_specs=[
            pl.BlockSpec((C, BN), lambda i: (0, 0)),    # x (batch in lanes)
            pl.BlockSpec((C3, C), lambda i: (0, 0)),    # w_qkv
            pl.BlockSpec((C3, 27), lambda i: (0, 0)),   # w_dw (flattened taps)
            pl.BlockSpec((C, C), lambda i: (0, 0)),     # w_proj
            pl.BlockSpec((C, 1), lambda i: (0, 0)),     # temperature column
            pl.BlockSpec((27, BN), lambda i: (0, 0)),   # dwconv boundary masks
            pl.BlockSpec((C, C), lambda i: (0, 0)),     # cross-head bias
        ],
        out_specs=pl.BlockSpec((C, BN), lambda i: (0, 0)),
        compiler_params=pltpu.CompilerParams(
            dimension_semantics=("arbitrary",),
        ),
    )(x2, w_qkv_c, w_dw_flat, w_proj.astype(jnp.float32), temp_col, masks, bias)

    # (C, B*N) -> (B, C, D, H, W)
    return jnp.transpose(out.reshape(C, B, N), (1, 0, 2)).reshape(B, C, D, H, W)


# ----------------------------------------------------------------------------
# Pure-JAX reference (HIGHEST matmul precision) for the correctness check
# ----------------------------------------------------------------------------
def reference_forward(x, w_qkv, w_dw, w_proj, temperature, num_heads):
    P = lax.Precision.HIGHEST
    B, C, D, H, W = x.shape
    N = D * H * W
    qkv = jnp.einsum("oc,bcdhw->bodhw", w_qkv, x, precision=P)
    xp = jnp.pad(qkv, ((0, 0), (0, 0), (1, 1), (1, 1), (1, 1)))
    acc = jnp.zeros_like(qkv)
    for kd in range(3):
        for kh in range(3):
            for kw in range(3):
                acc = acc + (
                    xp[:, :, kd:kd + D, kh:kh + H, kw:kw + W]
                    * w_dw[:, kd, kh, kw][None, :, None, None, None]
                )
    q, k, v = jnp.split(acc.reshape(B, 3 * C, N), 3, axis=1)
    Ch = C // num_heads
    q = q.reshape(B, num_heads, Ch, N)
    k = k.reshape(B, num_heads, Ch, N)
    v = v.reshape(B, num_heads, Ch, N)

    def l2n(t):
        n = jnp.sqrt(jnp.sum(t * t, axis=-1, keepdims=True))
        return t / jnp.maximum(n, 1e-12)

    q, k = l2n(q), l2n(k)
    attn = jnp.einsum("bhcn,bhdn->bhcd", q, k, precision=P) \
        * temperature[None, :, None, None]
    attn = jax.nn.softmax(attn, axis=-1)
    out = jnp.einsum("bhcd,bhdn->bhcn", attn, v, precision=P)
    out = out.reshape(B, C, N)
    out = jnp.einsum("oc,bcn->bon", w_proj, out, precision=P)
    return out.reshape(B, C, D, H, W)


if __name__ == "__main__":
    # Module config: Chan_Attention(dim=8, num_heads=2, bias=False)
    dim, num_heads = 8, 2
    B, D, H, W = 2, 4, 8, 8

    key = jax.random.PRNGKey(0)
    k1, k2, k3, kx = jax.random.split(key, 4)

    # Deterministic parameter init (kernel_size=1 weights stored as 2D matrices).
    w_qkv = 0.1 * jax.random.normal(k1, (3 * dim, dim), jnp.float32)      # Conv3d(dim, 3*dim, 1)
    w_dw = 0.1 * jax.random.normal(k2, (3 * dim, 3, 3, 3), jnp.float32)   # Conv3d(3*dim, 3*dim, 3, groups=3*dim)
    w_proj = 0.1 * jax.random.normal(k3, (dim, dim), jnp.float32)         # Conv3d(dim, dim, 1)
    temperature = 1.0 + 0.1 * jnp.arange(num_heads, dtype=jnp.float32)    # nn.Parameter(ones(h,1,1)) analogue

    x = jax.random.normal(kx, (B, dim, D, H, W), jnp.float32)

    use_bf16 = _vpu_has_bf16()
    out = chan_attention_forward(x, w_qkv, w_dw, w_proj, temperature,
                                 num_heads=num_heads, use_bf16=use_bf16)
    out = jax.block_until_ready(out)

    ref = reference_forward(x, w_qkv, w_dw, w_proj, temperature, num_heads)
    assert out.shape == (B, dim, D, H, W)
    if use_bf16:
        # bf16 tap loop / stage-1 operands (v6e/v7x path): tolerance widened to
        # bf16 input-rounding level; still catches any layout/roll/mask bug
        # (those produce O(1e-1) mismatches).
        rtol, atol = 1e-2, 2e-3
    else:
        # f32 path (v5e/v4): same tight tolerance the previous version passed.
        rtol, atol = 5e-3, 5e-4
    assert jnp.allclose(out, ref, rtol=rtol, atol=atol), "mismatch vs reference"

    print("KERNEL_OK")
</pallas_src>

<mosaic_0001>
module attributes {stable_mosaic.version = 11 : i64} {
  func.func @_chan_attn_fused_kernel(%arg0: i32, %arg1: memref<8x512xf32, #tpu.memory_space<vmem>>, %arg2: memref<24x8xf32, #tpu.memory_space<vmem>>, %arg3: memref<24x27xf32, #tpu.memory_space<vmem>>, %arg4: memref<8x8xf32, #tpu.memory_space<vmem>>, %arg5: memref<8x1xf32, #tpu.memory_space<vmem>>, %arg6: memref<27x512xf32, #tpu.memory_space<vmem>>, %arg7: memref<8x8xf32, #tpu.memory_space<vmem>>, %arg8: memref<8x512xf32, #tpu.memory_space<vmem>>) attributes {dimension_semantics = [#tpu.dimension_semantics<arbitrary>], iteration_bounds = array<i64: 1>, scalar_prefetch = 0 : i64, scratch_operands = 0 : i64, tpu.core_type = #tpu.core_type<tc>, window_params = [{pipeline_mode = #tpu.pipeline_mode<synchronous>, transform_indices = @transform_0, window_bounds = array<i64: 8, 512>}, {pipeline_mode = #tpu.pipeline_mode<synchronous>, transform_indices = @transform_1, window_bounds = array<i64: 24, 8>}, {pipeline_mode = #tpu.pipeline_mode<synchronous>, transform_indices = @transform_2, window_bounds = array<i64: 24, 27>}, {pipeline_mode = #tpu.pipeline_mode<synchronous>, transform_indices = @transform_3, window_bounds = array<i64: 8, 8>}, {pipeline_mode = #tpu.pipeline_mode<synchronous>, transform_indices = @transform_4, window_bounds = array<i64: 8, 1>}, {pipeline_mode = #tpu.pipeline_mode<synchronous>, transform_indices = @transform_5, window_bounds = array<i64: 27, 512>}, {pipeline_mode = #tpu.pipeline_mode<synchronous>, transform_indices = @transform_6, window_bounds = array<i64: 8, 8>}, {pipeline_mode = #tpu.pipeline_mode<synchronous>, transform_indices = @transform_7, window_bounds = array<i64: 8, 512>}]} {
    %c0 = arith.constant 0 : index
    %c0_0 = arith.constant 0 : index
    %0 = vector.load %arg2[%c0, %c0_0] : memref<24x8xf32, #tpu.memory_space<vmem>>, vector<24x8xf32>
    %c0_1 = arith.constant 0 : index
    %c0_2 = arith.constant 0 : index
    %1 = vector.load %arg1[%c0_1, %c0_2] : memref<8x512xf32, #tpu.memory_space<vmem>>, vector<8x512xf32>
    %cst = arith.constant dense<0.000000e+00> : vector<24x512xf32>
    %2 = tpu.matmul %0, %1, %cst {dimension_numbers = #tpu.dot_dimension_numbers<[1], [0], [0], [1], [0, 0, 1, 1], [], []>} : vector<24x8xf32>, vector<8x512xf32>, vector<24x512xf32> -> vector<24x512xf32>
    %c0_3 = arith.constant 0 : index
    %c0_4 = arith.constant 0 : index
    %3 = vector.load %arg3[%c0_3, %c0_4] : memref<24x27xf32, #tpu.memory_space<vmem>>, vector<24x27xf32>
    %4 = vector.extract_strided_slice %3 {offsets = [0, 0], sizes = [24, 1], strides = [1, 1]} : vector<24x27xf32> to vector<24x1xf32>
    %c73_i32 = arith.constant 73 : i32
    %5 = tpu.dynamic_rotate %2 by %c73_i32 dim 1 : vector<24x512xf32>, i32 -> vector<24x512xf32>
    %c0_5 = arith.constant 0 : index
    %c0_6 = arith.constant 0 : index
    %6 = vector.load %arg6[%c0_5, %c0_6] : memref<27x512xf32, #tpu.memory_space<vmem>>, vector<1x512xf32>
    %7 = vector.broadcast %6 : vector<1x512xf32> to vector<24x512xf32>
    %8 = arith.mulf %5, %7 : vector<24x512xf32>
    %9 = vector.broadcast %4 : vector<24x1xf32> to vector<24x512xf32>
    %10 = arith.mulf %8, %9 : vector<24x512xf32>
    %11 = vector.extract_strided_slice %3 {offsets = [0, 1], sizes = [24, 1], strides = [1, 1]} : vector<24x27xf32> to vector<24x1xf32>
    %c72_i32 = arith.constant 72 : i32
    %12 = tpu.dynamic_rotate %2 by %c72_i32 dim 1 : vector<24x512xf32>, i32 -> vector<24x512xf32>
    %c1 = arith.constant 1 : index
    %c0_7 = arith.constant 0 : index
    %13 = vector.load %arg6[%c1, %c0_7] : memref<27x512xf32, #tpu.memory_space<vmem>>, vector<1x512xf32>
    %14 = vector.broadcast %13 : vector<1x512xf32> to vector<24x512xf32>
    %15 = arith.mulf %12, %14 : vector<24x512xf32>
    %16 = vector.broadcast %11 : vector<24x1xf32> to vector<24x512xf32>
    %17 = arith.mulf %15, %16 : vector<24x512xf32>
    %18 = vector.extract_strided_slice %3 {offsets = [0, 2], sizes = [24, 1], strides = [1, 1]} : vector<24x27xf32> to vector<24x1xf32>
    %c71_i32 = arith.constant 71 : i32
    %19 = tpu.dynamic_rotate %2 by %c71_i32 dim 1 : vector<24x512xf32>, i32 -> vector<24x512xf32>
    %c2 = arith.constant 2 : index
    %c0_8 = arith.constant 0 : index
    %20 = vector.load %arg6[%c2, %c0_8] : memref<27x512xf32, #tpu.memory_space<vmem>>, vector<1x512xf32>
    %21 = vector.broadcast %20 : vector<1x512xf32> to vector<24x512xf32>
    %22 = arith.mulf %19, %21 : vector<24x512xf32>
    %23 = vector.broadcast %18 : vector<24x1xf32> to vector<24x512xf32>
    %24 = arith.mulf %22, %23 : vector<24x512xf32>
    %25 = arith.addf %10, %24 : vector<24x512xf32>
    %26 = vector.extract_strided_slice %3 {offsets = [0, 3], sizes = [24, 1], strides = [1, 1]} : vector<24x27xf32> to vector<24x1xf32>
    %c65_i32 = arith.constant 65 : i32
    %27 = tpu.dynamic_rotate %2 by %c65_i32 dim 1 : vector<24x512xf32>, i32 -> vector<24x512xf32>
    %c3 = arith.constant 3 : index
    %c0_9 = arith.constant 0 : index
    %28 = vector.load %arg6[%c3, %c0_9] : memref<27x512xf32, #tpu.memory_space<vmem>>, vector<1x512xf32>
    %29 = vector.broadcast %28 : vector<1x512xf32> to vector<24x512xf32>
    %30 = arith.mulf %27, %29 : vector<24x512xf32>
    %31 = vector.broadcast %26 : vector<24x1xf32> to vector<24x512xf32>
    %32 = arith.mulf %30, %31 : vector<24x512xf32>
    %33 = arith.addf %17, %32 : vector<24x512xf32>
    %34 = vector.extract_strided_slice %3 {offsets = [0, 4], sizes = [24, 1], strides = [1, 1]} : vector<24x27xf32> to vector<24x1xf32>
    %c64_i32 = arith.constant 64 : i32
    %35 = tpu.dynamic_rotate %2 by %c64_i32 dim 1 : vector<24x512xf32>, i32 -> vector<24x512xf32>
    %c4 = arith.constant 4 : index
    %c0_10 = arith.constant 0 : index
    %36 = vector.load %arg6[%c4, %c0_10] : memref<27x512xf32, #tpu.memory_space<vmem>>, vector<1x512xf32>
    %37 = vector.broadcast %36 : vector<1x512xf32> to vector<24x512xf32>
    %38 = arith.mulf %35, %37 : vector<24x512xf32>
    %39 = vector.broadcast %34 : vector<24x1xf32> to vector<24x512xf32>
    %40 = arith.mulf %38, %39 : vector<24x512xf32>
    %41 = arith.addf %25, %40 : vector<24x512xf32>
    %42 = vector.extract_strided_slice %3 {offsets = [0, 5], sizes = [24, 1], strides = [1, 1]} : vector<24x27xf32> to vector<24x1xf32>
    %c63_i32 = arith.constant 63 : i32
    %43 = tpu.dynamic_rotate %2 by %c63_i32 dim 1 : vector<24x512xf32>, i32 -> vector<24x512xf32>
    %c5 = arith.constant 5 : index
    %c0_11 = arith.constant 0 : index
    %44 = vector.load %arg6[%c5, %c0_11] : memref<27x512xf32, #tpu.memory_space<vmem>>, vector<1x512xf32>
    %45 = vector.broadcast %44 : vector<1x512xf32> to vector<24x512xf32>
    %46 = arith.mulf %43, %45 : vector<24x512xf32>
    %47 = vector.broadcast %42 : vector<24x1xf32> to vector<24x512xf32>
    %48 = arith.mulf %46, %47 : vector<24x512xf32>
    %49 = arith.addf %33, %48 : vector<24x512xf32>
    %50 = vector.extract_strided_slice %3 {offsets = [0, 6], sizes = [24, 1], strides = [1, 1]} : vector<24x27xf32> to vector<24x1xf32>
    %c57_i32 = arith.constant 57 : i32
    %51 = tpu.dynamic_rotate %2 by %c57_i32 dim 1 : vector<24x512xf32>, i32 -> vector<24x512xf32>
    %c6 = arith.constant 6 : index
    %c0_12 = arith.constant 0 : index
    %52 = vector.load %arg6[%c6, %c0_12] : memref<27x512xf32, #tpu.memory_space<vmem>>, vector<1x512xf32>
    %53 = vector.broadcast %52 : vector<1x512xf32> to vector<24x512xf32>
    %54 = arith.mulf %51, %53 : vector<24x512xf32>
    %55 = vector.broadcast %50 : vector<24x1xf32> to vector<24x512xf32>
    %56 = arith.mulf %54, %55 : vector<24x512xf32>
    %57 = arith.addf %41, %56 : vector<24x512xf32>
    %58 = vector.extract_strided_slice %3 {offsets = [0, 7], sizes = [24, 1], strides = [1, 1]} : vector<24x27xf32> to vector<24x1xf32>
    %c56_i32 = arith.constant 56 : i32
    %59 = tpu.dynamic_rotate %2 by %c56_i32 dim 1 : vector<24x512xf32>, i32 -> vector<24x512xf32>
    %c7 = arith.constant 7 : index
    %c0_13 = arith.constant 0 : index
    %60 = vector.load %arg6[%c7, %c0_13] : memref<27x512xf32, #tpu.memory_space<vmem>>, vector<1x512xf32>
    %61 = vector.broadcast %60 : vector<1x512xf32> to vector<24x512xf32>
    %62 = arith.mulf %59, %61 : vector<24x512xf32>
    %63 = vector.broadcast %58 : vector<24x1xf32> to vector<24x512xf32>
    %64 = arith.mulf %62, %63 : vector<24x512xf32>
    %65 = arith.addf %49, %64 : vector<24x512xf32>
    %66 = vector.extract_strided_slice %3 {offsets = [0, 8], sizes = [24, 1], strides = [1, 1]} : vector<24x27xf32> to vector<24x1xf32>
    %c55_i32 = arith.constant 55 : i32
    %67 = tpu.dynamic_rotate %2 by %c55_i32 dim 1 : vector<24x512xf32>, i32 -> vector<24x512xf32>
    %c8 = arith.constant 8 : index
    %c0_14 = arith.constant 0 : index
    %68 = vector.load %arg6[%c8, %c0_14] : memref<27x512xf32, #tpu.memory_space<vmem>>, vector<1x512xf32>
    %69 = vector.broadcast %68 : vector<1x512xf32> to vector<24x512xf32>
    %70 = arith.mulf %67, %69 : vector<24x512xf32>
    %71 = vector.broadcast %66 : vector<24x1xf32> to vector<24x512xf32>
    %72 = arith.mulf %70, %71 : vector<24x512xf32>
    %73 = arith.addf %57, %72 : vector<24x512xf32>
    %74 = vector.extract_strided_slice %3 {offsets = [0, 9], sizes = [24, 1], strides = [1, 1]} : vector<24x27xf32> to vector<24x1xf32>
    %c9_i32 = arith.constant 9 : i32
    %75 = tpu.dynamic_rotate %2 by %c9_i32 dim 1 : vector<24x512xf32>, i32 -> vector<24x512xf32>
    %c9 = arith.constant 9 : index
    %c0_15 = arith.constant 0 : index
    %76 = vector.load %arg6[%c9, %c0_15] : memref<27x512xf32, #tpu.memory_space<vmem>>, vector<1x512xf32>
    %77 = vector.broadcast %76 : vector<1x512xf32> to vector<24x512xf32>
    %78 = arith.mulf %75, %77 : vector<24x512xf32>
    %79 = vector.broadcast %74 : vector<24x1xf32> to vector<24x512xf32>
    %80 = arith.mulf %78, %79 : vector<24x512xf32>
    %81 = arith.addf %65, %80 : vector<24x512xf32>
    %82 = vector.extract_strided_slice %3 {offsets = [0, 10], sizes = [24, 1], strides = [1, 1]} : vector<24x27xf32> to vector<24x1xf32>
    %c8_i32 = arith.constant 8 : i32
    %83 = tpu.dynamic_rotate %2 by %c8_i32 dim 1 : vector<24x512xf32>, i32 -> vector<24x512xf32>
    %c10 = arith.constant 10 : index
    %c0_16 = arith.constant 0 : index
    %84 = vector.load %arg6[%c10, %c0_16] : memref<27x512xf32, #tpu.memory_space<vmem>>, vector<1x512xf32>
    %85 = vector.broadcast %84 : vector<1x512xf32> to vector<24x512xf32>
    %86 = arith.mulf %83, %85 : vector<24x512xf32>
    %87 = vector.broadcast %82 : vector<24x1xf32> to vector<24x512xf32>
    %88 = arith.mulf %86, %87 : vector<24x512xf32>
    %89 = arith.addf %73, %88 : vector<24x512xf32>
    %90 = vector.extract_strided_slice %3 {offsets = [0, 11], sizes = [24, 1], strides = [1, 1]} : vector<24x27xf32> to vector<24x1xf32>
    %c7_i32 = arith.constant 7 : i32
    %91 = tpu.dynamic_rotate %2 by %c7_i32 dim 1 : vector<24x512xf32>, i32 -> vector<24x512xf32>
    %c11 = arith.constant 11 : index
    %c0_17 = arith.constant 0 : index
    %92 = vector.load %arg6[%c11, %c0_17] : memref<27x512xf32, #tpu.memory_space<vmem>>, vector<1x512xf32>
    %93 = vector.broadcast %92 : vector<1x512xf32> to vector<24x512xf32>
    %94 = arith.mulf %91, %93 : vector<24x512xf32>
    %95 = vector.broadcast %90 : vector<24x1xf32> to vector<24x512xf32>
    %96 = arith.mulf %94, %95 : vector<24x512xf32>
    %97 = arith.addf %81, %96 : vector<24x512xf32>
    %98 = vector.extract_strided_slice %3 {offsets = [0, 12], sizes = [24, 1], strides = [1, 1]} : vector<24x27xf32> to vector<24x1xf32>
    %c1_i32 = arith.constant 1 : i32
    %99 = tpu.dynamic_rotate %2 by %c1_i32 dim 1 : vector<24x512xf32>, i32 -> vector<24x512xf32>
    %c12 = arith.constant 12 : index
    %c0_18 = arith.constant 0 : index
    %100 = vector.load %arg6[%c12, %c0_18] : memref<27x512xf32, #tpu.memory_space<vmem>>, vector<1x512xf32>
    %101 = vector.broadcast %100 : vector<1x512xf32> to vector<24x512xf32>
    %102 = arith.mulf %99, %101 : vector<24x512xf32>
    %103 = vector.broadcast %98 : vector<24x1xf32> to vector<24x512xf32>
    %104 = arith.mulf %102, %103 : vector<24x512xf32>
    %105 = arith.addf %89, %104 : vector<24x512xf32>
    %106 = vector.extract_strided_slice %3 {offsets = [0, 13], sizes = [24, 1], strides = [1, 1]} : vector<24x27xf32> to vector<24x1xf32>
    %107 = vector.broadcast %106 : vector<24x1xf32> to vector<24x512xf32>
    %108 = arith.mulf %2, %107 : vector<24x512xf32>
    %109 = arith.addf %97, %108 : vector<24x512xf32>
    %110 = vector.extract_strided_slice %3 {offsets = [0, 14], sizes = [24, 1], strides = [1, 1]} : vector<24x27xf32> to vector<24x1xf32>
    %c511_i32 = arith.constant 511 : i32
    %111 = tpu.dynamic_rotate %2 by %c511_i32 dim 1 : vector<24x512xf32>, i32 -> vector<24x512xf32>
    %c14 = arith.constant 14 : index
    %c0_19 = arith.constant 0 : index
    %112 = vector.load %arg6[%c14, %c0_19] : memref<27x512xf32, #tpu.memory_space<vmem>>, vector<1x512xf32>
    %113 = vector.broadcast %112 : vector<1x512xf32> to vector<24x512xf32>
    %114 = arith.mulf %111, %113 : vector<24x512xf32>
    %115 = vector.broadcast %110 : vector<24x1xf32> to vector<24x512xf32>
    %116 = arith.mulf %114, %115 : vector<24x512xf32>
    %117 = arith.addf %105, %116 : vector<24x512xf32>
    %118 = vector.extract_strided_slice %3 {offsets = [0, 15], sizes = [24, 1], strides = [1, 1]} : vector<24x27xf32> to vector<24x1xf32>
    %c505_i32 = arith.constant 505 : i32
    %119 = tpu.dynamic_rotate %2 by %c505_i32 dim 1 : vector<24x512xf32>, i32 -> vector<24x512xf32>
    %c15 = arith.constant 15 : index
    %c0_20 = arith.constant 0 : index
    %120 = vector.load %arg6[%c15, %c0_20] : memref<27x512xf32, #tpu.memory_space<vmem>>, vector<1x512xf32>
    %121 = vector.broadcast %120 : vector<1x512xf32> to vector<24x512xf32>
    %122 = arith.mulf %119, %121 : vector<24x512xf32>
    %123 = vector.broadcast %118 : vector<24x1xf32> to vector<24x512xf32>
    %124 = arith.mulf %122, %123 : vector<24x512xf32>
    %125 = arith.addf %109, %124 : vector<24x512xf32>
    %126 = vector.extract_strided_slice %3 {offsets = [0, 16], sizes = [24, 1], strides = [1, 1]} : vector<24x27xf32> to vector<24x1xf32>
    %c504_i32 = arith.constant 504 : i32
    %127 = tpu.dynamic_rotate %2 by %c504_i32 dim 1 : vector<24x512xf32>, i32 -> vector<24x512xf32>
    %c16 = arith.constant 16 : index
    %c0_21 = arith.constant 0 : index
    %128 = vector.load %arg6[%c16, %c0_21] : memref<27x512xf32, #tpu.memory_space<vmem>>, vector<1x512xf32>
    %129 = vector.broadcast %128 : vector<1x512xf32> to vector<24x512xf32>
    %130 = arith.mulf %127, %129 : vector<24x512xf32>
    %131 = vector.broadcast %126 : vector<24x1xf32> to vector<24x512xf32>
    %132 = arith.mulf %130, %131 : vector<24x512xf32>
    %133 = arith.addf %117, %132 : vector<24x512xf32>
    %134 = vector.extract_strided_slice %3 {offsets = [0, 17], sizes = [24, 1], strides = [1, 1]} : vector<24x27xf32> to vector<24x1xf32>
    %c503_i32 = arith.constant 503 : i32
    %135 = tpu.dynamic_rotate %2 by %c503_i32 dim 1 : vector<24x512xf32>, i32 -> vector<24x512xf32>
    %c17 = arith.constant 17 : index
    %c0_22 = arith.constant 0 : index
    %136 = vector.load %arg6[%c17, %c0_22] : memref<27x512xf32, #tpu.memory_space<vmem>>, vector<1x512xf32>
    %137 = vector.broadcast %136 : vector<1x512xf32> to vector<24x512xf32>
    %138 = arith.mulf %135, %137 : vector<24x512xf32>
    %139 = vector.broadcast %134 : vector<24x1xf32> to vector<24x512xf32>
    %140 = arith.mulf %138, %139 : vector<24x512xf32>
    %141 = arith.addf %125, %140 : vector<24x512xf32>
    %142 = vector.extract_strided_slice %3 {offsets = [0, 18], sizes = [24, 1], strides = [1, 1]} : vector<24x27xf32> to vector<24x1xf32>
    %c457_i32 = arith.constant 457 : i32
    %143 = tpu.dynamic_rotate %2 by %c457_i32 dim 1 : vector<24x512xf32>, i32 -> vector<24x512xf32>
    %c18 = arith.constant 18 : index
    %c0_23 = arith.constant 0 : index
    %144 = vector.load %arg6[%c18, %c0_23] : memref<27x512xf32, #tpu.memory_space<vmem>>, vector<1x512xf32>
    %145 = vector.broadcast %144 : vector<1x512xf32> to vector<24x512xf32>
    %146 = arith.mulf %143, %145 : vector<24x512xf32>
    %147 = vector.broadcast %142 : vector<24x1xf32> to vector<24x512xf32>
    %148 = arith.mulf %146, %147 : vector<24x512xf32>
    %149 = arith.addf %133, %148 : vector<24x512xf32>
    %150 = vector.extract_strided_slice %3 {offsets = [0, 19], sizes = [24, 1], strides = [1, 1]} : vector<24x27xf32> to vector<24x1xf32>
    %c456_i32 = arith.constant 456 : i32
    %151 = tpu.dynamic_rotate %2 by %c456_i32 dim 1 : vector<24x512xf32>, i32 -> vector<24x512xf32>
    %c19 = arith.constant 19 : index
    %c0_24 = arith.constant 0 : index
    %152 = vector.load %arg6[%c19, %c0_24] : memref<27x512xf32, #tpu.memory_space<vmem>>, vector<1x512xf32>
    %153 = vector.broadcast %152 : vector<1x512xf32> to vector<24x512xf32>
    %154 = arith.mulf %151, %153 : vector<24x512xf32>
    %155 = vector.broadcast %150 : vector<24x1xf32> to vector<24x512xf32>
    %156 = arith.mulf %154, %155 : vector<24x512xf32>
    %157 = arith.addf %141, %156 : vector<24x512xf32>
    %158 = vector.extract_strided_slice %3 {offsets = [0, 20], sizes = [24, 1], strides = [1, 1]} : vector<24x27xf32> to vector<24x1xf32>
    %c455_i32 = arith.constant 455 : i32
    %159 = tpu.dynamic_rotate %2 by %c455_i32 dim 1 : vector<24x512xf32>, i32 -> vector<24x512xf32>
    %c20 = arith.constant 20 : index
    %c0_25 = arith.constant 0 : index
    %160 = vector.load %arg6[%c20, %c0_25] : memref<27x512xf32, #tpu.memory_space<vmem>>, vector<1x512xf32>
    %161 = vector.broadcast %160 : vector<1x512xf32> to vector<24x512xf32>
    %162 = arith.mulf %159, %161 : vector<24x512xf32>
    %163 = vector.broadcast %158 : vector<24x1xf32> to vector<24x512xf32>
    %164 = arith.mulf %162, %163 : vector<24x512xf32>
    %165 = arith.addf %149, %164 : vector<24x512xf32>
    %166 = vector.extract_strided_slice %3 {offsets = [0, 21], sizes = [24, 1], strides = [1, 1]} : vector<24x27xf32> to vector<24x1xf32>
    %c449_i32 = arith.constant 449 : i32
    %167 = tpu.dynamic_rotate %2 by %c449_i32 dim 1 : vector<24x512xf32>, i32 -> vector<24x512xf32>
    %c21 = arith.constant 21 : index
    %c0_26 = arith.constant 0 : index
    %168 = vector.load %arg6[%c21, %c0_26] : memref<27x512xf32, #tpu.memory_space<vmem>>, vector<1x512xf32>
    %169 = vector.broadcast %168 : vector<1x512xf32> to vector<24x512xf32>
    %170 = arith.mulf %167, %169 : vector<24x512xf32>
    %171 = vector.broadcast %166 : vector<24x1xf32> to vector<24x512xf32>
    %172 = arith.mulf %170, %171 : vector<24x512xf32>
    %173 = arith.addf %157, %172 : vector<24x512xf32>
    %174 = vector.extract_strided_slice %3 {offsets = [0, 22], sizes = [24, 1], strides = [1, 1]} : vector<24x27xf32> to vector<24x1xf32>
    %c448_i32 = arith.constant 448 : i32
    %175 = tpu.dynamic_rotate %2 by %c448_i32 dim 1 : vector<24x512xf32>, i32 -> vector<24x512xf32>
    %c22 = arith.constant 22 : index
    %c0_27 = arith.constant 0 : index
    %176 = vector.load %arg6[%c22, %c0_27] : memref<27x512xf32, #tpu.memory_space<vmem>>, vector<1x512xf32>
    %177 = vector.broadcast %176 : vector<1x512xf32> to vector<24x512xf32>
    %178 = arith.mulf %175, %177 : vector<24x512xf32>
    %179 = vector.broadcast %174 : vector<24x1xf32> to vector<24x512xf32>
    %180 = arith.mulf %178, %179 : vector<24x512xf32>
    %181 = arith.addf %165, %180 : vector<24x512xf32>
    %182 = vector.extract_strided_slice %3 {offsets = [0, 23], sizes = [24, 1], strides = [1, 1]} : vector<24x27xf32> to vector<24x1xf32>
    %c447_i32 = arith.constant 447 : i32
    %183 = tpu.dynamic_rotate %2 by %c447_i32 dim 1 : vector<24x512xf32>, i32 -> vector<24x512xf32>
    %c23 = arith.constant 23 : index
    %c0_28 = arith.constant 0 : index
    %184 = vector.load %arg6[%c23, %c0_28] : memref<27x512xf32, #tpu.memory_space<vmem>>, vector<1x512xf32>
    %185 = vector.broadcast %184 : vector<1x512xf32> to vector<24x512xf32>
    %186 = arith.mulf %183, %185 : vector<24x512xf32>
    %187 = vector.broadcast %182 : vector<24x1xf32> to vector<24x512xf32>
    %188 = arith.mulf %186, %187 : vector<24x512xf32>
    %189 = arith.addf %173, %188 : vector<24x512xf32>
    %190 = vector.extract_strided_slice %3 {offsets = [0, 24], sizes = [24, 1], strides = [1, 1]} : vector<24x27xf32> to vector<24x1xf32>
    %c441_i32 = arith.constant 441 : i32
    %191 = tpu.dynamic_rotate %2 by %c441_i32 dim 1 : vector<24x512xf32>, i32 -> vector<24x512xf32>
    %c24 = arith.constant 24 : index
    %c0_29 = arith.constant 0 : index
    %192 = vector.load %arg6[%c24, %c0_29] : memref<27x512xf32, #tpu.memory_space<vmem>>, vector<1x512xf32>
    %193 = vector.broadcast %192 : vector<1x512xf32> to vector<24x512xf32>
    %194 = arith.mulf %191, %193 : vector<24x512xf32>
    %195 = vector.broadcast %190 : vector<24x1xf32> to vector<24x512xf32>
    %196 = arith.mulf %194, %195 : vector<24x512xf32>
    %197 = arith.addf %181, %196 : vector<24x512xf32>
    %198 = vector.extract_strided_slice %3 {offsets = [0, 25], sizes = [24, 1], strides = [1, 1]} : vector<24x27xf32> to vector<24x1xf32>
    %c440_i32 = arith.constant 440 : i32
    %199 = tpu.dynamic_rotate %2 by %c440_i32 dim 1 : vector<24x512xf32>, i32 -> vector<24x512xf32>
    %c25 = arith.constant 25 : index
    %c0_30 = arith.constant 0 : index
    %200 = vector.load %arg6[%c25, %c0_30] : memref<27x512xf32, #tpu.memory_space<vmem>>, vector<1x512xf32>
    %201 = vector.broadcast %200 : vector<1x512xf32> to vector<24x512xf32>
    %202 = arith.mulf %199, %201 : vector<24x512xf32>
    %203 = vector.broadcast %198 : vector<24x1xf32> to vector<24x512xf32>
    %204 = arith.mulf %202, %203 : vector<24x512xf32>
    %205 = arith.addf %189, %204 : vector<24x512xf32>
    %206 = vector.extract_strided_slice %3 {offsets = [0, 26], sizes = [24, 1], strides = [1, 1]} : vector<24x27xf32> to vector<24x1xf32>
    %c439_i32 = arith.constant 439 : i32
    %207 = tpu.dynamic_rotate %2 by %c439_i32 dim 1 : vector<24x512xf32>, i32 -> vector<24x512xf32>
    %c26 = arith.constant 26 : index
    %c0_31 = arith.constant 0 : index
    %208 = vector.load %arg6[%c26, %c0_31] : memref<27x512xf32, #tpu.memory_space<vmem>>, vector<1x512xf32>
    %209 = vector.broadcast %208 : vector<1x512xf32> to vector<24x512xf32>
    %210 = arith.mulf %207, %209 : vector<24x512xf32>
    %211 = vector.broadcast %206 : vector<24x1xf32> to vector<24x512xf32>
    %212 = arith.mulf %210, %211 : vector<24x512xf32>
    %213 = arith.addf %197, %212 : vector<24x512xf32>
    %214 = arith.addf %213, %205 : vector<24x512xf32>
    %c0_32 = arith.constant 0 : index
    %c0_33 = arith.constant 0 : index
    %215 = vector.load %arg4[%c0_32, %c0_33] : memref<8x8xf32, #tpu.memory_space<vmem>>, vector<8x8xf32>
    %216 = vector.extract_strided_slice %214 {offsets = [0, 0], sizes = [8, 256], strides = [1, 1]} : vector<24x512xf32> to vector<8x256xf32>
    %217 = vector.extract_strided_slice %214 {offsets = [8, 0], sizes = [8, 256], strides = [1, 1]} : vector<24x512xf32> to vector<8x256xf32>
    %218 = vector.extract_strided_slice %214 {offsets = [16, 0], sizes = [8, 256], strides = [1, 1]} : vector<24x512xf32> to vector<8x256xf32>
    %219 = arith.mulf %216, %216 : vector<8x256xf32>
    %cst_34 = arith.constant dense<0.000000e+00> : vector<8xf32>
    %220 = vector.multi_reduction <add>, %219, %cst_34 [1] : vector<8x256xf32> to vector<8xf32>
    %221 = vector.shape_cast %220 : vector<8xf32> to vector<8x1xf32>
    %cst_35 = arith.constant 9.99999996E-13 : f32
    %cst_36 = arith.constant 9.99999996E-13 : f32
    %222 = arith.mulf %cst_35, %cst_36 : f32
    %223 = vector.broadcast %222 : f32 to vector<8x1xf32>
    %224 = arith.maximumf %221, %223 : vector<8x1xf32>
    %225 = math.rsqrt %224 : vector<8x1xf32>
    %cst_37 = arith.constant 5.000000e-01 : f32
    %226 = vector.broadcast %cst_37 : f32 to vector<8x1xf32>
    %227 = arith.mulf %226, %225 : vector<8x1xf32>
    %228 = arith.mulf %224, %225 : vector<8x1xf32>
    %229 = arith.mulf %228, %225 : vector<8x1xf32>
    %cst_38 = arith.constant 3.000000e+00 : f32
    %230 = vector.broadcast %cst_38 : f32 to vector<8x1xf32>
    %231 = arith.subf %230, %229 : vector<8x1xf32>
    %232 = arith.mulf %227, %231 : vector<8x1xf32>
    %233 = vector.broadcast %232 : vector<8x1xf32> to vector<8x256xf32>
    %234 = arith.mulf %216, %233 : vector<8x256xf32>
    %c0_39 = arith.constant 0 : index
    %c0_40 = arith.constant 0 : index
    %235 = vector.load %arg5[%c0_39, %c0_40] : memref<8x1xf32, #tpu.memory_space<vmem>>, vector<8x1xf32>
    %236 = vector.broadcast %235 : vector<8x1xf32> to vector<8x256xf32>
    %237 = arith.mulf %234, %236 : vector<8x256xf32>
    %238 = arith.mulf %217, %217 : vector<8x256xf32>
    %cst_41 = arith.constant dense<0.000000e+00> : vector<8xf32>
    %239 = vector.multi_reduction <add>, %238, %cst_41 [1] : vector<8x256xf32> to vector<8xf32>
    %240 = vector.shape_cast %239 : vector<8xf32> to vector<8x1xf32>
    %cst_42 = arith.constant 9.99999996E-13 : f32
    %cst_43 = arith.constant 9.99999996E-13 : f32
    %241 = arith.mulf %cst_42, %cst_43 : f32
    %242 = vector.broadcast %241 : f32 to vector<8x1xf32>
    %243 = arith.maximumf %240, %242 : vector<8x1xf32>
    %244 = math.rsqrt %243 : vector<8x1xf32>
    %cst_44 = arith.constant 5.000000e-01 : f32
    %245 = vector.broadcast %cst_44 : f32 to vector<8x1xf32>
    %246 = arith.mulf %245, %244 : vector<8x1xf32>
    %247 = arith.mulf %243, %244 : vector<8x1xf32>
    %248 = arith.mulf %247, %244 : vector<8x1xf32>
    %cst_45 = arith.constant 3.000000e+00 : f32
    %249 = vector.broadcast %cst_45 : f32 to vector<8x1xf32>
    %250 = arith.subf %249, %248 : vector<8x1xf32>
    %251 = arith.mulf %246, %250 : vector<8x1xf32>
    %252 = vector.broadcast %251 : vector<8x1xf32> to vector<8x256xf32>
    %253 = arith.mulf %217, %252 : vector<8x256xf32>
    %cst_46 = arith.constant dense<0.000000e+00> : vector<8x8xf32>
    %254 = tpu.matmul %237, %253, %cst_46 {dimension_numbers = #tpu.dot_dimension_numbers<[1], [1], [0], [0], [0, 0, 1, 0], [], []>} : vector<8x256xf32>, vector<8x256xf32>, vector<8x8xf32> -> vector<8x8xf32>
    %c0_47 = arith.constant 0 : index
    %c0_48 = arith.constant 0 : index
    %255 = vector.load %arg7[%c0_47, %c0_48] : memref<8x8xf32, #tpu.memory_space<vmem>>, vector<8x8xf32>
    %256 = arith.addf %254, %255 : vector<8x8xf32>
    %cst_49 = arith.constant dense<0xFF800000> : vector<8xf32>
    %257 = vector.multi_reduction <maximumf>, %256, %cst_49 [1] : vector<8x8xf32> to vector<8xf32>
    %258 = vector.shape_cast %257 : vector<8xf32> to vector<8x1xf32>
    %259 = vector.broadcast %258 : vector<8x1xf32> to vector<8x8xf32>
    %260 = arith.subf %256, %259 : vector<8x8xf32>
    %261 = math.exp %260 : vector<8x8xf32>
    %cst_50 = arith.constant dense<0.000000e+00> : vector<8xf32>
    %262 = vector.multi_reduction <add>, %261, %cst_50 [1] : vector<8x8xf32> to vector<8xf32>
    %263 = vector.shape_cast %262 : vector<8xf32> to vector<8x1xf32>
    %264 = tpu.reciprocal %263 {approx = true} : vector<8x1xf32> -> vector<8x1xf32>
    %265 = arith.mulf %263, %264 : vector<8x1xf32>
    %cst_51 = arith.constant 2.000000e+00 : f32
    %266 = vector.broadcast %cst_51 : f32 to vector<8x1xf32>
    %267 = arith.subf %266, %265 : vector<8x1xf32>
    %268 = arith.mulf %264, %267 : vector<8x1xf32>
    %269 = vector.broadcast %268 : vector<8x1xf32> to vector<8x8xf32>
    %270 = arith.mulf %261, %269 : vector<8x8xf32>
    %cst_52 = arith.constant dense<0.000000e+00> : vector<8x8xf32>
    %271 = tpu.matmul %215, %270, %cst_52 {dimension_numbers = #tpu.dot_dimension_numbers<[1], [0], [0], [1], [0, 0, 1, 1], [], []>} : vector<8x8xf32>, vector<8x8xf32>, vector<8x8xf32> -> vector<8x8xf32>
    %cst_53 = arith.constant dense<0.000000e+00> : vector<8x256xf32>
    %272 = tpu.matmul %271, %218, %cst_53 {dimension_numbers = #tpu.dot_dimension_numbers<[1], [0], [0], [1], [0, 0, 1, 1], [], []>} : vector<8x8xf32>, vector<8x256xf32>, vector<8x256xf32> -> vector<8x256xf32>
    %c0_54 = arith.constant 0 : index
    %c0_55 = arith.constant 0 : index
    %273 = vector.load %arg8[%c0_54, %c0_55] : memref<8x512xf32, #tpu.memory_space<vmem>>, vector<8x256xf32>
    tpu.vector_store %arg8[%c0_54, %c0_55], %272 {strides = array<i32>} : memref<8x512xf32, #tpu.memory_space<vmem>>, vector<8x256xf32>,
    %274 = vector.extract_strided_slice %214 {offsets = [0, 256], sizes = [8, 256], strides = [1, 1]} : vector<24x512xf32> to vector<8x256xf32>
    %275 = vector.extract_strided_slice %214 {offsets = [8, 256], sizes = [8, 256], strides = [1, 1]} : vector<24x512xf32> to vector<8x256xf32>
    %276 = vector.extract_strided_slice %214 {offsets = [16, 256], sizes = [8, 256], strides = [1, 1]} : vector<24x512xf32> to vector<8x256xf32>
    %277 = arith.mulf %274, %274 : vector<8x256xf32>
    %cst_56 = arith.constant dense<0.000000e+00> : vector<8xf32>
    %278 = vector.multi_reduction <add>, %277, %cst_56 [1] : vector<8x256xf32> to vector<8xf32>
    %279 = vector.shape_cast %278 : vector<8xf32> to vector<8x1xf32>
    %cst_57 = arith.constant 9.99999996E-13 : f32
    %cst_58 = arith.constant 9.99999996E-13 : f32
    %280 = arith.mulf %cst_57, %cst_58 : f32
    %281 = vector.broadcast %280 : f32 to vector<8x1xf32>
    %282 = arith.maximumf %279, %281 : vector<8x1xf32>
    %283 = math.rsqrt %282 : vector<8x1xf32>
    %cst_59 = arith.constant 5.000000e-01 : f32
    %284 = vector.broadcast %cst_59 : f32 to vector<8x1xf32>
    %285 = arith.mulf %284, %283 : vector<8x1xf32>
    %286 = arith.mulf %282, %283 : vector<8x1xf32>
    %287 = arith.mulf %286, %283 : vector<8x1xf32>
    %cst_60 = arith.constant 3.000000e+00 : f32
    %288 = vector.broadcast %cst_60 : f32 to vector<8x1xf32>
    %289 = arith.subf %288, %287 : vector<8x1xf32>
    %290 = arith.mulf %285, %289 : vector<8x1xf32>
    %291 = vector.broadcast %290 : vector<8x1xf32> to vector<8x256xf32>
    %292 = arith.mulf %274, %291 : vector<8x256xf32>
    %c0_61 = arith.constant 0 : index
    %c0_62 = arith.constant 0 : index
    %293 = vector.load %arg5[%c0_61, %c0_62] : memref<8x1xf32, #tpu.memory_space<vmem>>, vector<8x1xf32>
    %294 = vector.broadcast %293 : vector<8x1xf32> to vector<8x256xf32>
    %295 = arith.mulf %292, %294 : vector<8x256xf32>
    %296 = arith.mulf %275, %275 : vector<8x256xf32>
    %cst_63 = arith.constant dense<0.000000e+00> : vector<8xf32>
    %297 = vector.multi_reduction <add>, %296, %cst_63 [1] : vector<8x256xf32> to vector<8xf32>
    %298 = vector.shape_cast %297 : vector<8xf32> to vector<8x1xf32>
    %cst_64 = arith.constant 9.99999996E-13 : f32
    %cst_65 = arith.constant 9.99999996E-13 : f32
    %299 = arith.mulf %cst_64, %cst_65 : f32
    %300 = vector.broadcast %299 : f32 to vector<8x1xf32>
    %301 = arith.maximumf %298, %300 : vector<8x1xf32>
    %302 = math.rsqrt %301 : vector<8x1xf32>
    %cst_66 = arith.constant 5.000000e-01 : f32
    %303 = vector.broadcast %cst_66 : f32 to vector<8x1xf32>
    %304 = arith.mulf %303, %302 : vector<8x1xf32>
    %305 = arith.mulf %301, %302 : vector<8x1xf32>
    %306 = arith.mulf %305, %302 : vector<8x1xf32>
    %cst_67 = arith.constant 3.000000e+00 : f32
    %307 = vector.broadcast %cst_67 : f32 to vector<8x1xf32>
    %308 = arith.subf %307, %306 : vector<8x1xf32>
    %309 = arith.mulf %304, %308 : vector<8x1xf32>
    %310 = vector.broadcast %309 : vector<8x1xf32> to vector<8x256xf32>
    %311 = arith.mulf %275, %310 : vector<8x256xf32>
    %cst_68 = arith.constant dense<0.000000e+00> : vector<8x8xf32>
    %312 = tpu.matmul %295, %311, %cst_68 {dimension_numbers = #tpu.dot_dimension_numbers<[1], [1], [0], [0], [0, 0, 1, 0], [], []>} : vector<8x256xf32>, vector<8x256xf32>, vector<8x8xf32> -> vector<8x8xf32>
    %c0_69 = arith.constant 0 : index
    %c0_70 = arith.constant 0 : index
    %313 = vector.load %arg7[%c0_69, %c0_70] : memref<8x8xf32, #tpu.memory_space<vmem>>, vector<8x8xf32>
    %314 = arith.addf %312, %313 : vector<8x8xf32>
    %cst_71 = arith.constant dense<0xFF800000> : vector<8xf32>
    %315 = vector.multi_reduction <maximumf>, %314, %cst_71 [1] : vector<8x8xf32> to vector<8xf32>
    %316 = vector.shape_cast %315 : vector<8xf32> to vector<8x1xf32>
    %317 = vector.broadcast %316 : vector<8x1xf32> to vector<8x8xf32>
    %318 = arith.subf %314, %317 : vector<8x8xf32>
    %319 = math.exp %318 : vector<8x8xf32>
    %cst_72 = arith.constant dense<0.000000e+00> : vector<8xf32>
    %320 = vector.multi_reduction <add>, %319, %cst_72 [1] : vector<8x8xf32> to vector<8xf32>
    %321 = vector.shape_cast %320 : vector<8xf32> to vector<8x1xf32>
    %322 = tpu.reciprocal %321 {approx = true} : vector<8x1xf32> -> vector<8x1xf32>
    %323 = arith.mulf %321, %322 : vector<8x1xf32>
    %cst_73 = arith.constant 2.000000e+00 : f32
    %324 = vector.broadcast %cst_73 : f32 to vector<8x1xf32>
    %325 = arith.subf %324, %323 : vector<8x1xf32>
    %326 = arith.mulf %322, %325 : vector<8x1xf32>
    %327 = vector.broadcast %326 : vector<8x1xf32> to vector<8x8xf32>
    %328 = arith.mulf %319, %327 : vector<8x8xf32>
    %cst_74 = arith.constant dense<0.000000e+00> : vector<8x8xf32>
    %329 = tpu.matmul %215, %328, %cst_74 {dimension_numbers = #tpu.dot_dimension_numbers<[1], [0], [0], [1], [0, 0, 1, 1], [], []>} : vector<8x8xf32>, vector<8x8xf32>, vector<8x8xf32> -> vector<8x8xf32>
    %cst_75 = arith.constant dense<0.000000e+00> : vector<8x256xf32>
    %330 = tpu.matmul %329, %276, %cst_75 {dimension_numbers = #tpu.dot_dimension_numbers<[1], [0], [0], [1], [0, 0, 1, 1], [], []>} : vector<8x8xf32>, vector<8x256xf32>, vector<8x256xf32> -> vector<8x256xf32>
    %c0_76 = arith.constant 0 : index
    %c256 = arith.constant 256 : index
    %331 = vector.load %arg8[%c0_76, %c256] : memref<8x512xf32, #tpu.memory_space<vmem>>, vector<8x256xf32>
    tpu.vector_store %arg8[%c0_76, %c256], %330 {strides = array<i32>} : memref<8x512xf32, #tpu.memory_space<vmem>>, vector<8x256xf32>,
    return
  }
  func.func @transform_0(%arg0: i32) -> (i32, i32) {
    %c0_i32 = arith.constant 0 : i32
    %c0_i32_0 = arith.constant 0 : i32
    %c0_i32_1 = arith.constant 0 : i32
    return %c0_i32, %c0_i32_0 : i32, i32
  }
  func.func @transform_1(%arg0: i32) -> (i32, i32) {
    %c0_i32 = arith.constant 0 : i32
    %c0_i32_0 = arith.constant 0 : i32
    %c0_i32_1 = arith.constant 0 : i32
    return %c0_i32, %c0_i32_0 : i32, i32
  }
  func.func @transform_2(%arg0: i32) -> (i32, i32) {
    %c0_i32 = arith.constant 0 : i32
    %c0_i32_0 = arith.constant 0 : i32
    %c0_i32_1 = arith.constant 0 : i32
    return %c0_i32, %c0_i32_0 : i32, i32
  }
  func.func @transform_3(%arg0: i32) -> (i32, i32) {
    %c0_i32 = arith.constant 0 : i32
    %c0_i32_0 = arith.constant 0 : i32
    %c0_i32_1 = arith.constant 0 : i32
    return %c0_i32, %c0_i32_0 : i32, i32
  }
  func.func @transform_4(%arg0: i32) -> (i32, i32) {
    %c0_i32 = arith.constant 0 : i32
    %c0_i32_0 = arith.constant 0 : i32
    %c0_i32_1 = arith.constant 0 : i32
    return %c0_i32, %c0_i32_0 : i32, i32
  }
  func.func @transform_5(%arg0: i32) -> (i32, i32) {
    %c0_i32 = arith.constant 0 : i32
    %c0_i32_0 = arith.constant 0 : i32
    %c0_i32_1 = arith.constant 0 : i32
    return %c0_i32, %c0_i32_0 : i32, i32
  }
  func.func @transform_6(%arg0: i32) -> (i32, i32) {
    %c0_i32 = arith.constant 0 : i32
    %c0_i32_0 = arith.constant 0 : i32
    %c0_i32_1 = arith.constant 0 : i32
    return %c0_i32, %c0_i32_0 : i32, i32
  }
  func.func @transform_7(%arg0: i32) -> (i32, i32) {
    %c0_i32 = arith.constant 0 : i32
    %c0_i32_0 = arith.constant 0 : i32
    %c0_i32_1 = arith.constant 0 : i32
    return %c0_i32, %c0_i32_0 : i32, i32
  }
}

</mosaic_0001>

<llo_original>
// kernel: chan_attention_forward.1
$region0: #{chan_attention_forward.1}
  #allocation0 [shape = 'u32[]', space=smem, size = 0x4, offset = 0x4, fixed_abs, tag = 'smem constant byte address 0x4 - core index']
  #allocation1 [shape = 'u32[144,128]{1,0:T(1,128)}', space=vmem, size = 0x12000, scoped, tag = 'internal scratch']
  %s0 = inlined_call_operand.vmem [shape: f32[8,512], index: 0, kind: input, shape index: {}]
  %s1 = inlined_call_operand.vmem [shape: f32[24,8], index: 1, kind: input, shape index: {}]
  %s2 = inlined_call_operand.vmem [shape: f32[24,27], index: 2, kind: input, shape index: {}]
  %s3 = inlined_call_operand.vmem [shape: f32[8,8], index: 3, kind: input, shape index: {}]
  %s4 = inlined_call_operand.vmem [shape: f32[8,1], index: 4, kind: input, shape index: {}]
  %s5 = inlined_call_operand.vmem [shape: f32[27,512], index: 5, kind: input, shape index: {}]
  %s6 = inlined_call_operand.vmem [shape: f32[8,8], index: 6, kind: input, shape index: {}]
  %s7 = inlined_call_operand.vmem [shape: f32[8,512], index: 7, kind: output, shape index: {}]
  %s8 = sld [smem:[#allocation0]]
  $region38: #{chan_attention_forward.1} parent=0
    _
  %s10 = ssub.s32 1, %s8
  %s11 = scalar_select 0, %s10, %s8
  // Predicated region
  $region2: #{chan_attention_forward.1} parent=0 // pred_check
    _
  $region3: #{chan_attention_forward.1} parent=0 // pred_check_branch
    %13 = sbr.rel (0) target = $region5
  $region4: #{chan_attention_forward.1} parent=0 // pred_region
    _
  $region5: #{chan_attention_forward.1} parent=0 // pred_fallthru
    _
  // Predicated region
  $region6: #{chan_attention_forward.1} parent=0 // pred_check
    _
  $region7: #{chan_attention_forward.1} parent=0 // pred_check_branch
    %15 = sbr.rel (0) target = $region9
  $region8: #{chan_attention_forward.1} parent=0 // pred_region
    _
  $region9: #{chan_attention_forward.1} parent=0 // pred_fallthru
    _
  // Predicated region
  $region10: #{chan_attention_forward.1} parent=0 // pred_check
    _
  $region11: #{chan_attention_forward.1} parent=0 // pred_check_branch
    %17 = sbr.rel (0) target = $region13
  $region12: #{chan_attention_forward.1} parent=0 // pred_region
    _
  $region13: #{chan_attention_forward.1} parent=0 // pred_fallthru
    _
  // Predicated region
  $region14: #{chan_attention_forward.1} parent=0 // pred_check
    _
  $region15: #{chan_attention_forward.1} parent=0 // pred_check_branch
    %19 = sbr.rel (0) target = $region17
  $region16: #{chan_attention_forward.1} parent=0 // pred_region
    _
  $region17: #{chan_attention_forward.1} parent=0 // pred_fallthru
    _
  // Predicated region
  $region18: #{chan_attention_forward.1} parent=0 // pred_check
    _
  $region19: #{chan_attention_forward.1} parent=0 // pred_check_branch
    %21 = sbr.rel (0) target = $region21
  $region20: #{chan_attention_forward.1} parent=0 // pred_region
    _
  $region21: #{chan_attention_forward.1} parent=0 // pred_fallthru
    _
  // Predicated region
  $region22: #{chan_attention_forward.1} parent=0 // pred_check
    _
  $region23: #{chan_attention_forward.1} parent=0 // pred_check_branch
    %23 = sbr.rel (0) target = $region25
  $region24: #{chan_attention_forward.1} parent=0 // pred_region
    _
  $region25: #{chan_attention_forward.1} parent=0 // pred_fallthru
    _
  // Predicated region
  $region26: #{chan_attention_forward.1} parent=0 // pred_check
    _
  $region27: #{chan_attention_forward.1} parent=0 // pred_check_branch
    %25 = sbr.rel (0) target = $region29
  $region28: #{chan_attention_forward.1} parent=0 // pred_region
    _
  $region29: #{chan_attention_forward.1} parent=0 // pred_fallthru
    _
  %v26 = vld [vmem:[%s1] sm:$0xff]
  %v27 = vld [vmem:[%s1 + $0x8] sm:$0xff]
  %v28 = vld [vmem:[%s1 + $0x10] sm:$0xff]
  %v29 = vld [vmem:[%s0] sm:$0xff]
  %v30 = vld [vmem:[%s0 + $0x8] sm:$0xff]
  %v31 = vld [vmem:[%s0 + $0x10] sm:$0xff]
  %v32 = vld [vmem:[%s0 + $0x18] sm:$0xff]
  %vm33 = vcmask 64512
  %v35 = vsel %vm33, %v26, 0
  %v38 = vsel %vm33, %v27, 0
  %v41 = vsel %vm33, %v28, 0
  %43 = vmatprep.subr.mxu0 %v30
  %44 = vmatpush1.msra.mxu0 %v29
  %45 = vmatprep.subr.mxu0 0.0
  %46 = vmatpush1.msra.mxu0 0.0
  %47 = vmatprep.subr.mxu0 0.0
  %48 = vmatpush1.msra.mxu0 0.0
  %49 = vmatprep.subr.mxu0 0.0
  %50 = vmatpush1.msra.mxu0 0.0
  %51 = vmatprep.subr.mxu0 0.0
  %52 = vmatpush1.msra.mxu0 0.0
  %53 = vmatprep.subr.mxu0 0.0
  %54 = vmatpush1.msra.mxu0 0.0
  %55 = vmatprep.subr.mxu0 0.0
  %56 = vmatpush1.msra.mxu0 0.0
  %57 = vmatprep.subr.mxu0 0.0
  %58 = vmatpush1.msra.mxu0 0.0
  %59 = vmatprep.subr.mxu0 0.0
  %60 = vmatpush1.msra.mxu0 0.0
  %61 = vmatprep.subr.mxu0 0.0
  %62 = vmatpush1.msra.mxu0 0.0
  %63 = vmatprep.subr.mxu0 0.0
  %64 = vmatpush1.msra.mxu0 0.0
  %65 = vmatprep.subr.mxu0 0.0
  %66 = vmatpush1.msra.mxu0 0.0
  %67 = vmatprep.subr.mxu0 0.0
  %68 = vmatpush1.msra.mxu0 0.0
  %69 = vmatprep.subr.mxu0 0.0
  %70 = vmatpush1.msra.mxu0 0.0
  %71 = vmatprep.subr.mxu0 0.0
  %72 = vmatpush1.msra.mxu0 0.0
  %73 = vmatprep.subr.mxu0 0.0
  %74 = vmatpush1.msra.mxu0 0.0
  %75 = vmatprep.subr.mxu0 0.0
  %76 = vmatpush1.msra.mxu0 0.0
  %77 = vmatprep.subr.mxu0 0.0
  %78 = vmatpush1.msra.mxu0 0.0
  %79 = vmatprep.subr.mxu0 0.0
  %80 = vmatpush1.msra.mxu0 0.0
  %81 = vmatprep.subr.mxu0 0.0
  %82 = vmatpush1.msra.mxu0 0.0
  %83 = vmatprep.subr.mxu0 0.0
  %84 = vmatpush1.msra.mxu0 0.0
  %85 = vmatprep.subr.mxu0 0.0
  %86 = vmatpush1.msra.mxu0 0.0
  %87 = vmatprep.subr.mxu0 0.0
  %88 = vmatpush1.msra.mxu0 0.0
  %89 = vmatprep.subr.mxu0 0.0
  %90 = vmatpush1.msra.mxu0 0.0
  %91 = vmatprep.subr.mxu0 0.0
  %92 = vmatpush1.msra.mxu0 0.0
  %93 = vmatprep.subr.mxu0 0.0
  %94 = vmatpush1.msra.mxu0 0.0
  %95 = vmatprep.subr.mxu0 0.0
  %96 = vmatpush1.msra.mxu0 0.0
  %97 = vmatprep.subr.mxu0 0.0
  %98 = vmatpush1.msra.mxu0 0.0
  %99 = vmatprep.subr.mxu0 0.0
  %100 = vmatpush1.msra.mxu0 0.0
  %101 = vmatprep.subr.mxu0 0.0
  %102 = vmatpush1.msra.mxu0 0.0
  %103 = vmatprep.subr.mxu0 0.0
  %104 = vmatpush1.msra.mxu0 0.0
  %105 = vmatprep.subr.mxu0 0.0
  %106 = vmatpush1.msra.mxu0 0.0
  %107 = vmatprep.mubr.f32.mxu0 0.0
  %108 = vmatmul.mubr.f32.gmra.mrb[0].mxu0 %v35
  %v109 = vpop.f32.mrb[0].mxu0
  %v110 = vadd.f32 0.0, %v109
  %v111 = vpop.f32.mrb[0].mxu0
  %v112 = vadd.f32 0.0, %v111
  %113 = vmatprep.mubr.f32.mxu0 0.0
  %114 = vmatmul.mubr.f32.gmra.mrb[0].mxu0 %v38
  %v115 = vpop.f32.mrb[0].mxu0
  %v116 = vadd.f32 0.0, %v115
  %v117 = vpop.f32.mrb[0].mxu0
  %v118 = vadd.f32 0.0, %v117
  %119 = vmatprep.mubr.f32.mxu0 0.0
  %120 = vmatmul.mubr.f32.gmra.mrb[0].mxu0 %v41
  %v121 = vpop.f32.mrb[0].mxu0
  %v122 = vadd.f32 0.0, %v121
  %v123 = vpop.f32.mrb[0].mxu0
  %v124 = vadd.f32 0.0, %v123
  %125 = vdwg.mxu0
  %126 = vmatprep.subr.mxu0 %v32
  %127 = vmatpush1.msra.mxu0 %v31
  %128 = vmatprep.subr.mxu0 0.0
  %129 = vmatpush1.msra.mxu0 0.0
  %130 = vmatprep.subr.mxu0 0.0
  %131 = vmatpush1.msra.mxu0 0.0
  %132 = vmatprep.subr.mxu0 0.0
  %133 = vmatpush1.msra.mxu0 0.0
  %134 = vmatprep.subr.mxu0 0.0
  %135 = vmatpush1.msra.mxu0 0.0
  %136 = vmatprep.subr.mxu0 0.0
  %137 = vmatpush1.msra.mxu0 0.0
  %138 = vmatprep.subr.mxu0 0.0
  %139 = vmatpush1.msra.mxu0 0.0
  %140 = vmatprep.subr.mxu0 0.0
  %141 = vmatpush1.msra.mxu0 0.0
  %142 = vmatprep.subr.mxu0 0.0
  %143 = vmatpush1.msra.mxu0 0.0
  %144 = vmatprep.subr.mxu0 0.0
  %145 = vmatpush1.msra.mxu0 0.0
  %146 = vmatprep.subr.mxu0 0.0
  %147 = vmatpush1.msra.mxu0 0.0
  %148 = vmatprep.subr.mxu0 0.0
  %149 = vmatpush1.msra.mxu0 0.0
  %150 = vmatprep.subr.mxu0 0.0
  %151 = vmatpush1.msra.mxu0 0.0
  %152 = vmatprep.subr.mxu0 0.0
  %153 = vmatpush1.msra.mxu0 0.0
  %154 = vmatprep.subr.mxu0 0.0
  %155 = vmatpush1.msra.mxu0 0.0
  %156 = vmatprep.subr.mxu0 0.0
  %157 = vmatpush1.msra.mxu0 0.0
  %158 = vmatprep.subr.mxu0 0.0
  %159 = vmatpush1.msra.mxu0 0.0
  %160 = vmatprep.subr.mxu0 0.0
  %161 = vmatpush1.msra.mxu0 0.0
  %162 = vmatprep.subr.mxu0 0.0
  %163 = vmatpush1.msra.mxu0 0.0
  %164 = vmatprep.subr.mxu0 0.0
  %165 = vmatpush1.msra.mxu0 0.0
  %166 = vmatprep.subr.mxu0 0.0
  %167 = vmatpush1.msra.mxu0 0.0
  %168 = vmatprep.subr.mxu0 0.0
  %169 = vmatpush1.msra.mxu0 0.0
  %170 = vmatprep.subr.mxu0 0.0
  %171 = vmatpush1.msra.mxu0 0.0
  %172 = vmatprep.subr.mxu0 0.0
  %173 = vmatpush1.msra.mxu0 0.0
  %174 = vmatprep.subr.mxu0 0.0
  %175 = vmatpush1.msra.mxu0 0.0
  %176 = vmatprep.subr.mxu0 0.0
  %177 = vmatpush1.msra.mxu0 0.0
  %178 = vmatprep.subr.mxu0 0.0
  %179 = vmatpush1.msra.mxu0 0.0
  %180 = vmatprep.subr.mxu0 0.0
  %181 = vmatpush1.msra.mxu0 0.0
  %182 = vmatprep.subr.mxu0 0.0
  %183 = vmatpush1.msra.mxu0 0.0
  %184 = vmatprep.subr.mxu0 0.0
  %185 = vmatpush1.msra.mxu0 0.0
  %186 = vmatprep.subr.mxu0 0.0
  %187 = vmatpush1.msra.mxu0 0.0
  %188 = vmatprep.subr.mxu0 0.0
  %189 = vmatpush1.msra.mxu0 0.0
  %190 = vmatprep.mubr.f32.mxu0 0.0
  %191 = vmatmul.mubr.f32.gmra.mrb[0].mxu0 %v35
  %v192 = vpop.f32.mrb[0].mxu0
  %v193 = vadd.f32 0.0, %v192
  %v194 = vpop.f32.mrb[0].mxu0
  %v195 = vadd.f32 0.0, %v194
  %196 = vmatprep.mubr.f32.mxu0 0.0
  %197 = vmatmul.mubr.f32.gmra.mrb[0].mxu0 %v38
  %v198 = vpop.f32.mrb[0].mxu0
  %v199 = vadd.f32 0.0, %v198
  %v200 = vpop.f32.mrb[0].mxu0
  %v201 = vadd.f32 0.0, %v200
  %202 = vmatprep.mubr.f32.mxu0 0.0
  %203 = vmatmul.mubr.f32.gmra.mrb[0].mxu0 %v41
  %v204 = vpop.f32.mrb[0].mxu0
  %v205 = vadd.f32 0.0, %v204
  %v206 = vpop.f32.mrb[0].mxu0
  %v207 = vadd.f32 0.0, %v206
  %208 = vdwg.mxu0
  %v209 = vld [vmem:[%s2] sm:$0xff]
  %v210 = vld [vmem:[%s2 + $0x8] sm:$0xff]
  %v211 = vld [vmem:[%s2 + $0x10] sm:$0xff]
  %212 = vrot.lane.b32.xlu0 %v110, 73
  %v213 = vpop.permute.xlu0 %212
  %214 = vrot.lane.b32.xlu0 %v116, 73
  %v215 = vpop.permute.xlu0 %214
  %216 = vrot.lane.b32.xlu0 %v122, 73
  %v217 = vpop.permute.xlu0 %216
  %218 = vrot.lane.b32.xlu0 %v112, 73
  %v219 = vpop.permute.xlu0 %218
  %220 = vrot.lane.b32.xlu0 %v118, 73
  %v221 = vpop.permute.xlu0 %220
  %222 = vrot.lane.b32.xlu0 %v124, 73
  %v223 = vpop.permute.xlu0 %222
  %224 = vrot.lane.b32.xlu0 %v193, 73
  %v225 = vpop.permute.xlu0 %224
  %226 = vrot.lane.b32.xlu0 %v199, 73
  %v227 = vpop.permute.xlu0 %226
  %228 = vrot.lane.b32.xlu0 %v205, 73
  %v229 = vpop.permute.xlu0 %228
  %230 = vrot.lane.b32.xlu0 %v195, 73
  %v231 = vpop.permute.xlu0 %230
  %232 = vrot.lane.b32.xlu0 %v201, 73
  %v233 = vpop.permute.xlu0 %232
  %234 = vrot.lane.b32.xlu0 %v207, 73
  %v235 = vpop.permute.xlu0 %234
  %v236 = vlaneseq
  %v237 = vand.u32 %v236, 127
  %vm238 = vcmp.lt.s32.totalorder %v237, 73
  %v239 = vsel %vm238, %v225, %v231
  %v240 = vsel %vm238, %v227, %v233
  %v241 = vsel %vm238, %v229, %v235
  %v242 = vsel %vm238, %v219, %v225
  %v243 = vsel %vm238, %v221, %v227
  %v244 = vsel %vm238, %v223, %v229
  %v245 = vsel %vm238, %v213, %v219
  %v246 = vsel %vm238, %v215, %v221
  %v247 = vsel %vm238, %v217, %v223
  %v248 = vsel %vm238, %v231, %v213
  %v249 = vsel %vm238, %v233, %v215
  %v250 = vsel %vm238, %v235, %v217
  %v251 = vld [vmem:[%s5] ss:$8 sm:$0xf]
  %v253 = vlaneseq
  %v254 = vshrl.u32 %v253, 7
  %v255 = vsub.s32 0, %v254
  %v256 = vrot.slane %v251, %v255
  %v257 = vlaneseq
  %v258 = vshrl.u32 %v257, 7
  %v259 = vsub.s32 1, %v258
  %v260 = vrot.slane %v251, %v259
  %v261 = vlaneseq
  %v262 = vshrl.u32 %v261, 7
  %v263 = vsub.s32 2, %v262
  %v264 = vrot.slane %v251, %v263
  %v265 = vlaneseq
  %v266 = vshrl.u32 %v265, 7
  %v267 = vsub.s32 3, %v266
  %v268 = vrot.slane %v251, %v267
  %v273 = vmul.f32 %v248, %v256
  %v274 = vmul.f32 %v245, %v260
  %v275 = vmul.f32 %v242, %v264
  %v276 = vmul.f32 %v239, %v268
  %v277 = vmul.f32 %v249, %v256
  %v278 = vmul.f32 %v246, %v260
  %v279 = vmul.f32 %v243, %v264
  %v280 = vmul.f32 %v240, %v268
  %v281 = vmul.f32 %v250, %v256
  %v282 = vmul.f32 %v247, %v260
  %v283 = vmul.f32 %v244, %v264
  %v284 = vmul.f32 %v241, %v268
  %286 = vset.pattern.permute.xlu0 0
  %287 = vperm.xlu0 %286, %v209
  %v288 = vpop.permute.xlu0 %287
  %291 = vset.pattern.permute.xlu0 0
  %292 = vperm.xlu0 %291, %v210
  %v293 = vpop.permute.xlu0 %292
  %296 = vset.pattern.permute.xlu0 0
  %297 = vperm.xlu0 %296, %v211
  %v298 = vpop.permute.xlu0 %297
  %v300 = vmul.f32 %v273, %v288
  %v301 = vmul.f32 %v274, %v288
  %v302 = vmul.f32 %v275, %v288
  %v303 = vmul.f32 %v276, %v288
  %v304 = vmul.f32 %v277, %v293
  %v305 = vmul.f32 %v278, %v293
  %v306 = vmul.f32 %v279, %v293
  %v307 = vmul.f32 %v280, %v293
  %v308 = vmul.f32 %v281, %v298
  %v309 = vmul.f32 %v282, %v298
  %v310 = vmul.f32 %v283, %v298
  %v311 = vmul.f32 %v284, %v298
  %312 = vrot.lane.b32.xlu0 %v110, 72
  %v313 = vpop.permute.xlu0 %312
  %314 = vrot.lane.b32.xlu0 %v116, 72
  %v315 = vpop.permute.xlu0 %314
  %316 = vrot.lane.b32.xlu0 %v122, 72
  %v317 = vpop.permute.xlu0 %316
  %318 = vrot.lane.b32.xlu0 %v112, 72
  %v319 = vpop.permute.xlu0 %318
  %320 = vrot.lane.b32.xlu0 %v118, 72
  %v321 = vpop.permute.xlu0 %320
  %322 = vrot.lane.b32.xlu0 %v124, 72
  %v323 = vpop.permute.xlu0 %322
  %324 = vrot.lane.b32.xlu0 %v193, 72
  %v325 = vpop.permute.xlu0 %324
  %326 = vrot.lane.b32.xlu0 %v199, 72
  %v327 = vpop.permute.xlu0 %326
  %328 = vrot.lane.b32.xlu0 %v205, 72
  %v329 = vpop.permute.xlu0 %328
  %330 = vrot.lane.b32.xlu0 %v195, 72
  %v331 = vpop.permute.xlu0 %330
  %332 = vrot.lane.b32.xlu0 %v201, 72
  %v333 = vpop.permute.xlu0 %332
  %334 = vrot.lane.b32.xlu0 %v207, 72
  %v335 = vpop.permute.xlu0 %334
  %vm336 = vcmp.lt.s32.totalorder %v237, 72
  %v337 = vsel %vm336, %v325, %v331
  %v338 = vsel %vm336, %v327, %v333
  %v339 = vsel %vm336, %v329, %v335
  %v340 = vsel %vm336, %v319, %v325
  %v341 = vsel %vm336, %v321, %v327
  %v342 = vsel %vm336, %v323, %v329
  %v343 = vsel %vm336, %v313, %v319
  %v344 = vsel %vm336, %v315, %v321
  %v345 = vsel %vm336, %v317, %v323
  %v346 = vsel %vm336, %v331, %v313
  %v347 = vsel %vm336, %v333, %v315
  %v348 = vsel %vm336, %v335, %v317
  %s349 = scalar_lea.vmem %s5, 1
  %v350 = vld [vmem:[%s349] ss:$8 sm:$0xf]
  %v352 = vlaneseq
  %v353 = vshrl.u32 %v352, 7
  %v354 = vsub.s32 0, %v353
  %v355 = vrot.slane %v350, %v354
  %v356 = vlaneseq
  %v357 = vshrl.u32 %v356, 7
  %v358 = vsub.s32 1, %v357
  %v359 = vrot.slane %v350, %v358
  %v360 = vlaneseq
  %v361 = vshrl.u32 %v360, 7
  %v362 = vsub.s32 2, %v361
  %v363 = vrot.slane %v350, %v362
  %v364 = vlaneseq
  %v365 = vshrl.u32 %v364, 7
  %v366 = vsub.s32 3, %v365
  %v367 = vrot.slane %v350, %v366
  %v372 = vmul.f32 %v346, %v355
  %v373 = vmul.f32 %v343, %v359
  %v374 = vmul.f32 %v340, %v363
  %v375 = vmul.f32 %v337, %v367
  %v376 = vmul.f32 %v347, %v355
  %v377 = vmul.f32 %v344, %v359
  %v378 = vmul.f32 %v341, %v363
  %v379 = vmul.f32 %v338, %v367
  %v380 = vmul.f32 %v348, %v355
  %v381 = vmul.f32 %v345, %v359
  %v382 = vmul.f32 %v342, %v363
  %v383 = vmul.f32 %v339, %v367
  %384 = vset.pattern.permute.xlu0 1
  %385 = vperm.xlu0 %384, %v209
  %v386 = vpop.permute.xlu0 %385
  %388 = vset.pattern.permute.xlu0 1
  %389 = vperm.xlu0 %388, %v210
  %v390 = vpop.permute.xlu0 %389
  %392 = vset.pattern.permute.xlu0 1
  %393 = vperm.xlu0 %392, %v211
  %v394 = vpop.permute.xlu0 %393
  %v396 = vmul.f32 %v372, %v386
  %v397 = vmul.f32 %v373, %v386
  %v398 = vmul.f32 %v374, %v386
  %v399 = vmul.f32 %v375, %v386
  %v400 = vmul.f32 %v376, %v390
  %v401 = vmul.f32 %v377, %v390
  %v402 = vmul.f32 %v378, %v390
  %v403 = vmul.f32 %v379, %v390
  %v404 = vmul.f32 %v380, %v394
  %v405 = vmul.f32 %v381, %v394
  %v406 = vmul.f32 %v382, %v394
  %v407 = vmul.f32 %v383, %v394
  %408 = vrot.lane.b32.xlu0 %v110, 71
  %v409 = vpop.permute.xlu0 %408
  %410 = vrot.lane.b32.xlu0 %v116, 71
  %v411 = vpop.permute.xlu0 %410
  %412 = vrot.lane.b32.xlu0 %v122, 71
  %v413 = vpop.permute.xlu0 %412
  %414 = vrot.lane.b32.xlu0 %v112, 71
  %v415 = vpop.permute.xlu0 %414
  %416 = vrot.lane.b32.xlu0 %v118, 71
  %v417 = vpop.permute.xlu0 %416
  %418 = vrot.lane.b32.xlu0 %v124, 71
  %v419 = vpop.permute.xlu0 %418
  %420 = vrot.lane.b32.xlu0 %v193, 71
  %v421 = vpop.permute.xlu0 %420
  %422 = vrot.lane.b32.xlu0 %v199, 71
  %v423 = vpop.permute.xlu0 %422
  %424 = vrot.lane.b32.xlu0 %v205, 71
  %v425 = vpop.permute.xlu0 %424
  %426 = vrot.lane.b32.xlu0 %v195, 71
  %v427 = vpop.permute.xlu0 %426
  %428 = vrot.lane.b32.xlu0 %v201, 71
  %v429 = vpop.permute.xlu0 %428
  %430 = vrot.lane.b32.xlu0 %v207, 71
  %v431 = vpop.permute.xlu0 %430
  %vm432 = vcmp.lt.s32.totalorder %v237, 71
  %v433 = vsel %vm432, %v421, %v427
  %v434 = vsel %vm432, %v423, %v429
  %v435 = vsel %vm432, %v425, %v431
  %v436 = vsel %vm432, %v415, %v421
  %v437 = vsel %vm432, %v417, %v423
  %v438 = vsel %vm432, %v419, %v425
  %v439 = vsel %vm432, %v409, %v415
  %v440 = vsel %vm432, %v411, %v417
  %v441 = vsel %vm432, %v413, %v419
  %v442 = vsel %vm432, %v427, %v409
  %v443 = vsel %vm432, %v429, %v411
  %v444 = vsel %vm432, %v431, %v413
  %s445 = scalar_lea.vmem %s5, 2
  %v446 = vld [vmem:[%s445] ss:$8 sm:$0xf]
  %v448 = vlaneseq
  %v449 = vshrl.u32 %v448, 7
  %v450 = vsub.s32 0, %v449
  %v451 = vrot.slane %v446, %v450
  %v452 = vlaneseq
  %v453 = vshrl.u32 %v452, 7
  %v454 = vsub.s32 1, %v453
  %v455 = vrot.slane %v446, %v454
  %v456 = vlaneseq
  %v457 = vshrl.u32 %v456, 7
  %v458 = vsub.s32 2, %v457
  %v459 = vrot.slane %v446, %v458
  %v460 = vlaneseq
  %v461 = vshrl.u32 %v460, 7
  %v462 = vsub.s32 3, %v461
  %v463 = vrot.slane %v446, %v462
  %v468 = vmul.f32 %v442, %v451
  %v469 = vmul.f32 %v439, %v455
  %v470 = vmul.f32 %v436, %v459
  %v471 = vmul.f32 %v433, %v463
  %v472 = vmul.f32 %v443, %v451
  %v473 = vmul.f32 %v440, %v455
  %v474 = vmul.f32 %v437, %v459
  %v475 = vmul.f32 %v434, %v463
  %v476 = vmul.f32 %v444, %v451
  %v477 = vmul.f32 %v441, %v455
  %v478 = vmul.f32 %v438, %v459
  %v479 = vmul.f32 %v435, %v463
  %480 = vset.pattern.permute.xlu0 2
  %481 = vperm.xlu0 %480, %v209
  %v482 = vpop.permute.xlu0 %481
  %484 = vset.pattern.permute.xlu0 2
  %485 = vperm.xlu0 %484, %v210
  %v486 = vpop.permute.xlu0 %485
  %488 = vset.pattern.permute.xlu0 2
  %489 = vperm.xlu0 %488, %v211
  %v490 = vpop.permute.xlu0 %489
  %v492 = vmul.f32 %v468, %v482
  %v493 = vmul.f32 %v469, %v482
  %v494 = vmul.f32 %v470, %v482
  %v495 = vmul.f32 %v471, %v482
  %v496 = vmul.f32 %v472, %v486
  %v497 = vmul.f32 %v473, %v486
  %v498 = vmul.f32 %v474, %v486
  %v499 = vmul.f32 %v475, %v486
  %v500 = vmul.f32 %v476, %v490
  %v501 = vmul.f32 %v477, %v490
  %v502 = vmul.f32 %v478, %v490
  %v503 = vmul.f32 %v479, %v490
  %v504 = vadd.f32 %v300, %v492
  %v505 = vadd.f32 %v301, %v493
  %v506 = vadd.f32 %v302, %v494
  %v507 = vadd.f32 %v303, %v495
  %v508 = vadd.f32 %v304, %v496
  %v509 = vadd.f32 %v305, %v497
  %v510 = vadd.f32 %v306, %v498
  %v511 = vadd.f32 %v307, %v499
  %v512 = vadd.f32 %v308, %v500
  %v513 = vadd.f32 %v309, %v501
  %v514 = vadd.f32 %v310, %v502
  %v515 = vadd.f32 %v311, %v503
  %516 = vrot.lane.b32.xlu0 %v110, 65
  %v517 = vpop.permute.xlu0 %516
  %518 = vrot.lane.b32.xlu0 %v116, 65
  %v519 = vpop.permute.xlu0 %518
  %520 = vrot.lane.b32.xlu0 %v122, 65
  %v521 = vpop.permute.xlu0 %520
  %522 = vrot.lane.b32.xlu0 %v112, 65
  %v523 = vpop.permute.xlu0 %522
  %524 = vrot.lane.b32.xlu0 %v118, 65
  %v525 = vpop.permute.xlu0 %524
  %526 = vrot.lane.b32.xlu0 %v124, 65
  %v527 = vpop.permute.xlu0 %526
  %528 = vrot.lane.b32.xlu0 %v193, 65
  %v529 = vpop.permute.xlu0 %528
  %530 = vrot.lane.b32.xlu0 %v199, 65
  %v531 = vpop.permute.xlu0 %530
  %532 = vrot.lane.b32.xlu0 %v205, 65
  %v533 = vpop.permute.xlu0 %532
  %534 = vrot.lane.b32.xlu0 %v195, 65
  %v535 = vpop.permute.xlu0 %534
  %536 = vrot.lane.b32.xlu0 %v201, 65
  %v537 = vpop.permute.xlu0 %536
  %538 = vrot.lane.b32.xlu0 %v207, 65
  %v539 = vpop.permute.xlu0 %538
  %vm540 = vcmp.lt.s32.totalorder %v237, 65
  %v541 = vsel %vm540, %v529, %v535
  %v542 = vsel %vm540, %v531, %v537
  %v543 = vsel %vm540, %v533, %v539
  %v544 = vsel %vm540, %v523, %v529
  %v545 = vsel %vm540, %v525, %v531
  %v546 = vsel %vm540, %v527, %v533
  %v547 = vsel %vm540, %v517, %v523
  %v548 = vsel %vm540, %v519, %v525
  %v549 = vsel %vm540, %v521, %v527
  %v550 = vsel %vm540, %v535, %v517
  %v551 = vsel %vm540, %v537, %v519
  %v552 = vsel %vm540, %v539, %v521
  %s553 = scalar_lea.vmem %s5, 3
  %v554 = vld [vmem:[%s553] ss:$8 sm:$0xf]
  %v556 = vlaneseq
  %v557 = vshrl.u32 %v556, 7
  %v558 = vsub.s32 0, %v557
  %v559 = vrot.slane %v554, %v558
  %v560 = vlaneseq
  %v561 = vshrl.u32 %v560, 7
  %v562 = vsub.s32 1, %v561
  %v563 = vrot.slane %v554, %v562
  %v564 = vlaneseq
  %v565 = vshrl.u32 %v564, 7
  %v566 = vsub.s32 2, %v565
  %v567 = vrot.slane %v554, %v566
  %v568 = vlaneseq
  %v569 = vshrl.u32 %v568, 7
  %v570 = vsub.s32 3, %v569
  %v571 = vrot.slane %v554, %v570
  %v576 = vmul.f32 %v550, %v559
  %v577 = vmul.f32 %v547, %v563
  %v578 = vmul.f32 %v544, %v567
  %v579 = vmul.f32 %v541, %v571
  %v580 = vmul.f32 %v551, %v559
  %v581 = vmul.f32 %v548, %v563
  %v582 = vmul.f32 %v545, %v567
  %v583 = vmul.f32 %v542, %v571
  %v584 = vmul.f32 %v552, %v559
  %v585 = vmul.f32 %v549, %v563
  %v586 = vmul.f32 %v546, %v567
  %v587 = vmul.f32 %v543, %v571
  %588 = vset.pattern.permute.xlu0 3
  %589 = vperm.xlu0 %588, %v209
  %v590 = vpop.permute.xlu0 %589
  %592 = vset.pattern.permute.xlu0 3
  %593 = vperm.xlu0 %592, %v210
  %v594 = vpop.permute.xlu0 %593
  %596 = vset.pattern.permute.xlu0 3
  %597 = vperm.xlu0 %596, %v211
  %v598 = vpop.permute.xlu0 %597
  %v600 = vmul.f32 %v576, %v590
  %v601 = vmul.f32 %v577, %v590
  %v602 = vmul.f32 %v578, %v590
  %v603 = vmul.f32 %v579, %v590
  %v604 = vmul.f32 %v580, %v594
  %v605 = vmul.f32 %v581, %v594
  %v606 = vmul.f32 %v582, %v594
  %v607 = vmul.f32 %v583, %v594
  %v608 = vmul.f32 %v584, %v598
  %v609 = vmul.f32 %v585, %v598
  %v610 = vmul.f32 %v586, %v598
  %v611 = vmul.f32 %v587, %v598
  %v612 = vadd.f32 %v396, %v600
  %v613 = vadd.f32 %v397, %v601
  %v614 = vadd.f32 %v398, %v602
  %v615 = vadd.f32 %v399, %v603
  %v616 = vadd.f32 %v400, %v604
  %v617 = vadd.f32 %v401, %v605
  %v618 = vadd.f32 %v402, %v606
  %v619 = vadd.f32 %v403, %v607
  %v620 = vadd.f32 %v404, %v608
  %v621 = vadd.f32 %v405, %v609
  %v622 = vadd.f32 %v406, %v610
  %v623 = vadd.f32 %v407, %v611
  %624 = vrot.lane.b32.xlu0 %v110, 64
  %v625 = vpop.permute.xlu0 %624
  %626 = vrot.lane.b32.xlu0 %v116, 64
  %v627 = vpop.permute.xlu0 %626
  %628 = vrot.lane.b32.xlu0 %v122, 64
  %v629 = vpop.permute.xlu0 %628
  %630 = vrot.lane.b32.xlu0 %v112, 64
  %v631 = vpop.permute.xlu0 %630
  %632 = vrot.lane.b32.xlu0 %v118, 64
  %v633 = vpop.permute.xlu0 %632
  %634 = vrot.lane.b32.xlu0 %v124, 64
  %v635 = vpop.permute.xlu0 %634
  %636 = vrot.lane.b32.xlu0 %v193, 64
  %v637 = vpop.permute.xlu0 %636
  %638 = vrot.lane.b32.xlu0 %v199, 64
  %v639 = vpop.permute.xlu0 %638
  %640 = vrot.lane.b32.xlu0 %v205, 64
  %v641 = vpop.permute.xlu0 %640
  %642 = vrot.lane.b32.xlu0 %v195, 64
  %v643 = vpop.permute.xlu0 %642
  %644 = vrot.lane.b32.xlu0 %v201, 64
  %v645 = vpop.permute.xlu0 %644
  %646 = vrot.lane.b32.xlu0 %v207, 64
  %v647 = vpop.permute.xlu0 %646
  %vm648 = vcmp.lt.s32.totalorder %v237, 64
  %v649 = vsel %vm648, %v637, %v643
  %v650 = vsel %vm648, %v639, %v645
  %v651 = vsel %vm648, %v641, %v647
  %v652 = vsel %vm648, %v631, %v637
  %v653 = vsel %vm648, %v633, %v639
  %v654 = vsel %vm648, %v635, %v641
  %v655 = vsel %vm648, %v625, %v631
  %v656 = vsel %vm648, %v627, %v633
  %v657 = vsel %vm648, %v629, %v635
  %v658 = vsel %vm648, %v643, %v625
  %v659 = vsel %vm648, %v645, %v627
  %v660 = vsel %vm648, %v647, %v629
  %s661 = scalar_lea.vmem %s5, 4
  %v662 = vld [vmem:[%s661] ss:$8 sm:$0xf]
  %v664 = vlaneseq
  %v665 = vshrl.u32 %v664, 7
  %v666 = vsub.s32 0, %v665
  %v667 = vrot.slane %v662, %v666
  %v668 = vlaneseq
  %v669 = vshrl.u32 %v668, 7
  %v670 = vsub.s32 1, %v669
  %v671 = vrot.slane %v662, %v670
  %v672 = vlaneseq
  %v673 = vshrl.u32 %v672, 7
  %v674 = vsub.s32 2, %v673
  %v675 = vrot.slane %v662, %v674
  %v676 = vlaneseq
  %v677 = vshrl.u32 %v676, 7
  %v678 = vsub.s32 3, %v677
  %v679 = vrot.slane %v662, %v678
  %v684 = vmul.f32 %v658, %v667
  %v685 = vmul.f32 %v655, %v671
  %v686 = vmul.f32 %v652, %v675
  %v687 = vmul.f32 %v649, %v679
  %v688 = vmul.f32 %v659, %v667
  %v689 = vmul.f32 %v656, %v671
  %v690 = vmul.f32 %v653, %v675
  %v691 = vmul.f32 %v650, %v679
  %v692 = vmul.f32 %v660, %v667
  %v693 = vmul.f32 %v657, %v671
  %v694 = vmul.f32 %v654, %v675
  %v695 = vmul.f32 %v651, %v679
  %696 = vset.pattern.permute.xlu0 4
  %697 = vperm.xlu0 %696, %v209
  %v698 = vpop.permute.xlu0 %697
  %700 = vset.pattern.permute.xlu0 4
  %701 = vperm.xlu0 %700, %v210
  %v702 = vpop.permute.xlu0 %701
  %704 = vset.pattern.permute.xlu0 4
  %705 = vperm.xlu0 %704, %v211
  %v706 = vpop.permute.xlu0 %705
  %v708 = vmul.f32 %v684, %v698
  %v709 = vmul.f32 %v685, %v698
  %v710 = vmul.f32 %v686, %v698
  %v711 = vmul.f32 %v687, %v698
  %v712 = vmul.f32 %v688, %v702
  %v713 = vmul.f32 %v689, %v702
  %v714 = vmul.f32 %v690, %v702
  %v715 = vmul.f32 %v691, %v702
  %v716 = vmul.f32 %v692, %v706
  %v717 = vmul.f32 %v693, %v706
  %v718 = vmul.f32 %v694, %v706
  %v719 = vmul.f32 %v695, %v706
  %v720 = vadd.f32 %v504, %v708
  %v721 = vadd.f32 %v505, %v709
  %v722 = vadd.f32 %v506, %v710
  %v723 = vadd.f32 %v507, %v711
  %v724 = vadd.f32 %v508, %v712
  %v725 = vadd.f32 %v509, %v713
  %v726 = vadd.f32 %v510, %v714
  %v727 = vadd.f32 %v511, %v715
  %v728 = vadd.f32 %v512, %v716
  %v729 = vadd.f32 %v513, %v717
  %v730 = vadd.f32 %v514, %v718
  %v731 = vadd.f32 %v515, %v719
  %732 = vrot.lane.b32.xlu0 %v110, 63
  %v733 = vpop.permute.xlu0 %732
  %734 = vrot.lane.b32.xlu0 %v116, 63
  %v735 = vpop.permute.xlu0 %734
  %736 = vrot.lane.b32.xlu0 %v122, 63
  %v737 = vpop.permute.xlu0 %736
  %738 = vrot.lane.b32.xlu0 %v112, 63
  %v739 = vpop.permute.xlu0 %738
  %740 = vrot.lane.b32.xlu0 %v118, 63
  %v741 = vpop.permute.xlu0 %740
  %742 = vrot.lane.b32.xlu0 %v124, 63
  %v743 = vpop.permute.xlu0 %742
  %744 = vrot.lane.b32.xlu0 %v193, 63
  %v745 = vpop.permute.xlu0 %744
  %746 = vrot.lane.b32.xlu0 %v199, 63
  %v747 = vpop.permute.xlu0 %746
  %748 = vrot.lane.b32.xlu0 %v205, 63
  %v749 = vpop.permute.xlu0 %748
  %750 = vrot.lane.b32.xlu0 %v195, 63
  %v751 = vpop.permute.xlu0 %750
  %752 = vrot.lane.b32.xlu0 %v201, 63
  %v753 = vpop.permute.xlu0 %752
  %754 = vrot.lane.b32.xlu0 %v207, 63
  %v755 = vpop.permute.xlu0 %754
  %vm756 = vcmp.lt.s32.totalorder %v237, 63
  %v757 = vsel %vm756, %v745, %v751
  %v758 = vsel %vm756, %v747, %v753
  %v759 = vsel %vm756, %v749, %v755
  %v760 = vsel %vm756, %v739, %v745
  %v761 = vsel %vm756, %v741, %v747
  %v762 = vsel %vm756, %v743, %v749
  %v763 = vsel %vm756, %v733, %v739
  %v764 = vsel %vm756, %v735, %v741
  %v765 = vsel %vm756, %v737, %v743
  %v766 = vsel %vm756, %v751, %v733
  %v767 = vsel %vm756, %v753, %v735
  %v768 = vsel %vm756, %v755, %v737
  %s769 = scalar_lea.vmem %s5, 5
  %v770 = vld [vmem:[%s769] ss:$8 sm:$0xf]
  %v772 = vlaneseq
  %v773 = vshrl.u32 %v772, 7
  %v774 = vsub.s32 0, %v773
  %v775 = vrot.slane %v770, %v774
  %v776 = vlaneseq
  %v777 = vshrl.u32 %v776, 7
  %v778 = vsub.s32 1, %v777
  %v779 = vrot.slane %v770, %v778
  %v780 = vlaneseq
  %v781 = vshrl.u32 %v780, 7
  %v782 = vsub.s32 2, %v781
  %v783 = vrot.slane %v770, %v782
  %v784 = vlaneseq
  %v785 = vshrl.u32 %v784, 7
  %v786 = vsub.s32 3, %v785
  %v787 = vrot.slane %v770, %v786
  %v792 = vmul.f32 %v766, %v775
  %v793 = vmul.f32 %v763, %v779
  %v794 = vmul.f32 %v760, %v783
  %v795 = vmul.f32 %v757, %v787
  %v796 = vmul.f32 %v767, %v775
  %v797 = vmul.f32 %v764, %v779
  %v798 = vmul.f32 %v761, %v783
  %v799 = vmul.f32 %v758, %v787
  %v800 = vmul.f32 %v768, %v775
  %v801 = vmul.f32 %v765, %v779
  %v802 = vmul.f32 %v762, %v783
  %v803 = vmul.f32 %v759, %v787
  %804 = vset.pattern.permute.xlu0 5
  %805 = vperm.xlu0 %804, %v209
  %v806 = vpop.permute.xlu0 %805
  %808 = vset.pattern.permute.xlu0 5
  %809 = vperm.xlu0 %808, %v210
  %v810 = vpop.permute.xlu0 %809
  %812 = vset.pattern.permute.xlu0 5
  %813 = vperm.xlu0 %812, %v211
  %v814 = vpop.permute.xlu0 %813
  %v816 = vmul.f32 %v792, %v806
  %v817 = vmul.f32 %v793, %v806
  %v818 = vmul.f32 %v794, %v806
  %v819 = vmul.f32 %v795, %v806
  %v820 = vmul.f32 %v796, %v810
  %v821 = vmul.f32 %v797, %v810
  %v822 = vmul.f32 %v798, %v810
  %v823 = vmul.f32 %v799, %v810
  %v824 = vmul.f32 %v800, %v814
  %v825 = vmul.f32 %v801, %v814
  %v826 = vmul.f32 %v802, %v814
  %v827 = vmul.f32 %v803, %v814
  %v828 = vadd.f32 %v612, %v816
  %v829 = vadd.f32 %v613, %v817
  %v830 = vadd.f32 %v614, %v818
  %v831 = vadd.f32 %v615, %v819
  %v832 = vadd.f32 %v616, %v820
  %v833 = vadd.f32 %v617, %v821
  %v834 = vadd.f32 %v618, %v822
  %v835 = vadd.f32 %v619, %v823
  %v836 = vadd.f32 %v620, %v824
  %v837 = vadd.f32 %v621, %v825
  %v838 = vadd.f32 %v622, %v826
  %v839 = vadd.f32 %v623, %v827
  %840 = vrot.lane.b32.xlu0 %v110, 57
  %v841 = vpop.permute.xlu0 %840
  %842 = vrot.lane.b32.xlu0 %v116, 57
  %v843 = vpop.permute.xlu0 %842
  %844 = vrot.lane.b32.xlu0 %v122, 57
  %v845 = vpop.permute.xlu0 %844
  %846 = vrot.lane.b32.xlu0 %v112, 57
  %v847 = vpop.permute.xlu0 %846
  %848 = vrot.lane.b32.xlu0 %v118, 57
  %v849 = vpop.permute.xlu0 %848
  %850 = vrot.lane.b32.xlu0 %v124, 57
  %v851 = vpop.permute.xlu0 %850
  %852 = vrot.lane.b32.xlu0 %v193, 57
  %v853 = vpop.permute.xlu0 %852
  %854 = vrot.lane.b32.xlu0 %v199, 57
  %v855 = vpop.permute.xlu0 %854
  %856 = vrot.lane.b32.xlu0 %v205, 57
  %v857 = vpop.permute.xlu0 %856
  %858 = vrot.lane.b32.xlu0 %v195, 57
  %v859 = vpop.permute.xlu0 %858
  %860 = vrot.lane.b32.xlu0 %v201, 57
  %v861 = vpop.permute.xlu0 %860
  %862 = vrot.lane.b32.xlu0 %v207, 57
  %v863 = vpop.permute.xlu0 %862
  %vm864 = vcmp.lt.s32.totalorder %v237, 57
  %v865 = vsel %vm864, %v853, %v859
  %v866 = vsel %vm864, %v855, %v861
  %v867 = vsel %vm864, %v857, %v863
  %v868 = vsel %vm864, %v847, %v853
  %v869 = vsel %vm864, %v849, %v855
  %v870 = vsel %vm864, %v851, %v857
  %v871 = vsel %vm864, %v841, %v847
  %v872 = vsel %vm864, %v843, %v849
  %v873 = vsel %vm864, %v845, %v851
  %v874 = vsel %vm864, %v859, %v841
  %v875 = vsel %vm864, %v861, %v843
  %v876 = vsel %vm864, %v863, %v845
  %s877 = scalar_lea.vmem %s5, 6
  %v878 = vld [vmem:[%s877] ss:$8 sm:$0xf]
  %v880 = vlaneseq
  %v881 = vshrl.u32 %v880, 7
  %v882 = vsub.s32 0, %v881
  %v883 = vrot.slane %v878, %v882
  %v884 = vlaneseq
  %v885 = vshrl.u32 %v884, 7
  %v886 = vsub.s32 1, %v885
  %v887 = vrot.slane %v878, %v886
  %v888 = vlaneseq
  %v889 = vshrl.u32 %v888, 7
  %v890 = vsub.s32 2, %v889
  %v891 = vrot.slane %v878, %v890
  %v892 = vlaneseq
  %v893 = vshrl.u32 %v892, 7
  %v894 = vsub.s32 3, %v893
  %v895 = vrot.slane %v878, %v894
  %v900 = vmul.f32 %v874, %v883
  %v901 = vmul.f32 %v871, %v887
  %v902 = vmul.f32 %v868, %v891
  %v903 = vmul.f32 %v865, %v895
  %v904 = vmul.f32 %v875, %v883
  %v905 = vmul.f32 %v872, %v887
  %v906 = vmul.f32 %v869, %v891
  %v907 = vmul.f32 %v866, %v895
  %v908 = vmul.f32 %v876, %v883
  %v909 = vmul.f32 %v873, %v887
  %v910 = vmul.f32 %v870, %v891
  %v911 = vmul.f32 %v867, %v895
  %912 = vset.pattern.permute.xlu0 6
  %913 = vperm.xlu0 %912, %v209
  %v914 = vpop.permute.xlu0 %913
  %916 = vset.pattern.permute.xlu0 6
  %917 = vperm.xlu0 %916, %v210
  %v918 = vpop.permute.xlu0 %917
  %920 = vset.pattern.permute.xlu0 6
  %921 = vperm.xlu0 %920, %v211
  %v922 = vpop.permute.xlu0 %921
  %v924 = vmul.f32 %v900, %v914
  %v925 = vmul.f32 %v901, %v914
  %v926 = vmul.f32 %v902, %v914
  %v927 = vmul.f32 %v903, %v914
  %v928 = vmul.f32 %v904, %v918
  %v929 = vmul.f32 %v905, %v918
  %v930 = vmul.f32 %v906, %v918
  %v931 = vmul.f32 %v907, %v918
  %v932 = vmul.f32 %v908, %v922
  %v933 = vmul.f32 %v909, %v922
  %v934 = vmul.f32 %v910, %v922
  %v935 = vmul.f32 %v911, %v922
  %v936 = vadd.f32 %v720, %v924
  %v937 = vadd.f32 %v721, %v925
  %v938 = vadd.f32 %v722, %v926
  %v939 = vadd.f32 %v723, %v927
  %v940 = vadd.f32 %v724, %v928
  %v941 = vadd.f32 %v725, %v929
  %v942 = vadd.f32 %v726, %v930
  %v943 = vadd.f32 %v727, %v931
  %v944 = vadd.f32 %v728, %v932
  %v945 = vadd.f32 %v729, %v933
  %v946 = vadd.f32 %v730, %v934
  %v947 = vadd.f32 %v731, %v935
  %948 = vrot.lane.b32.xlu0 %v110, 56
  %v949 = vpop.permute.xlu0 %948
  %950 = vrot.lane.b32.xlu0 %v116, 56
  %v951 = vpop.permute.xlu0 %950
  %952 = vrot.lane.b32.xlu0 %v122, 56
  %v953 = vpop.permute.xlu0 %952
  %954 = vrot.lane.b32.xlu0 %v112, 56
  %v955 = vpop.permute.xlu0 %954
  %956 = vrot.lane.b32.xlu0 %v118, 56
  %v957 = vpop.permute.xlu0 %956
  %958 = vrot.lane.b32.xlu0 %v124, 56
  %v959 = vpop.permute.xlu0 %958
  %960 = vrot.lane.b32.xlu0 %v193, 56
  %v961 = vpop.permute.xlu0 %960
  %962 = vrot.lane.b32.xlu0 %v199, 56
  %v963 = vpop.permute.xlu0 %962
  %964 = vrot.lane.b32.xlu0 %v205, 56
  %v965 = vpop.permute.xlu0 %964
  %966 = vrot.lane.b32.xlu0 %v195, 56
  %v967 = vpop.permute.xlu0 %966
  %968 = vrot.lane.b32.xlu0 %v201, 56
  %v969 = vpop.permute.xlu0 %968
  %970 = vrot.lane.b32.xlu0 %v207, 56
  %v971 = vpop.permute.xlu0 %970
  %vm972 = vcmp.lt.s32.totalorder %v237, 56
  %v973 = vsel %vm972, %v961, %v967
  %v974 = vsel %vm972, %v963, %v969
  %v975 = vsel %vm972, %v965, %v971
  %v976 = vsel %vm972, %v955, %v961
  %v977 = vsel %vm972, %v957, %v963
  %v978 = vsel %vm972, %v959, %v965
  %v979 = vsel %vm972, %v949, %v955
  %v980 = vsel %vm972, %v951, %v957
  %v981 = vsel %vm972, %v953, %v959
  %v982 = vsel %vm972, %v967, %v949
  %v983 = vsel %vm972, %v969, %v951
  %v984 = vsel %vm972, %v971, %v953
  %s985 = scalar_lea.vmem %s5, 7
  %v986 = vld [vmem:[%s985] ss:$8 sm:$0xf]
  %v988 = vlaneseq
  %v989 = vshrl.u32 %v988, 7
  %v990 = vsub.s32 0, %v989
  %v991 = vrot.slane %v986, %v990
  %v992 = vlaneseq
  %v993 = vshrl.u32 %v992, 7
  %v994 = vsub.s32 1, %v993
  %v995 = vrot.slane %v986, %v994
  %v996 = vlaneseq
  %v997 = vshrl.u32 %v996, 7
  %v998 = vsub.s32 2, %v997
  %v999 = vrot.slane %v986, %v998
  %v1000 = vlaneseq
  %v1001 = vshrl.u32 %v1000, 7
  %v1002 = vsub.s32 3, %v1001
  %v1003 = vrot.slane %v986, %v1002
  %v1008 = vmul.f32 %v982, %v991
  %v1009 = vmul.f32 %v979, %v995
  %v1010 = vmul.f32 %v976, %v999
  %v1011 = vmul.f32 %v973, %v1003
  %v1012 = vmul.f32 %v983, %v991
  %v1013 = vmul.f32 %v980, %v995
  %v1014 = vmul.f32 %v977, %v999
  %v1015 = vmul.f32 %v974, %v1003
  %v1016 = vmul.f32 %v984, %v991
  %v1017 = vmul.f32 %v981, %v995
  %v1018 = vmul.f32 %v978, %v999
  %v1019 = vmul.f32 %v975, %v1003
  %1020 = vset.pattern.permute.xlu0 7
  %1021 = vperm.xlu0 %1020, %v209
  %v1022 = vpop.permute.xlu0 %1021
  %1024 = vset.pattern.permute.xlu0 7
  %1025 = vperm.xlu0 %1024, %v210
  %v1026 = vpop.permute.xlu0 %1025
  %1028 = vset.pattern.permute.xlu0 7
  %1029 = vperm.xlu0 %1028, %v211
  %v1030 = vpop.permute.xlu0 %1029
  %v1032 = vmul.f32 %v1008, %v1022
  %v1033 = vmul.f32 %v1009, %v1022
  %v1034 = vmul.f32 %v1010, %v1022
  %v1035 = vmul.f32 %v1011, %v1022
  %v1036 = vmul.f32 %v1012, %v1026
  %v1037 = vmul.f32 %v1013, %v1026
  %v1038 = vmul.f32 %v1014, %v1026
  %v1039 = vmul.f32 %v1015, %v1026
  %v1040 = vmul.f32 %v1016, %v1030
  %v1041 = vmul.f32 %v1017, %v1030
  %v1042 = vmul.f32 %v1018, %v1030
  %v1043 = vmul.f32 %v1019, %v1030
  %v1044 = vadd.f32 %v828, %v1032
  %v1045 = vadd.f32 %v829, %v1033
  %v1046 = vadd.f32 %v830, %v1034
  %v1047 = vadd.f32 %v831, %v1035
  %v1048 = vadd.f32 %v832, %v1036
  %v1049 = vadd.f32 %v833, %v1037
  %v1050 = vadd.f32 %v834, %v1038
  %v1051 = vadd.f32 %v835, %v1039
  %v1052 = vadd.f32 %v836, %v1040
  %v1053 = vadd.f32 %v837, %v1041
  %v1054 = vadd.f32 %v838, %v1042
  %v1055 = vadd.f32 %v839, %v1043
  %1056 = vrot.lane.b32.xlu0 %v110, 55
  %v1057 = vpop.permute.xlu0 %1056
  %1058 = vrot.lane.b32.xlu0 %v116, 55
  %v1059 = vpop.permute.xlu0 %1058
  %1060 = vrot.lane.b32.xlu0 %v122, 55
  %v1061 = vpop.permute.xlu0 %1060
  %1062 = vrot.lane.b32.xlu0 %v112, 55
  %v1063 = vpop.permute.xlu0 %1062
  %1064 = vrot.lane.b32.xlu0 %v118, 55
  %v1065 = vpop.permute.xlu0 %1064
  %1066 = vrot.lane.b32.xlu0 %v124, 55
  %v1067 = vpop.permute.xlu0 %1066
  %1068 = vrot.lane.b32.xlu0 %v193, 55
  %v1069 = vpop.permute.xlu0 %1068
  %1070 = vrot.lane.b32.xlu0 %v199, 55
  %v1071 = vpop.permute.xlu0 %1070
  %1072 = vrot.lane.b32.xlu0 %v205, 55
  %v1073 = vpop.permute.xlu0 %1072
  %1074 = vrot.lane.b32.xlu0 %v195, 55
  %v1075 = vpop.permute.xlu0 %1074
  %1076 = vrot.lane.b32.xlu0 %v201, 55
  %v1077 = vpop.permute.xlu0 %1076
  %1078 = vrot.lane.b32.xlu0 %v207, 55
  %v1079 = vpop.permute.xlu0 %1078
  %vm1080 = vcmp.lt.s32.totalorder %v237, 55
  %v1081 = vsel %vm1080, %v1069, %v1075
  %v1082 = vsel %vm1080, %v1071, %v1077
  %v1083 = vsel %vm1080, %v1073, %v1079
  %v1084 = vsel %vm1080, %v1063, %v1069
  %v1085 = vsel %vm1080, %v1065, %v1071
  %v1086 = vsel %vm1080, %v1067, %v1073
  %v1087 = vsel %vm1080, %v1057, %v1063
  %v1088 = vsel %vm1080, %v1059, %v1065
  %v1089 = vsel %vm1080, %v1061, %v1067
  %v1090 = vsel %vm1080, %v1075, %v1057
  %v1091 = vsel %vm1080, %v1077, %v1059
  %v1092 = vsel %vm1080, %v1079, %v1061
  %s1093 = scalar_lea.vmem %s5, 32
  %v1094 = vld [vmem:[%s1093] ss:$8 sm:$0xf]
  %v1096 = vlaneseq
  %v1097 = vshrl.u32 %v1096, 7
  %v1098 = vsub.s32 0, %v1097
  %v1099 = vrot.slane %v1094, %v1098
  %v1100 = vlaneseq
  %v1101 = vshrl.u32 %v1100, 7
  %v1102 = vsub.s32 1, %v1101
  %v1103 = vrot.slane %v1094, %v1102
  %v1104 = vlaneseq
  %v1105 = vshrl.u32 %v1104, 7
  %v1106 = vsub.s32 2, %v1105
  %v1107 = vrot.slane %v1094, %v1106
  %v1108 = vlaneseq
  %v1109 = vshrl.u32 %v1108, 7
  %v1110 = vsub.s32 3, %v1109
  %v1111 = vrot.slane %v1094, %v1110
  %v1116 = vmul.f32 %v1090, %v1099
  %v1117 = vmul.f32 %v1087, %v1103
  %v1118 = vmul.f32 %v1084, %v1107
  %v1119 = vmul.f32 %v1081, %v1111
  %v1120 = vmul.f32 %v1091, %v1099
  %v1121 = vmul.f32 %v1088, %v1103
  %v1122 = vmul.f32 %v1085, %v1107
  %v1123 = vmul.f32 %v1082, %v1111
  %v1124 = vmul.f32 %v1092, %v1099
  %v1125 = vmul.f32 %v1089, %v1103
  %v1126 = vmul.f32 %v1086, %v1107
  %v1127 = vmul.f32 %v1083, %v1111
  %1128 = vset.pattern.permute.xlu0 8
  %1129 = vperm.xlu0 %1128, %v209
  %v1130 = vpop.permute.xlu0 %1129
  %1132 = vset.pattern.permute.xlu0 8
  %1133 = vperm.xlu0 %1132, %v210
  %v1134 = vpop.permute.xlu0 %1133
  %1136 = vset.pattern.permute.xlu0 8
  %1137 = vperm.xlu0 %1136, %v211
  %v1138 = vpop.permute.xlu0 %1137
  %v1140 = vmul.f32 %v1116, %v1130
  %v1141 = vmul.f32 %v1117, %v1130
  %v1142 = vmul.f32 %v1118, %v1130
  %v1143 = vmul.f32 %v1119, %v1130
  %v1144 = vmul.f32 %v1120, %v1134
  %v1145 = vmul.f32 %v1121, %v1134
  %v1146 = vmul.f32 %v1122, %v1134
  %v1147 = vmul.f32 %v1123, %v1134
  %v1148 = vmul.f32 %v1124, %v1138
  %v1149 = vmul.f32 %v1125, %v1138
  %v1150 = vmul.f32 %v1126, %v1138
  %v1151 = vmul.f32 %v1127, %v1138
  %v1152 = vadd.f32 %v936, %v1140
  %v1153 = vadd.f32 %v937, %v1141
  %v1154 = vadd.f32 %v938, %v1142
  %v1155 = vadd.f32 %v939, %v1143
  %v1156 = vadd.f32 %v940, %v1144
  %v1157 = vadd.f32 %v941, %v1145
  %v1158 = vadd.f32 %v942, %v1146
  %v1159 = vadd.f32 %v943, %v1147
  %v1160 = vadd.f32 %v944, %v1148
  %v1161 = vadd.f32 %v945, %v1149
  %v1162 = vadd.f32 %v946, %v1150
  %v1163 = vadd.f32 %v947, %v1151
  %1164 = vrot.lane.b32.xlu0 %v110, 9
  %v1165 = vpop.permute.xlu0 %1164
  %1166 = vrot.lane.b32.xlu0 %v116, 9
  %v1167 = vpop.permute.xlu0 %1166
  %1168 = vrot.lane.b32.xlu0 %v122, 9
  %v1169 = vpop.permute.xlu0 %1168
  %1170 = vrot.lane.b32.xlu0 %v112, 9
  %v1171 = vpop.permute.xlu0 %1170
  %1172 = vrot.lane.b32.xlu0 %v118, 9
  %v1173 = vpop.permute.xlu0 %1172
  %1174 = vrot.lane.b32.xlu0 %v124, 9
  %v1175 = vpop.permute.xlu0 %1174
  %1176 = vrot.lane.b32.xlu0 %v193, 9
  %v1177 = vpop.permute.xlu0 %1176
  %1178 = vrot.lane.b32.xlu0 %v199, 9
  %v1179 = vpop.permute.xlu0 %1178
  %1180 = vrot.lane.b32.xlu0 %v205, 9
  %v1181 = vpop.permute.xlu0 %1180
  %1182 = vrot.lane.b32.xlu0 %v195, 9
  %v1183 = vpop.permute.xlu0 %1182
  %1184 = vrot.lane.b32.xlu0 %v201, 9
  %v1185 = vpop.permute.xlu0 %1184
  %1186 = vrot.lane.b32.xlu0 %v207, 9
  %v1187 = vpop.permute.xlu0 %1186
  %vm1188 = vcmp.lt.s32.totalorder %v237, 9
  %v1189 = vsel %vm1188, %v1177, %v1183
  %v1190 = vsel %vm1188, %v1179, %v1185
  %v1191 = vsel %vm1188, %v1181, %v1187
  %v1192 = vsel %vm1188, %v1171, %v1177
  %v1193 = vsel %vm1188, %v1173, %v1179
  %v1194 = vsel %vm1188, %v1175, %v1181
  %v1195 = vsel %vm1188, %v1165, %v1171
  %v1196 = vsel %vm1188, %v1167, %v1173
  %v1197 = vsel %vm1188, %v1169, %v1175
  %v1198 = vsel %vm1188, %v1183, %v1165
  %v1199 = vsel %vm1188, %v1185, %v1167
  %v1200 = vsel %vm1188, %v1187, %v1169
  %s1201 = scalar_lea.vmem %s5, 33
  %v1202 = vld [vmem:[%s1201] ss:$8 sm:$0xf]
  %v1204 = vlaneseq
  %v1205 = vshrl.u32 %v1204, 7
  %v1206 = vsub.s32 0, %v1205
  %v1207 = vrot.slane %v1202, %v1206
  %v1208 = vlaneseq
  %v1209 = vshrl.u32 %v1208, 7
  %v1210 = vsub.s32 1, %v1209
  %v1211 = vrot.slane %v1202, %v1210
  %v1212 = vlaneseq
  %v1213 = vshrl.u32 %v1212, 7
  %v1214 = vsub.s32 2, %v1213
  %v1215 = vrot.slane %v1202, %v1214
  %v1216 = vlaneseq
  %v1217 = vshrl.u32 %v1216, 7
  %v1218 = vsub.s32 3, %v1217
  %v1219 = vrot.slane %v1202, %v1218
  %v1224 = vmul.f32 %v1198, %v1207
  %v1225 = vmul.f32 %v1195, %v1211
  %v1226 = vmul.f32 %v1192, %v1215
  %v1227 = vmul.f32 %v1189, %v1219
  %v1228 = vmul.f32 %v1199, %v1207
  %v1229 = vmul.f32 %v1196, %v1211
  %v1230 = vmul.f32 %v1193, %v1215
  %v1231 = vmul.f32 %v1190, %v1219
  %v1232 = vmul.f32 %v1200, %v1207
  %v1233 = vmul.f32 %v1197, %v1211
  %v1234 = vmul.f32 %v1194, %v1215
  %v1235 = vmul.f32 %v1191, %v1219
  %1236 = vset.pattern.permute.xlu0 9
  %1237 = vperm.xlu0 %1236, %v209
  %v1238 = vpop.permute.xlu0 %1237
  %1240 = vset.pattern.permute.xlu0 9
  %1241 = vperm.xlu0 %1240, %v210
  %v1242 = vpop.permute.xlu0 %1241
  %1244 = vset.pattern.permute.xlu0 9
  %1245 = vperm.xlu0 %1244, %v211
  %v1246 = vpop.permute.xlu0 %1245
  %v1248 = vmul.f32 %v1224, %v1238
  %v1249 = vmul.f32 %v1225, %v1238
  %v1250 = vmul.f32 %v1226, %v1238
  %v1251 = vmul.f32 %v1227, %v1238
  %v1252 = vmul.f32 %v1228, %v1242
  %v1253 = vmul.f32 %v1229, %v1242
  %v1254 = vmul.f32 %v1230, %v1242
  %v1255 = vmul.f32 %v1231, %v1242
  %v1256 = vmul.f32 %v1232, %v1246
  %v1257 = vmul.f32 %v1233, %v1246
  %v1258 = vmul.f32 %v1234, %v1246
  %v1259 = vmul.f32 %v1235, %v1246
  %v1260 = vadd.f32 %v1044, %v1248
  %v1261 = vadd.f32 %v1045, %v1249
  %v1262 = vadd.f32 %v1046, %v1250
  %v1263 = vadd.f32 %v1047, %v1251
  %v1264 = vadd.f32 %v1048, %v1252
  %v1265 = vadd.f32 %v1049, %v1253
  %v1266 = vadd.f32 %v1050, %v1254
  %v1267 = vadd.f32 %v1051, %v1255
  %v1268 = vadd.f32 %v1052, %v1256
  %v1269 = vadd.f32 %v1053, %v1257
  %v1270 = vadd.f32 %v1054, %v1258
  %v1271 = vadd.f32 %v1055, %v1259
  %1272 = vrot.lane.b32.xlu0 %v110, 8
  %v1273 = vpop.permute.xlu0 %1272
  %1274 = vrot.lane.b32.xlu0 %v116, 8
  %v1275 = vpop.permute.xlu0 %1274
  %1276 = vrot.lane.b32.xlu0 %v122, 8
  %v1277 = vpop.permute.xlu0 %1276
  %1278 = vrot.lane.b32.xlu0 %v112, 8
  %v1279 = vpop.permute.xlu0 %1278
  %1280 = vrot.lane.b32.xlu0 %v118, 8
  %v1281 = vpop.permute.xlu0 %1280
  %1282 = vrot.lane.b32.xlu0 %v124, 8
  %v1283 = vpop.permute.xlu0 %1282
  %1284 = vrot.lane.b32.xlu0 %v193, 8
  %v1285 = vpop.permute.xlu0 %1284
  %1286 = vrot.lane.b32.xlu0 %v199, 8
  %v1287 = vpop.permute.xlu0 %1286
  %1288 = vrot.lane.b32.xlu0 %v205, 8
  %v1289 = vpop.permute.xlu0 %1288
  %1290 = vrot.lane.b32.xlu0 %v195, 8
  %v1291 = vpop.permute.xlu0 %1290
  %1292 = vrot.lane.b32.xlu0 %v201, 8
  %v1293 = vpop.permute.xlu0 %1292
  %1294 = vrot.lane.b32.xlu0 %v207, 8
  %v1295 = vpop.permute.xlu0 %1294
  %vm1296 = vcmp.lt.s32.totalorder %v237, 8
  %v1297 = vsel %vm1296, %v1285, %v1291
  %v1298 = vsel %vm1296, %v1287, %v1293
  %v1299 = vsel %vm1296, %v1289, %v1295
  %v1300 = vsel %vm1296, %v1279, %v1285
  %v1301 = vsel %vm1296, %v1281, %v1287
  %v1302 = vsel %vm1296, %v1283, %v1289
  %v1303 = vsel %vm1296, %v1273, %v1279
  %v1304 = vsel %vm1296, %v1275, %v1281
  %v1305 = vsel %vm1296, %v1277, %v1283
  %v1306 = vsel %vm1296, %v1291, %v1273
  %v1307 = vsel %vm1296, %v1293, %v1275
  %v1308 = vsel %vm1296, %v1295, %v1277
  %s1309 = scalar_lea.vmem %s5, 34
  %v1310 = vld [vmem:[%s1309] ss:$8 sm:$0xf]
  %v1312 = vlaneseq
  %v1313 = vshrl.u32 %v1312, 7
  %v1314 = vsub.s32 0, %v1313
  %v1315 = vrot.slane %v1310, %v1314
  %v1316 = vlaneseq
  %v1317 = vshrl.u32 %v1316, 7
  %v1318 = vsub.s32 1, %v1317
  %v1319 = vrot.slane %v1310, %v1318
  %v1320 = vlaneseq
  %v1321 = vshrl.u32 %v1320, 7
  %v1322 = vsub.s32 2, %v1321
  %v1323 = vrot.slane %v1310, %v1322
  %v1324 = vlaneseq
  %v1325 = vshrl.u32 %v1324, 7
  %v1326 = vsub.s32 3, %v1325
  %v1327 = vrot.slane %v1310, %v1326
  %v1332 = vmul.f32 %v1306, %v1315
  %v1333 = vmul.f32 %v1303, %v1319
  %v1334 = vmul.f32 %v1300, %v1323
  %v1335 = vmul.f32 %v1297, %v1327
  %v1336 = vmul.f32 %v1307, %v1315
  %v1337 = vmul.f32 %v1304, %v1319
  %v1338 = vmul.f32 %v1301, %v1323
  %v1339 = vmul.f32 %v1298, %v1327
  %v1340 = vmul.f32 %v1308, %v1315
  %v1341 = vmul.f32 %v1305, %v1319
  %v1342 = vmul.f32 %v1302, %v1323
  %v1343 = vmul.f32 %v1299, %v1327
  %1344 = vset.pattern.permute.xlu0 10
  %1345 = vperm.xlu0 %1344, %v209
  %v1346 = vpop.permute.xlu0 %1345
  %1348 = vset.pattern.permute.xlu0 10
  %1349 = vperm.xlu0 %1348, %v210
  %v1350 = vpop.permute.xlu0 %1349
  %1352 = vset.pattern.permute.xlu0 10
  %1353 = vperm.xlu0 %1352, %v211
  %v1354 = vpop.permute.xlu0 %1353
  %v1356 = vmul.f32 %v1332, %v1346
  %v1357 = vmul.f32 %v1333, %v1346
  %v1358 = vmul.f32 %v1334, %v1346
  %v1359 = vmul.f32 %v1335, %v1346
  %v1360 = vmul.f32 %v1336, %v1350
  %v1361 = vmul.f32 %v1337, %v1350
  %v1362 = vmul.f32 %v1338, %v1350
  %v1363 = vmul.f32 %v1339, %v1350
  %v1364 = vmul.f32 %v1340, %v1354
  %v1365 = vmul.f32 %v1341, %v1354
  %v1366 = vmul.f32 %v1342, %v1354
  %v1367 = vmul.f32 %v1343, %v1354
  %v1368 = vadd.f32 %v1152, %v1356
  %v1369 = vadd.f32 %v1153, %v1357
  %v1370 = vadd.f32 %v1154, %v1358
  %v1371 = vadd.f32 %v1155, %v1359
  %v1372 = vadd.f32 %v1156, %v1360
  %v1373 = vadd.f32 %v1157, %v1361
  %v1374 = vadd.f32 %v1158, %v1362
  %v1375 = vadd.f32 %v1159, %v1363
  %v1376 = vadd.f32 %v1160, %v1364
  %v1377 = vadd.f32 %v1161, %v1365
  %v1378 = vadd.f32 %v1162, %v1366
  %v1379 = vadd.f32 %v1163, %v1367
  %1380 = vrot.lane.b32.xlu0 %v110, 7
  %v1381 = vpop.permute.xlu0 %1380
  %1382 = vrot.lane.b32.xlu0 %v116, 7
  %v1383 = vpop.permute.xlu0 %1382
  %1384 = vrot.lane.b32.xlu0 %v122, 7
  %v1385 = vpop.permute.xlu0 %1384
  %1386 = vrot.lane.b32.xlu0 %v112, 7
  %v1387 = vpop.permute.xlu0 %1386
  %1388 = vrot.lane.b32.xlu0 %v118, 7
  %v1389 = vpop.permute.xlu0 %1388
  %1390 = vrot.lane.b32.xlu0 %v124, 7
  %v1391 = vpop.permute.xlu0 %1390
  %1392 = vrot.lane.b32.xlu0 %v193, 7
  %v1393 = vpop.permute.xlu0 %1392
  %1394 = vrot.lane.b32.xlu0 %v199, 7
  %v1395 = vpop.permute.xlu0 %1394
  %1396 = vrot.lane.b32.xlu0 %v205, 7
  %v1397 = vpop.permute.xlu0 %1396
  %1398 = vrot.lane.b32.xlu0 %v195, 7
  %v1399 = vpop.permute.xlu0 %1398
  %1400 = vrot.lane.b32.xlu0 %v201, 7
  %v1401 = vpop.permute.xlu0 %1400
  %1402 = vrot.lane.b32.xlu0 %v207, 7
  %v1403 = vpop.permute.xlu0 %1402
  %vm1404 = vcmp.lt.s32.totalorder %v237, 7
  %v1405 = vsel %vm1404, %v1393, %v1399
  %v1406 = vsel %vm1404, %v1395, %v1401
  %v1407 = vsel %vm1404, %v1397, %v1403
  %v1408 = vsel %vm1404, %v1387, %v1393
  %v1409 = vsel %vm1404, %v1389, %v1395
  %v1410 = vsel %vm1404, %v1391, %v1397
  %v1411 = vsel %vm1404, %v1381, %v1387
  %v1412 = vsel %vm1404, %v1383, %v1389
  %v1413 = vsel %vm1404, %v1385, %v1391
  %v1414 = vsel %vm1404, %v1399, %v1381
  %v1415 = vsel %vm1404, %v1401, %v1383
  %v1416 = vsel %vm1404, %v1403, %v1385
  %s1417 = scalar_lea.vmem %s5, 35
  %v1418 = vld [vmem:[%s1417] ss:$8 sm:$0xf]
  %v1420 = vlaneseq
  %v1421 = vshrl.u32 %v1420, 7
  %v1422 = vsub.s32 0, %v1421
  %v1423 = vrot.slane %v1418, %v1422
  %v1424 = vlaneseq
  %v1425 = vshrl.u32 %v1424, 7
  %v1426 = vsub.s32 1, %v1425
  %v1427 = vrot.slane %v1418, %v1426
  %v1428 = vlaneseq
  %v1429 = vshrl.u32 %v1428, 7
  %v1430 = vsub.s32 2, %v1429
  %v1431 = vrot.slane %v1418, %v1430
  %v1432 = vlaneseq
  %v1433 = vshrl.u32 %v1432, 7
  %v1434 = vsub.s32 3, %v1433
  %v1435 = vrot.slane %v1418, %v1434
  %v1440 = vmul.f32 %v1414, %v1423
  %v1441 = vmul.f32 %v1411, %v1427
  %v1442 = vmul.f32 %v1408, %v1431
  %v1443 = vmul.f32 %v1405, %v1435
  %v1444 = vmul.f32 %v1415, %v1423
  %v1445 = vmul.f32 %v1412, %v1427
  %v1446 = vmul.f32 %v1409, %v1431
  %v1447 = vmul.f32 %v1406, %v1435
  %v1448 = vmul.f32 %v1416, %v1423
  %v1449 = vmul.f32 %v1413, %v1427
  %v1450 = vmul.f32 %v1410, %v1431
  %v1451 = vmul.f32 %v1407, %v1435
  %1452 = vset.pattern.permute.xlu0 11
  %1453 = vperm.xlu0 %1452, %v209
  %v1454 = vpop.permute.xlu0 %1453
  %1456 = vset.pattern.permute.xlu0 11
  %1457 = vperm.xlu0 %1456, %v210
  %v1458 = vpop.permute.xlu0 %1457
  %1460 = vset.pattern.permute.xlu0 11
  %1461 = vperm.xlu0 %1460, %v211
  %v1462 = vpop.permute.xlu0 %1461
  %v1464 = vmul.f32 %v1440, %v1454
  %v1465 = vmul.f32 %v1441, %v1454
  %v1466 = vmul.f32 %v1442, %v1454
  %v1467 = vmul.f32 %v1443, %v1454
  %v1468 = vmul.f32 %v1444, %v1458
  %v1469 = vmul.f32 %v1445, %v1458
  %v1470 = vmul.f32 %v1446, %v1458
  %v1471 = vmul.f32 %v1447, %v1458
  %v1472 = vmul.f32 %v1448, %v1462
  %v1473 = vmul.f32 %v1449, %v1462
  %v1474 = vmul.f32 %v1450, %v1462
  %v1475 = vmul.f32 %v1451, %v1462
  %v1476 = vadd.f32 %v1260, %v1464
  %v1477 = vadd.f32 %v1261, %v1465
  %v1478 = vadd.f32 %v1262, %v1466
  %v1479 = vadd.f32 %v1263, %v1467
  %v1480 = vadd.f32 %v1264, %v1468
  %v1481 = vadd.f32 %v1265, %v1469
  %v1482 = vadd.f32 %v1266, %v1470
  %v1483 = vadd.f32 %v1267, %v1471
  %v1484 = vadd.f32 %v1268, %v1472
  %v1485 = vadd.f32 %v1269, %v1473
  %v1486 = vadd.f32 %v1270, %v1474
  %v1487 = vadd.f32 %v1271, %v1475
  %1488 = vrot.lane.b32.xlu0 %v110, 1
  %v1489 = vpop.permute.xlu0 %1488
  %1490 = vrot.lane.b32.xlu0 %v116, 1
  %v1491 = vpop.permute.xlu0 %1490
  %1492 = vrot.lane.b32.xlu0 %v122, 1
  %v1493 = vpop.permute.xlu0 %1492
  %1494 = vrot.lane.b32.xlu0 %v112, 1
  %v1495 = vpop.permute.xlu0 %1494
  %1496 = vrot.lane.b32.xlu0 %v118, 1
  %v1497 = vpop.permute.xlu0 %1496
  %1498 = vrot.lane.b32.xlu0 %v124, 1
  %v1499 = vpop.permute.xlu0 %1498
  %1500 = vrot.lane.b32.xlu0 %v193, 1
  %v1501 = vpop.permute.xlu0 %1500
  %1502 = vrot.lane.b32.xlu0 %v199, 1
  %v1503 = vpop.permute.xlu0 %1502
  %1504 = vrot.lane.b32.xlu0 %v205, 1
  %v1505 = vpop.permute.xlu0 %1504
  %1506 = vrot.lane.b32.xlu0 %v195, 1
  %v1507 = vpop.permute.xlu0 %1506
  %1508 = vrot.lane.b32.xlu0 %v201, 1
  %v1509 = vpop.permute.xlu0 %1508
  %1510 = vrot.lane.b32.xlu0 %v207, 1
  %v1511 = vpop.permute.xlu0 %1510
  %vm1512 = vcmp.lt.s32.totalorder %v237, 1
  %v1513 = vsel %vm1512, %v1501, %v1507
  %v1514 = vsel %vm1512, %v1503, %v1509
  %v1515 = vsel %vm1512, %v1505, %v1511
  %v1516 = vsel %vm1512, %v1495, %v1501
  %v1517 = vsel %vm1512, %v1497, %v1503
  %v1518 = vsel %vm1512, %v1499, %v1505
  %v1519 = vsel %vm1512, %v1489, %v1495
  %v1520 = vsel %vm1512, %v1491, %v1497
  %v1521 = vsel %vm1512, %v1493, %v1499
  %v1522 = vsel %vm1512, %v1507, %v1489
  %v1523 = vsel %vm1512, %v1509, %v1491
  %v1524 = vsel %vm1512, %v1511, %v1493
  %s1525 = scalar_lea.vmem %s5, 36
  %v1526 = vld [vmem:[%s1525] ss:$8 sm:$0xf]
  %v1528 = vlaneseq
  %v1529 = vshrl.u32 %v1528, 7
  %v1530 = vsub.s32 0, %v1529
  %v1531 = vrot.slane %v1526, %v1530
  %v1532 = vlaneseq
  %v1533 = vshrl.u32 %v1532, 7
  %v1534 = vsub.s32 1, %v1533
  %v1535 = vrot.slane %v1526, %v1534
  %v1536 = vlaneseq
  %v1537 = vshrl.u32 %v1536, 7
  %v1538 = vsub.s32 2, %v1537
  %v1539 = vrot.slane %v1526, %v1538
  %v1540 = vlaneseq
  %v1541 = vshrl.u32 %v1540, 7
  %v1542 = vsub.s32 3, %v1541
  %v1543 = vrot.slane %v1526, %v1542
  %v1548 = vmul.f32 %v1522, %v1531
  %v1549 = vmul.f32 %v1519, %v1535
  %v1550 = vmul.f32 %v1516, %v1539
  %v1551 = vmul.f32 %v1513, %v1543
  %v1552 = vmul.f32 %v1523, %v1531
  %v1553 = vmul.f32 %v1520, %v1535
  %v1554 = vmul.f32 %v1517, %v1539
  %v1555 = vmul.f32 %v1514, %v1543
  %v1556 = vmul.f32 %v1524, %v1531
  %v1557 = vmul.f32 %v1521, %v1535
  %v1558 = vmul.f32 %v1518, %v1539
  %v1559 = vmul.f32 %v1515, %v1543
  %1560 = vset.pattern.permute.xlu0 12
  %1561 = vperm.xlu0 %1560, %v209
  %v1562 = vpop.permute.xlu0 %1561
  %1564 = vset.pattern.permute.xlu0 12
  %1565 = vperm.xlu0 %1564, %v210
  %v1566 = vpop.permute.xlu0 %1565
  %1568 = vset.pattern.permute.xlu0 12
  %1569 = vperm.xlu0 %1568, %v211
  %v1570 = vpop.permute.xlu0 %1569
  %v1572 = vmul.f32 %v1548, %v1562
  %v1573 = vmul.f32 %v1549, %v1562
  %v1574 = vmul.f32 %v1550, %v1562
  %v1575 = vmul.f32 %v1551, %v1562
  %v1576 = vmul.f32 %v1552, %v1566
  %v1577 = vmul.f32 %v1553, %v1566
  %v1578 = vmul.f32 %v1554, %v1566
  %v1579 = vmul.f32 %v1555, %v1566
  %v1580 = vmul.f32 %v1556, %v1570
  %v1581 = vmul.f32 %v1557, %v1570
  %v1582 = vmul.f32 %v1558, %v1570
  %v1583 = vmul.f32 %v1559, %v1570
  %v1584 = vadd.f32 %v1368, %v1572
  %v1585 = vadd.f32 %v1369, %v1573
  %v1586 = vadd.f32 %v1370, %v1574
  %v1587 = vadd.f32 %v1371, %v1575
  %v1588 = vadd.f32 %v1372, %v1576
  %v1589 = vadd.f32 %v1373, %v1577
  %v1590 = vadd.f32 %v1374, %v1578
  %v1591 = vadd.f32 %v1375, %v1579
  %v1592 = vadd.f32 %v1376, %v1580
  %v1593 = vadd.f32 %v1377, %v1581
  %v1594 = vadd.f32 %v1378, %v1582
  %v1595 = vadd.f32 %v1379, %v1583
  %1596 = vset.pattern.permute.xlu0 13
  %1597 = vperm.xlu0 %1596, %v209
  %v1598 = vpop.permute.xlu0 %1597
  %1600 = vset.pattern.permute.xlu0 13
  %1601 = vperm.xlu0 %1600, %v210
  %v1602 = vpop.permute.xlu0 %1601
  %1604 = vset.pattern.permute.xlu0 13
  %1605 = vperm.xlu0 %1604, %v211
  %v1606 = vpop.permute.xlu0 %1605
  %v1608 = vmul.f32 %v110, %v1598
  %v1609 = vmul.f32 %v112, %v1598
  %v1610 = vmul.f32 %v193, %v1598
  %v1611 = vmul.f32 %v195, %v1598
  %v1612 = vmul.f32 %v116, %v1602
  %v1613 = vmul.f32 %v118, %v1602
  %v1614 = vmul.f32 %v199, %v1602
  %v1615 = vmul.f32 %v201, %v1602
  %v1616 = vmul.f32 %v122, %v1606
  %v1617 = vmul.f32 %v124, %v1606
  %v1618 = vmul.f32 %v205, %v1606
  %v1619 = vmul.f32 %v207, %v1606
  %v1620 = vadd.f32 %v1476, %v1608
  %v1621 = vadd.f32 %v1477, %v1609
  %v1622 = vadd.f32 %v1478, %v1610
  %v1623 = vadd.f32 %v1479, %v1611
  %v1624 = vadd.f32 %v1480, %v1612
  %v1625 = vadd.f32 %v1481, %v1613
  %v1626 = vadd.f32 %v1482, %v1614
  %v1627 = vadd.f32 %v1483, %v1615
  %v1628 = vadd.f32 %v1484, %v1616
  %v1629 = vadd.f32 %v1485, %v1617
  %v1630 = vadd.f32 %v1486, %v1618
  %v1631 = vadd.f32 %v1487, %v1619
  %1632 = vrot.lane.b32.xlu0 %v110, 127
  %v1633 = vpop.permute.xlu0 %1632
  %1634 = vrot.lane.b32.xlu0 %v116, 127
  %v1635 = vpop.permute.xlu0 %1634
  %1636 = vrot.lane.b32.xlu0 %v122, 127
  %v1637 = vpop.permute.xlu0 %1636
  %1638 = vrot.lane.b32.xlu0 %v112, 127
  %v1639 = vpop.permute.xlu0 %1638
  %1640 = vrot.lane.b32.xlu0 %v118, 127
  %v1641 = vpop.permute.xlu0 %1640
  %1642 = vrot.lane.b32.xlu0 %v124, 127
  %v1643 = vpop.permute.xlu0 %1642
  %1644 = vrot.lane.b32.xlu0 %v193, 127
  %v1645 = vpop.permute.xlu0 %1644
  %1646 = vrot.lane.b32.xlu0 %v199, 127
  %v1647 = vpop.permute.xlu0 %1646
  %1648 = vrot.lane.b32.xlu0 %v205, 127
  %v1649 = vpop.permute.xlu0 %1648
  %1650 = vrot.lane.b32.xlu0 %v195, 127
  %v1651 = vpop.permute.xlu0 %1650
  %1652 = vrot.lane.b32.xlu0 %v201, 127
  %v1653 = vpop.permute.xlu0 %1652
  %1654 = vrot.lane.b32.xlu0 %v207, 127
  %v1655 = vpop.permute.xlu0 %1654
  %vm1656 = vcmp.lt.s32.totalorder %v237, 127
  %v1657 = vsel %vm1656, %v1645, %v1651
  %v1658 = vsel %vm1656, %v1647, %v1653
  %v1659 = vsel %vm1656, %v1649, %v1655
  %v1660 = vsel %vm1656, %v1639, %v1645
  %v1661 = vsel %vm1656, %v1641, %v1647
  %v1662 = vsel %vm1656, %v1643, %v1649
  %v1663 = vsel %vm1656, %v1633, %v1639
  %v1664 = vsel %vm1656, %v1635, %v1641
  %v1665 = vsel %vm1656, %v1637, %v1643
  %v1666 = vsel %vm1656, %v1651, %v1633
  %v1667 = vsel %vm1656, %v1653, %v1635
  %v1668 = vsel %vm1656, %v1655, %v1637
  %s1669 = scalar_lea.vmem %s5, 38
  %v1670 = vld [vmem:[%s1669] ss:$8 sm:$0xf]
  %v1672 = vlaneseq
  %v1673 = vshrl.u32 %v1672, 7
  %v1674 = vsub.s32 0, %v1673
  %v1675 = vrot.slane %v1670, %v1674
  %v1676 = vlaneseq
  %v1677 = vshrl.u32 %v1676, 7
  %v1678 = vsub.s32 1, %v1677
  %v1679 = vrot.slane %v1670, %v1678
  %v1680 = vlaneseq
  %v1681 = vshrl.u32 %v1680, 7
  %v1682 = vsub.s32 2, %v1681
  %v1683 = vrot.slane %v1670, %v1682
  %v1684 = vlaneseq
  %v1685 = vshrl.u32 %v1684, 7
  %v1686 = vsub.s32 3, %v1685
  %v1687 = vrot.slane %v1670, %v1686
  %v1692 = vmul.f32 %v1663, %v1675
  %v1693 = vmul.f32 %v1660, %v1679
  %v1694 = vmul.f32 %v1657, %v1683
  %v1695 = vmul.f32 %v1666, %v1687
  %v1696 = vmul.f32 %v1664, %v1675
  %v1697 = vmul.f32 %v1661, %v1679
  %v1698 = vmul.f32 %v1658, %v1683
  %v1699 = vmul.f32 %v1667, %v1687
  %v1700 = vmul.f32 %v1665, %v1675
  %v1701 = vmul.f32 %v1662, %v1679
  %v1702 = vmul.f32 %v1659, %v1683
  %v1703 = vmul.f32 %v1668, %v1687
  %1704 = vset.pattern.permute.xlu0 14
  %1705 = vperm.xlu0 %1704, %v209
  %v1706 = vpop.permute.xlu0 %1705
  %1708 = vset.pattern.permute.xlu0 14
  %1709 = vperm.xlu0 %1708, %v210
  %v1710 = vpop.permute.xlu0 %1709
  %1712 = vset.pattern.permute.xlu0 14
  %1713 = vperm.xlu0 %1712, %v211
  %v1714 = vpop.permute.xlu0 %1713
  %v1716 = vmul.f32 %v1692, %v1706
  %v1717 = vmul.f32 %v1693, %v1706
  %v1718 = vmul.f32 %v1694, %v1706
  %v1719 = vmul.f32 %v1695, %v1706
  %v1720 = vmul.f32 %v1696, %v1710
  %v1721 = vmul.f32 %v1697, %v1710
  %v1722 = vmul.f32 %v1698, %v1710
  %v1723 = vmul.f32 %v1699, %v1710
  %v1724 = vmul.f32 %v1700, %v1714
  %v1725 = vmul.f32 %v1701, %v1714
  %v1726 = vmul.f32 %v1702, %v1714
  %v1727 = vmul.f32 %v1703, %v1714
  %v1728 = vadd.f32 %v1584, %v1716
  %v1729 = vadd.f32 %v1585, %v1717
  %v1730 = vadd.f32 %v1586, %v1718
  %v1731 = vadd.f32 %v1587, %v1719
  %v1732 = vadd.f32 %v1588, %v1720
  %v1733 = vadd.f32 %v1589, %v1721
  %v1734 = vadd.f32 %v1590, %v1722
  %v1735 = vadd.f32 %v1591, %v1723
  %v1736 = vadd.f32 %v1592, %v1724
  %v1737 = vadd.f32 %v1593, %v1725
  %v1738 = vadd.f32 %v1594, %v1726
  %v1739 = vadd.f32 %v1595, %v1727
  %1740 = vrot.lane.b32.xlu0 %v110, 121
  %v1741 = vpop.permute.xlu0 %1740
  %1742 = vrot.lane.b32.xlu0 %v116, 121
  %v1743 = vpop.permute.xlu0 %1742
  %1744 = vrot.lane.b32.xlu0 %v122, 121
  %v1745 = vpop.permute.xlu0 %1744
  %1746 = vrot.lane.b32.xlu0 %v112, 121
  %v1747 = vpop.permute.xlu0 %1746
  %1748 = vrot.lane.b32.xlu0 %v118, 121
  %v1749 = vpop.permute.xlu0 %1748
  %1750 = vrot.lane.b32.xlu0 %v124, 121
  %v1751 = vpop.permute.xlu0 %1750
  %1752 = vrot.lane.b32.xlu0 %v193, 121
  %v1753 = vpop.permute.xlu0 %1752
  %1754 = vrot.lane.b32.xlu0 %v199, 121
  %v1755 = vpop.permute.xlu0 %1754
  %1756 = vrot.lane.b32.xlu0 %v205, 121
  %v1757 = vpop.permute.xlu0 %1756
  %1758 = vrot.lane.b32.xlu0 %v195, 121
  %v1759 = vpop.permute.xlu0 %1758
  %1760 = vrot.lane.b32.xlu0 %v201, 121
  %v1761 = vpop.permute.xlu0 %1760
  %1762 = vrot.lane.b32.xlu0 %v207, 121
  %v1763 = vpop.permute.xlu0 %1762
  %vm1764 = vcmp.lt.s32.totalorder %v237, 121
  %v1765 = vsel %vm1764, %v1753, %v1759
  %v1766 = vsel %vm1764, %v1755, %v1761
  %v1767 = vsel %vm1764, %v1757, %v1763
  %v1768 = vsel %vm1764, %v1747, %v1753
  %v1769 = vsel %vm1764, %v1749, %v1755
  %v1770 = vsel %vm1764, %v1751, %v1757
  %v1771 = vsel %vm1764, %v1741, %v1747
  %v1772 = vsel %vm1764, %v1743, %v1749
  %v1773 = vsel %vm1764, %v1745, %v1751
  %v1774 = vsel %vm1764, %v1759, %v1741
  %v1775 = vsel %vm1764, %v1761, %v1743
  %v1776 = vsel %vm1764, %v1763, %v1745
  %s1777 = scalar_lea.vmem %s5, 39
  %v1778 = vld [vmem:[%s1777] ss:$8 sm:$0xf]
  %v1780 = vlaneseq
  %v1781 = vshrl.u32 %v1780, 7
  %v1782 = vsub.s32 0, %v1781
  %v1783 = vrot.slane %v1778, %v1782
  %v1784 = vlaneseq
  %v1785 = vshrl.u32 %v1784, 7
  %v1786 = vsub.s32 1, %v1785
  %v1787 = vrot.slane %v1778, %v1786
  %v1788 = vlaneseq
  %v1789 = vshrl.u32 %v1788, 7
  %v1790 = vsub.s32 2, %v1789
  %v1791 = vrot.slane %v1778, %v1790
  %v1792 = vlaneseq
  %v1793 = vshrl.u32 %v1792, 7
  %v1794 = vsub.s32 3, %v1793
  %v1795 = vrot.slane %v1778, %v1794
  %v1800 = vmul.f32 %v1771, %v1783
  %v1801 = vmul.f32 %v1768, %v1787
  %v1802 = vmul.f32 %v1765, %v1791
  %v1803 = vmul.f32 %v1774, %v1795
  %v1804 = vmul.f32 %v1772, %v1783
  %v1805 = vmul.f32 %v1769, %v1787
  %v1806 = vmul.f32 %v1766, %v1791
  %v1807 = vmul.f32 %v1775, %v1795
  %v1808 = vmul.f32 %v1773, %v1783
  %v1809 = vmul.f32 %v1770, %v1787
  %v1810 = vmul.f32 %v1767, %v1791
  %v1811 = vmul.f32 %v1776, %v1795
  %1812 = vset.pattern.permute.xlu0 15
  %1813 = vperm.xlu0 %1812, %v209
  %v1814 = vpop.permute.xlu0 %1813
  %1816 = vset.pattern.permute.xlu0 15
  %1817 = vperm.xlu0 %1816, %v210
  %v1818 = vpop.permute.xlu0 %1817
  %1820 = vset.pattern.permute.xlu0 15
  %1821 = vperm.xlu0 %1820, %v211
  %v1822 = vpop.permute.xlu0 %1821
  %v1824 = vmul.f32 %v1800, %v1814
  %v1825 = vmul.f32 %v1801, %v1814
  %v1826 = vmul.f32 %v1802, %v1814
  %v1827 = vmul.f32 %v1803, %v1814
  %v1828 = vmul.f32 %v1804, %v1818
  %v1829 = vmul.f32 %v1805, %v1818
  %v1830 = vmul.f32 %v1806, %v1818
  %v1831 = vmul.f32 %v1807, %v1818
  %v1832 = vmul.f32 %v1808, %v1822
  %v1833 = vmul.f32 %v1809, %v1822
  %v1834 = vmul.f32 %v1810, %v1822
  %v1835 = vmul.f32 %v1811, %v1822
  %v1836 = vadd.f32 %v1620, %v1824
  %v1837 = vadd.f32 %v1621, %v1825
  %v1838 = vadd.f32 %v1622, %v1826
  %v1839 = vadd.f32 %v1623, %v1827
  %v1840 = vadd.f32 %v1624, %v1828
  %v1841 = vadd.f32 %v1625, %v1829
  %v1842 = vadd.f32 %v1626, %v1830
  %v1843 = vadd.f32 %v1627, %v1831
  %v1844 = vadd.f32 %v1628, %v1832
  %v1845 = vadd.f32 %v1629, %v1833
  %v1846 = vadd.f32 %v1630, %v1834
  %v1847 = vadd.f32 %v1631, %v1835
  %1848 = vrot.lane.b32.xlu0 %v110, 120
  %v1849 = vpop.permute.xlu0 %1848
  %1850 = vrot.lane.b32.xlu0 %v116, 120
  %v1851 = vpop.permute.xlu0 %1850
  %1852 = vrot.lane.b32.xlu0 %v122, 120
  %v1853 = vpop.permute.xlu0 %1852
  %1854 = vrot.lane.b32.xlu0 %v112, 120
  %v1855 = vpop.permute.xlu0 %1854
  %1856 = vrot.lane.b32.xlu0 %v118, 120
  %v1857 = vpop.permute.xlu0 %1856
  %1858 = vrot.lane.b32.xlu0 %v124, 120
  %v1859 = vpop.permute.xlu0 %1858
  %1860 = vrot.lane.b32.xlu0 %v193, 120
  %v1861 = vpop.permute.xlu0 %1860
  %1862 = vrot.lane.b32.xlu0 %v199, 120
  %v1863 = vpop.permute.xlu0 %1862
  %1864 = vrot.lane.b32.xlu0 %v205, 120
  %v1865 = vpop.permute.xlu0 %1864
  %1866 = vrot.lane.b32.xlu0 %v195, 120
  %v1867 = vpop.permute.xlu0 %1866
  %1868 = vrot.lane.b32.xlu0 %v201, 120
  %v1869 = vpop.permute.xlu0 %1868
  %1870 = vrot.lane.b32.xlu0 %v207, 120
  %v1871 = vpop.permute.xlu0 %1870
  %vm1872 = vcmp.lt.s32.totalorder %v237, 120
  %v1873 = vsel %vm1872, %v1861, %v1867
  %v1874 = vsel %vm1872, %v1863, %v1869
  %v1875 = vsel %vm1872, %v1865, %v1871
  %v1876 = vsel %vm1872, %v1855, %v1861
  %v1877 = vsel %vm1872, %v1857, %v1863
  %v1878 = vsel %vm1872, %v1859, %v1865
  %v1879 = vsel %vm1872, %v1849, %v1855
  %v1880 = vsel %vm1872, %v1851, %v1857
  %v1881 = vsel %vm1872, %v1853, %v1859
  %v1882 = vsel %vm1872, %v1867, %v1849
  %v1883 = vsel %vm1872, %v1869, %v1851
  %v1884 = vsel %vm1872, %v1871, %v1853
  %s1885 = scalar_lea.vmem %s5, 64
  %v1886 = vld [vmem:[%s1885] ss:$8 sm:$0xf]
  %v1888 = vlaneseq
  %v1889 = vshrl.u32 %v1888, 7
  %v1890 = vsub.s32 0, %v1889
  %v1891 = vrot.slane %v1886, %v1890
  %v1892 = vlaneseq
  %v1893 = vshrl.u32 %v1892, 7
  %v1894 = vsub.s32 1, %v1893
  %v1895 = vrot.slane %v1886, %v1894
  %v1896 = vlaneseq
  %v1897 = vshrl.u32 %v1896, 7
  %v1898 = vsub.s32 2, %v1897
  %v1899 = vrot.slane %v1886, %v1898
  %v1900 = vlaneseq
  %v1901 = vshrl.u32 %v1900, 7
  %v1902 = vsub.s32 3, %v1901
  %v1903 = vrot.slane %v1886, %v1902
  %v1908 = vmul.f32 %v1879, %v1891
  %v1909 = vmul.f32 %v1876, %v1895
  %v1910 = vmul.f32 %v1873, %v1899
  %v1911 = vmul.f32 %v1882, %v1903
  %v1912 = vmul.f32 %v1880, %v1891
  %v1913 = vmul.f32 %v1877, %v1895
  %v1914 = vmul.f32 %v1874, %v1899
  %v1915 = vmul.f32 %v1883, %v1903
  %v1916 = vmul.f32 %v1881, %v1891
  %v1917 = vmul.f32 %v1878, %v1895
  %v1918 = vmul.f32 %v1875, %v1899
  %v1919 = vmul.f32 %v1884, %v1903
  %1920 = vset.pattern.permute.xlu0 16
  %1921 = vperm.xlu0 %1920, %v209
  %v1922 = vpop.permute.xlu0 %1921
  %1924 = vset.pattern.permute.xlu0 16
  %1925 = vperm.xlu0 %1924, %v210
  %v1926 = vpop.permute.xlu0 %1925
  %1928 = vset.pattern.permute.xlu0 16
  %1929 = vperm.xlu0 %1928, %v211
  %v1930 = vpop.permute.xlu0 %1929
  %v1932 = vmul.f32 %v1908, %v1922
  %v1933 = vmul.f32 %v1909, %v1922
  %v1934 = vmul.f32 %v1910, %v1922
  %v1935 = vmul.f32 %v1911, %v1922
  %v1936 = vmul.f32 %v1912, %v1926
  %v1937 = vmul.f32 %v1913, %v1926
  %v1938 = vmul.f32 %v1914, %v1926
  %v1939 = vmul.f32 %v1915, %v1926
  %v1940 = vmul.f32 %v1916, %v1930
  %v1941 = vmul.f32 %v1917, %v1930
  %v1942 = vmul.f32 %v1918, %v1930
  %v1943 = vmul.f32 %v1919, %v1930
  %v1944 = vadd.f32 %v1728, %v1932
  %v1945 = vadd.f32 %v1729, %v1933
  %v1946 = vadd.f32 %v1730, %v1934
  %v1947 = vadd.f32 %v1731, %v1935
  %v1948 = vadd.f32 %v1732, %v1936
  %v1949 = vadd.f32 %v1733, %v1937
  %v1950 = vadd.f32 %v1734, %v1938
  %v1951 = vadd.f32 %v1735, %v1939
  %v1952 = vadd.f32 %v1736, %v1940
  %v1953 = vadd.f32 %v1737, %v1941
  %v1954 = vadd.f32 %v1738, %v1942
  %v1955 = vadd.f32 %v1739, %v1943
  %1956 = vrot.lane.b32.xlu0 %v110, 119
  %v1957 = vpop.permute.xlu0 %1956
  %1958 = vrot.lane.b32.xlu0 %v116, 119
  %v1959 = vpop.permute.xlu0 %1958
  %1960 = vrot.lane.b32.xlu0 %v122, 119
  %v1961 = vpop.permute.xlu0 %1960
  %1962 = vrot.lane.b32.xlu0 %v112, 119
  %v1963 = vpop.permute.xlu0 %1962
  %1964 = vrot.lane.b32.xlu0 %v118, 119
  %v1965 = vpop.permute.xlu0 %1964
  %1966 = vrot.lane.b32.xlu0 %v124, 119
  %v1967 = vpop.permute.xlu0 %1966
  %1968 = vrot.lane.b32.xlu0 %v193, 119
  %v1969 = vpop.permute.xlu0 %1968
  %1970 = vrot.lane.b32.xlu0 %v199, 119
  %v1971 = vpop.permute.xlu0 %1970
  %1972 = vrot.lane.b32.xlu0 %v205, 119
  %v1973 = vpop.permute.xlu0 %1972
  %1974 = vrot.lane.b32.xlu0 %v195, 119
  %v1975 = vpop.permute.xlu0 %1974
  %1976 = vrot.lane.b32.xlu0 %v201, 119
  %v1977 = vpop.permute.xlu0 %1976
  %1978 = vrot.lane.b32.xlu0 %v207, 119
  %v1979 = vpop.permute.xlu0 %1978
  %vm1980 = vcmp.lt.s32.totalorder %v237, 119
  %v1981 = vsel %vm1980, %v1969, %v1975
  %v1982 = vsel %vm1980, %v1971, %v1977
  %v1983 = vsel %vm1980, %v1973, %v1979
  %v1984 = vsel %vm1980, %v1963, %v1969
  %v1985 = vsel %vm1980, %v1965, %v1971
  %v1986 = vsel %vm1980, %v1967, %v1973
  %v1987 = vsel %vm1980, %v1957, %v1963
  %v1988 = vsel %vm1980, %v1959, %v1965
  %v1989 = vsel %vm1980, %v1961, %v1967
  %v1990 = vsel %vm1980, %v1975, %v1957
  %v1991 = vsel %vm1980, %v1977, %v1959
  %v1992 = vsel %vm1980, %v1979, %v1961
  %s1993 = scalar_lea.vmem %s5, 65
  %v1994 = vld [vmem:[%s1993] ss:$8 sm:$0xf]
  %v1996 = vlaneseq
  %v1997 = vshrl.u32 %v1996, 7
  %v1998 = vsub.s32 0, %v1997
  %v1999 = vrot.slane %v1994, %v1998
  %v2000 = vlaneseq
  %v2001 = vshrl.u32 %v2000, 7
  %v2002 = vsub.s32 1, %v2001
  %v2003 = vrot.slane %v1994, %v2002
  %v2004 = vlaneseq
  %v2005 = vshrl.u32 %v2004, 7
  %v2006 = vsub.s32 2, %v2005
  %v2007 = vrot.slane %v1994, %v2006
  %v2008 = vlaneseq
  %v2009 = vshrl.u32 %v2008, 7
  %v2010 = vsub.s32 3, %v2009
  %v2011 = vrot.slane %v1994, %v2010
  %v2016 = vmul.f32 %v1987, %v1999
  %v2017 = vmul.f32 %v1984, %v2003
  %v2018 = vmul.f32 %v1981, %v2007
  %v2019 = vmul.f32 %v1990, %v2011
  %v2020 = vmul.f32 %v1988, %v1999
  %v2021 = vmul.f32 %v1985, %v2003
  %v2022 = vmul.f32 %v1982, %v2007
  %v2023 = vmul.f32 %v1991, %v2011
  %v2024 = vmul.f32 %v1989, %v1999
  %v2025 = vmul.f32 %v1986, %v2003
  %v2026 = vmul.f32 %v1983, %v2007
  %v2027 = vmul.f32 %v1992, %v2011
  %2028 = vset.pattern.permute.xlu0 17
  %2029 = vperm.xlu0 %2028, %v209
  %v2030 = vpop.permute.xlu0 %2029
  %2032 = vset.pattern.permute.xlu0 17
  %2033 = vperm.xlu0 %2032, %v210
  %v2034 = vpop.permute.xlu0 %2033
  %2036 = vset.pattern.permute.xlu0 17
  %2037 = vperm.xlu0 %2036, %v211
  %v2038 = vpop.permute.xlu0 %2037
  %v2040 = vmul.f32 %v2016, %v2030
  %v2041 = vmul.f32 %v2017, %v2030
  %v2042 = vmul.f32 %v2018, %v2030
  %v2043 = vmul.f32 %v2019, %v2030
  %v2044 = vmul.f32 %v2020, %v2034
  %v2045 = vmul.f32 %v2021, %v2034
  %v2046 = vmul.f32 %v2022, %v2034
  %v2047 = vmul.f32 %v2023, %v2034
  %v2048 = vmul.f32 %v2024, %v2038
  %v2049 = vmul.f32 %v2025, %v2038
  %v2050 = vmul.f32 %v2026, %v2038
  %v2051 = vmul.f32 %v2027, %v2038
  %v2052 = vadd.f32 %v1836, %v2040
  %v2053 = vadd.f32 %v1837, %v2041
  %v2054 = vadd.f32 %v1838, %v2042
  %v2055 = vadd.f32 %v1839, %v2043
  %v2056 = vadd.f32 %v1840, %v2044
  %v2057 = vadd.f32 %v1841, %v2045
  %v2058 = vadd.f32 %v1842, %v2046
  %v2059 = vadd.f32 %v1843, %v2047
  %v2060 = vadd.f32 %v1844, %v2048
  %v2061 = vadd.f32 %v1845, %v2049
  %v2062 = vadd.f32 %v1846, %v2050
  %v2063 = vadd.f32 %v1847, %v2051
  %s2064 = scalar_lea.vmem %s5, 66
  %v2065 = vld [vmem:[%s2064] ss:$8 sm:$0xf]
  %v2067 = vlaneseq
  %v2068 = vshrl.u32 %v2067, 7
  %v2069 = vsub.s32 0, %v2068
  %v2070 = vrot.slane %v2065, %v2069
  %v2071 = vlaneseq
  %v2072 = vshrl.u32 %v2071, 7
  %v2073 = vsub.s32 1, %v2072
  %v2074 = vrot.slane %v2065, %v2073
  %v2075 = vlaneseq
  %v2076 = vshrl.u32 %v2075, 7
  %v2077 = vsub.s32 2, %v2076
  %v2078 = vrot.slane %v2065, %v2077
  %v2079 = vlaneseq
  %v2080 = vshrl.u32 %v2079, 7
  %v2081 = vsub.s32 3, %v2080
  %v2082 = vrot.slane %v2065, %v2081
  %v2087 = vmul.f32 %v245, %v2070
  %v2088 = vmul.f32 %v242, %v2074
  %v2089 = vmul.f32 %v239, %v2078
  %v2090 = vmul.f32 %v248, %v2082
  %v2091 = vmul.f32 %v246, %v2070
  %v2092 = vmul.f32 %v243, %v2074
  %v2093 = vmul.f32 %v240, %v2078
  %v2094 = vmul.f32 %v249, %v2082
  %v2095 = vmul.f32 %v247, %v2070
  %v2096 = vmul.f32 %v244, %v2074
  %v2097 = vmul.f32 %v241, %v2078
  %v2098 = vmul.f32 %v250, %v2082
  %2099 = vset.pattern.permute.xlu0 18
  %2100 = vperm.xlu0 %2099, %v209
  %v2101 = vpop.permute.xlu0 %2100
  %2103 = vset.pattern.permute.xlu0 18
  %2104 = vperm.xlu0 %2103, %v210
  %v2105 = vpop.permute.xlu0 %2104
  %2107 = vset.pattern.permute.xlu0 18
  %2108 = vperm.xlu0 %2107, %v211
  %v2109 = vpop.permute.xlu0 %2108
  %v2111 = vmul.f32 %v2087, %v2101
  %v2112 = vmul.f32 %v2088, %v2101
  %v2113 = vmul.f32 %v2089, %v2101
  %v2114 = vmul.f32 %v2090, %v2101
  %v2115 = vmul.f32 %v2091, %v2105
  %v2116 = vmul.f32 %v2092, %v2105
  %v2117 = vmul.f32 %v2093, %v2105
  %v2118 = vmul.f32 %v2094, %v2105
  %v2119 = vmul.f32 %v2095, %v2109
  %v2120 = vmul.f32 %v2096, %v2109
  %v2121 = vmul.f32 %v2097, %v2109
  %v2122 = vmul.f32 %v2098, %v2109
  %v2123 = vadd.f32 %v1944, %v2111
  %v2124 = vadd.f32 %v1945, %v2112
  %v2125 = vadd.f32 %v1946, %v2113
  %v2126 = vadd.f32 %v1947, %v2114
  %v2127 = vadd.f32 %v1948, %v2115
  %v2128 = vadd.f32 %v1949, %v2116
  %v2129 = vadd.f32 %v1950, %v2117
  %v2130 = vadd.f32 %v1951, %v2118
  %v2131 = vadd.f32 %v1952, %v2119
  %v2132 = vadd.f32 %v1953, %v2120
  %v2133 = vadd.f32 %v1954, %v2121
  %v2134 = vadd.f32 %v1955, %v2122
  %s2135 = scalar_lea.vmem %s5, 67
  %v2136 = vld [vmem:[%s2135] ss:$8 sm:$0xf]
  %v2138 = vlaneseq
  %v2139 = vshrl.u32 %v2138, 7
  %v2140 = vsub.s32 0, %v2139
  %v2141 = vrot.slane %v2136, %v2140
  %v2142 = vlaneseq
  %v2143 = vshrl.u32 %v2142, 7
  %v2144 = vsub.s32 1, %v2143
  %v2145 = vrot.slane %v2136, %v2144
  %v2146 = vlaneseq
  %v2147 = vshrl.u32 %v2146, 7
  %v2148 = vsub.s32 2, %v2147
  %v2149 = vrot.slane %v2136, %v2148
  %v2150 = vlaneseq
  %v2151 = vshrl.u32 %v2150, 7
  %v2152 = vsub.s32 3, %v2151
  %v2153 = vrot.slane %v2136, %v2152
  %v2158 = vmul.f32 %v343, %v2141
  %v2159 = vmul.f32 %v340, %v2145
  %v2160 = vmul.f32 %v337, %v2149
  %v2161 = vmul.f32 %v346, %v2153
  %v2162 = vmul.f32 %v344, %v2141
  %v2163 = vmul.f32 %v341, %v2145
  %v2164 = vmul.f32 %v338, %v2149
  %v2165 = vmul.f32 %v347, %v2153
  %v2166 = vmul.f32 %v345, %v2141
  %v2167 = vmul.f32 %v342, %v2145
  %v2168 = vmul.f32 %v339, %v2149
  %v2169 = vmul.f32 %v348, %v2153
  %2170 = vset.pattern.permute.xlu0 19
  %2171 = vperm.xlu0 %2170, %v209
  %v2172 = vpop.permute.xlu0 %2171
  %2174 = vset.pattern.permute.xlu0 19
  %2175 = vperm.xlu0 %2174, %v210
  %v2176 = vpop.permute.xlu0 %2175
  %2178 = vset.pattern.permute.xlu0 19
  %2179 = vperm.xlu0 %2178, %v211
  %v2180 = vpop.permute.xlu0 %2179
  %v2182 = vmul.f32 %v2158, %v2172
  %v2183 = vmul.f32 %v2159, %v2172
  %v2184 = vmul.f32 %v2160, %v2172
  %v2185 = vmul.f32 %v2161, %v2172
  %v2186 = vmul.f32 %v2162, %v2176
  %v2187 = vmul.f32 %v2163, %v2176
  %v2188 = vmul.f32 %v2164, %v2176
  %v2189 = vmul.f32 %v2165, %v2176
  %v2190 = vmul.f32 %v2166, %v2180
  %v2191 = vmul.f32 %v2167, %v2180
  %v2192 = vmul.f32 %v2168, %v2180
  %v2193 = vmul.f32 %v2169, %v2180
  %v2194 = vadd.f32 %v2052, %v2182
  %v2195 = vadd.f32 %v2053, %v2183
  %v2196 = vadd.f32 %v2054, %v2184
  %v2197 = vadd.f32 %v2055, %v2185
  %v2198 = vadd.f32 %v2056, %v2186
  %v2199 = vadd.f32 %v2057, %v2187
  %v2200 = vadd.f32 %v2058, %v2188
  %v2201 = vadd.f32 %v2059, %v2189
  %v2202 = vadd.f32 %v2060, %v2190
  %v2203 = vadd.f32 %v2061, %v2191
  %v2204 = vadd.f32 %v2062, %v2192
  %v2205 = vadd.f32 %v2063, %v2193
  %s2206 = scalar_lea.vmem %s5, 68
  %v2207 = vld [vmem:[%s2206] ss:$8 sm:$0xf]
  %v2209 = vlaneseq
  %v2210 = vshrl.u32 %v2209, 7
  %v2211 = vsub.s32 0, %v2210
  %v2212 = vrot.slane %v2207, %v2211
  %v2213 = vlaneseq
  %v2214 = vshrl.u32 %v2213, 7
  %v2215 = vsub.s32 1, %v2214
  %v2216 = vrot.slane %v2207, %v2215
  %v2217 = vlaneseq
  %v2218 = vshrl.u32 %v2217, 7
  %v2219 = vsub.s32 2, %v2218
  %v2220 = vrot.slane %v2207, %v2219
  %v2221 = vlaneseq
  %v2222 = vshrl.u32 %v2221, 7
  %v2223 = vsub.s32 3, %v2222
  %v2224 = vrot.slane %v2207, %v2223
  %v2229 = vmul.f32 %v439, %v2212
  %v2230 = vmul.f32 %v436, %v2216
  %v2231 = vmul.f32 %v433, %v2220
  %v2232 = vmul.f32 %v442, %v2224
  %v2233 = vmul.f32 %v440, %v2212
  %v2234 = vmul.f32 %v437, %v2216
  %v2235 = vmul.f32 %v434, %v2220
  %v2236 = vmul.f32 %v443, %v2224
  %v2237 = vmul.f32 %v441, %v2212
  %v2238 = vmul.f32 %v438, %v2216
  %v2239 = vmul.f32 %v435, %v2220
  %v2240 = vmul.f32 %v444, %v2224
  %2241 = vset.pattern.permute.xlu0 20
  %2242 = vperm.xlu0 %2241, %v209
  %v2243 = vpop.permute.xlu0 %2242
  %2245 = vset.pattern.permute.xlu0 20
  %2246 = vperm.xlu0 %2245, %v210
  %v2247 = vpop.permute.xlu0 %2246
  %2249 = vset.pattern.permute.xlu0 20
  %2250 = vperm.xlu0 %2249, %v211
  %v2251 = vpop.permute.xlu0 %2250
  %v2253 = vmul.f32 %v2229, %v2243
  %v2254 = vmul.f32 %v2230, %v2243
  %v2255 = vmul.f32 %v2231, %v2243
  %v2256 = vmul.f32 %v2232, %v2243
  %v2257 = vmul.f32 %v2233, %v2247
  %v2258 = vmul.f32 %v2234, %v2247
  %v2259 = vmul.f32 %v2235, %v2247
  %v2260 = vmul.f32 %v2236, %v2247
  %v2261 = vmul.f32 %v2237, %v2251
  %v2262 = vmul.f32 %v2238, %v2251
  %v2263 = vmul.f32 %v2239, %v2251
  %v2264 = vmul.f32 %v2240, %v2251
  %v2265 = vadd.f32 %v2123, %v2253
  %v2266 = vadd.f32 %v2124, %v2254
  %v2267 = vadd.f32 %v2125, %v2255
  %v2268 = vadd.f32 %v2126, %v2256
  %v2269 = vadd.f32 %v2127, %v2257
  %v2270 = vadd.f32 %v2128, %v2258
  %v2271 = vadd.f32 %v2129, %v2259
  %v2272 = vadd.f32 %v2130, %v2260
  %v2273 = vadd.f32 %v2131, %v2261
  %v2274 = vadd.f32 %v2132, %v2262
  %v2275 = vadd.f32 %v2133, %v2263
  %v2276 = vadd.f32 %v2134, %v2264
  %s2277 = scalar_lea.vmem %s5, 69
  %v2278 = vld [vmem:[%s2277] ss:$8 sm:$0xf]
  %v2280 = vlaneseq
  %v2281 = vshrl.u32 %v2280, 7
  %v2282 = vsub.s32 0, %v2281
  %v2283 = vrot.slane %v2278, %v2282
  %v2284 = vlaneseq
  %v2285 = vshrl.u32 %v2284, 7
  %v2286 = vsub.s32 1, %v2285
  %v2287 = vrot.slane %v2278, %v2286
  %v2288 = vlaneseq
  %v2289 = vshrl.u32 %v2288, 7
  %v2290 = vsub.s32 2, %v2289
  %v2291 = vrot.slane %v2278, %v2290
  %v2292 = vlaneseq
  %v2293 = vshrl.u32 %v2292, 7
  %v2294 = vsub.s32 3, %v2293
  %v2295 = vrot.slane %v2278, %v2294
  %v2300 = vmul.f32 %v547, %v2283
  %v2301 = vmul.f32 %v544, %v2287
  %v2302 = vmul.f32 %v541, %v2291
  %v2303 = vmul.f32 %v550, %v2295
  %v2304 = vmul.f32 %v548, %v2283
  %v2305 = vmul.f32 %v545, %v2287
  %v2306 = vmul.f32 %v542, %v2291
  %v2307 = vmul.f32 %v551, %v2295
  %v2308 = vmul.f32 %v549, %v2283
  %v2309 = vmul.f32 %v546, %v2287
  %v2310 = vmul.f32 %v543, %v2291
  %v2311 = vmul.f32 %v552, %v2295
  %2312 = vset.pattern.permute.xlu0 21
  %2313 = vperm.xlu0 %2312, %v209
  %v2314 = vpop.permute.xlu0 %2313
  %2316 = vset.pattern.permute.xlu0 21
  %2317 = vperm.xlu0 %2316, %v210
  %v2318 = vpop.permute.xlu0 %2317
  %2320 = vset.pattern.permute.xlu0 21
  %2321 = vperm.xlu0 %2320, %v211
  %v2322 = vpop.permute.xlu0 %2321
  %v2324 = vmul.f32 %v2300, %v2314
  %v2325 = vmul.f32 %v2301, %v2314
  %v2326 = vmul.f32 %v2302, %v2314
  %v2327 = vmul.f32 %v2303, %v2314
  %v2328 = vmul.f32 %v2304, %v2318
  %v2329 = vmul.f32 %v2305, %v2318
  %v2330 = vmul.f32 %v2306, %v2318
  %v2331 = vmul.f32 %v2307, %v2318
  %v2332 = vmul.f32 %v2308, %v2322
  %v2333 = vmul.f32 %v2309, %v2322
  %v2334 = vmul.f32 %v2310, %v2322
  %v2335 = vmul.f32 %v2311, %v2322
  %v2336 = vadd.f32 %v2194, %v2324
  %v2337 = vadd.f32 %v2195, %v2325
  %v2338 = vadd.f32 %v2196, %v2326
  %v2339 = vadd.f32 %v2197, %v2327
  %v2340 = vadd.f32 %v2198, %v2328
  %v2341 = vadd.f32 %v2199, %v2329
  %v2342 = vadd.f32 %v2200, %v2330
  %v2343 = vadd.f32 %v2201, %v2331
  %v2344 = vadd.f32 %v2202, %v2332
  %v2345 = vadd.f32 %v2203, %v2333
  %v2346 = vadd.f32 %v2204, %v2334
  %v2347 = vadd.f32 %v2205, %v2335
  %s2348 = scalar_lea.vmem %s5, 70
  %v2349 = vld [vmem:[%s2348] ss:$8 sm:$0xf]
  %v2351 = vlaneseq
  %v2352 = vshrl.u32 %v2351, 7
  %v2353 = vsub.s32 0, %v2352
  %v2354 = vrot.slane %v2349, %v2353
  %v2355 = vlaneseq
  %v2356 = vshrl.u32 %v2355, 7
  %v2357 = vsub.s32 1, %v2356
  %v2358 = vrot.slane %v2349, %v2357
  %v2359 = vlaneseq
  %v2360 = vshrl.u32 %v2359, 7
  %v2361 = vsub.s32 2, %v2360
  %v2362 = vrot.slane %v2349, %v2361
  %v2363 = vlaneseq
  %v2364 = vshrl.u32 %v2363, 7
  %v2365 = vsub.s32 3, %v2364
  %v2366 = vrot.slane %v2349, %v2365
  %v2371 = vmul.f32 %v655, %v2354
  %v2372 = vmul.f32 %v652, %v2358
  %v2373 = vmul.f32 %v649, %v2362
  %v2374 = vmul.f32 %v658, %v2366
  %v2375 = vmul.f32 %v656, %v2354
  %v2376 = vmul.f32 %v653, %v2358
  %v2377 = vmul.f32 %v650, %v2362
  %v2378 = vmul.f32 %v659, %v2366
  %v2379 = vmul.f32 %v657, %v2354
  %v2380 = vmul.f32 %v654, %v2358
  %v2381 = vmul.f32 %v651, %v2362
  %v2382 = vmul.f32 %v660, %v2366
  %2383 = vset.pattern.permute.xlu0 22
  %2384 = vperm.xlu0 %2383, %v209
  %v2385 = vpop.permute.xlu0 %2384
  %2387 = vset.pattern.permute.xlu0 22
  %2388 = vperm.xlu0 %2387, %v210
  %v2389 = vpop.permute.xlu0 %2388
  %2391 = vset.pattern.permute.xlu0 22
  %2392 = vperm.xlu0 %2391, %v211
  %v2393 = vpop.permute.xlu0 %2392
  %v2395 = vmul.f32 %v2371, %v2385
  %v2396 = vmul.f32 %v2372, %v2385
  %v2397 = vmul.f32 %v2373, %v2385
  %v2398 = vmul.f32 %v2374, %v2385
  %v2399 = vmul.f32 %v2375, %v2389
  %v2400 = vmul.f32 %v2376, %v2389
  %v2401 = vmul.f32 %v2377, %v2389
  %v2402 = vmul.f32 %v2378, %v2389
  %v2403 = vmul.f32 %v2379, %v2393
  %v2404 = vmul.f32 %v2380, %v2393
  %v2405 = vmul.f32 %v2381, %v2393
  %v2406 = vmul.f32 %v2382, %v2393
  %v2407 = vadd.f32 %v2265, %v2395
  %v2408 = vadd.f32 %v2266, %v2396
  %v2409 = vadd.f32 %v2267, %v2397
  %v2410 = vadd.f32 %v2268, %v2398
  %v2411 = vadd.f32 %v2269, %v2399
  %v2412 = vadd.f32 %v2270, %v2400
  %v2413 = vadd.f32 %v2271, %v2401
  %v2414 = vadd.f32 %v2272, %v2402
  %v2415 = vadd.f32 %v2273, %v2403
  %v2416 = vadd.f32 %v2274, %v2404
  %v2417 = vadd.f32 %v2275, %v2405
  %v2418 = vadd.f32 %v2276, %v2406
  %s2419 = scalar_lea.vmem %s5, 71
  %v2420 = vld [vmem:[%s2419] ss:$8 sm:$0xf]
  %v2422 = vlaneseq
  %v2423 = vshrl.u32 %v2422, 7
  %v2424 = vsub.s32 0, %v2423
  %v2425 = vrot.slane %v2420, %v2424
  %v2426 = vlaneseq
  %v2427 = vshrl.u32 %v2426, 7
  %v2428 = vsub.s32 1, %v2427
  %v2429 = vrot.slane %v2420, %v2428
  %v2430 = vlaneseq
  %v2431 = vshrl.u32 %v2430, 7
  %v2432 = vsub.s32 2, %v2431
  %v2433 = vrot.slane %v2420, %v2432
  %v2434 = vlaneseq
  %v2435 = vshrl.u32 %v2434, 7
  %v2436 = vsub.s32 3, %v2435
  %v2437 = vrot.slane %v2420, %v2436
  %v2442 = vmul.f32 %v763, %v2425
  %v2443 = vmul.f32 %v760, %v2429
  %v2444 = vmul.f32 %v757, %v2433
  %v2445 = vmul.f32 %v766, %v2437
  %v2446 = vmul.f32 %v764, %v2425
  %v2447 = vmul.f32 %v761, %v2429
  %v2448 = vmul.f32 %v758, %v2433
  %v2449 = vmul.f32 %v767, %v2437
  %v2450 = vmul.f32 %v765, %v2425
  %v2451 = vmul.f32 %v762, %v2429
  %v2452 = vmul.f32 %v759, %v2433
  %v2453 = vmul.f32 %v768, %v2437
  %2454 = vset.pattern.permute.xlu0 23
  %2455 = vperm.xlu0 %2454, %v209
  %v2456 = vpop.permute.xlu0 %2455
  %2458 = vset.pattern.permute.xlu0 23
  %2459 = vperm.xlu0 %2458, %v210
  %v2460 = vpop.permute.xlu0 %2459
  %2462 = vset.pattern.permute.xlu0 23
  %2463 = vperm.xlu0 %2462, %v211
  %v2464 = vpop.permute.xlu0 %2463
  %v2466 = vmul.f32 %v2442, %v2456
  %v2467 = vmul.f32 %v2443, %v2456
  %v2468 = vmul.f32 %v2444, %v2456
  %v2469 = vmul.f32 %v2445, %v2456
  %v2470 = vmul.f32 %v2446, %v2460
  %v2471 = vmul.f32 %v2447, %v2460
  %v2472 = vmul.f32 %v2448, %v2460
  %v2473 = vmul.f32 %v2449, %v2460
  %v2474 = vmul.f32 %v2450, %v2464
  %v2475 = vmul.f32 %v2451, %v2464
  %v2476 = vmul.f32 %v2452, %v2464
  %v2477 = vmul.f32 %v2453, %v2464
  %v2478 = vadd.f32 %v2336, %v2466
  %v2479 = vadd.f32 %v2337, %v2467
  %v2480 = vadd.f32 %v2338, %v2468
  %v2481 = vadd.f32 %v2339, %v2469
  %v2482 = vadd.f32 %v2340, %v2470
  %v2483 = vadd.f32 %v2341, %v2471
  %v2484 = vadd.f32 %v2342, %v2472
  %v2485 = vadd.f32 %v2343, %v2473
  %v2486 = vadd.f32 %v2344, %v2474
  %v2487 = vadd.f32 %v2345, %v2475
  %v2488 = vadd.f32 %v2346, %v2476
  %v2489 = vadd.f32 %v2347, %v2477
  %s2490 = scalar_lea.vmem %s5, 96
  %v2491 = vld [vmem:[%s2490] ss:$8 sm:$0xf]
  %v2493 = vlaneseq
  %v2494 = vshrl.u32 %v2493, 7
  %v2495 = vsub.s32 0, %v2494
  %v2496 = vrot.slane %v2491, %v2495
  %v2497 = vlaneseq
  %v2498 = vshrl.u32 %v2497, 7
  %v2499 = vsub.s32 1, %v2498
  %v2500 = vrot.slane %v2491, %v2499
  %v2501 = vlaneseq
  %v2502 = vshrl.u32 %v2501, 7
  %v2503 = vsub.s32 2, %v2502
  %v2504 = vrot.slane %v2491, %v2503
  %v2505 = vlaneseq
  %v2506 = vshrl.u32 %v2505, 7
  %v2507 = vsub.s32 3, %v2506
  %v2508 = vrot.slane %v2491, %v2507
  %v2513 = vmul.f32 %v871, %v2496
  %v2514 = vmul.f32 %v868, %v2500
  %v2515 = vmul.f32 %v865, %v2504
  %v2516 = vmul.f32 %v874, %v2508
  %v2517 = vmul.f32 %v872, %v2496
  %v2518 = vmul.f32 %v869, %v2500
  %v2519 = vmul.f32 %v866, %v2504
  %v2520 = vmul.f32 %v875, %v2508
  %v2521 = vmul.f32 %v873, %v2496
  %v2522 = vmul.f32 %v870, %v2500
  %v2523 = vmul.f32 %v867, %v2504
  %v2524 = vmul.f32 %v876, %v2508
  %2525 = vset.pattern.permute.xlu0 24
  %2526 = vperm.xlu0 %2525, %v209
  %v2527 = vpop.permute.xlu0 %2526
  %2529 = vset.pattern.permute.xlu0 24
  %2530 = vperm.xlu0 %2529, %v210
  %v2531 = vpop.permute.xlu0 %2530
  %2533 = vset.pattern.permute.xlu0 24
  %2534 = vperm.xlu0 %2533, %v211
  %v2535 = vpop.permute.xlu0 %2534
  %v2537 = vmul.f32 %v2513, %v2527
  %v2538 = vmul.f32 %v2514, %v2527
  %v2539 = vmul.f32 %v2515, %v2527
  %v2540 = vmul.f32 %v2516, %v2527
  %v2541 = vmul.f32 %v2517, %v2531
  %v2542 = vmul.f32 %v2518, %v2531
  %v2543 = vmul.f32 %v2519, %v2531
  %v2544 = vmul.f32 %v2520, %v2531
  %v2545 = vmul.f32 %v2521, %v2535
  %v2546 = vmul.f32 %v2522, %v2535
  %v2547 = vmul.f32 %v2523, %v2535
  %v2548 = vmul.f32 %v2524, %v2535
  %v2549 = vadd.f32 %v2407, %v2537
  %v2550 = vadd.f32 %v2408, %v2538
  %v2551 = vadd.f32 %v2409, %v2539
  %v2552 = vadd.f32 %v2410, %v2540
  %v2553 = vadd.f32 %v2411, %v2541
  %v2554 = vadd.f32 %v2412, %v2542
  %v2555 = vadd.f32 %v2413, %v2543
  %v2556 = vadd.f32 %v2414, %v2544
  %v2557 = vadd.f32 %v2415, %v2545
  %v2558 = vadd.f32 %v2416, %v2546
  %v2559 = vadd.f32 %v2417, %v2547
  %v2560 = vadd.f32 %v2418, %v2548
  %s2561 = scalar_lea.vmem %s5, 97
  %v2562 = vld [vmem:[%s2561] ss:$8 sm:$0xf]
  %v2564 = vlaneseq
  %v2565 = vshrl.u32 %v2564, 7
  %v2566 = vsub.s32 0, %v2565
  %v2567 = vrot.slane %v2562, %v2566
  %v2568 = vlaneseq
  %v2569 = vshrl.u32 %v2568, 7
  %v2570 = vsub.s32 1, %v2569
  %v2571 = vrot.slane %v2562, %v2570
  %v2572 = vlaneseq
  %v2573 = vshrl.u32 %v2572, 7
  %v2574 = vsub.s32 2, %v2573
  %v2575 = vrot.slane %v2562, %v2574
  %v2576 = vlaneseq
  %v2577 = vshrl.u32 %v2576, 7
  %v2578 = vsub.s32 3, %v2577
  %v2579 = vrot.slane %v2562, %v2578
  %v2584 = vmul.f32 %v979, %v2567
  %v2585 = vmul.f32 %v976, %v2571
  %v2586 = vmul.f32 %v973, %v2575
  %v2587 = vmul.f32 %v982, %v2579
  %v2588 = vmul.f32 %v980, %v2567
  %v2589 = vmul.f32 %v977, %v2571
  %v2590 = vmul.f32 %v974, %v2575
  %v2591 = vmul.f32 %v983, %v2579
  %v2592 = vmul.f32 %v981, %v2567
  %v2593 = vmul.f32 %v978, %v2571
  %v2594 = vmul.f32 %v975, %v2575
  %v2595 = vmul.f32 %v984, %v2579
  %2596 = vset.pattern.permute.xlu0 25
  %2597 = vperm.xlu0 %2596, %v209
  %v2598 = vpop.permute.xlu0 %2597
  %2600 = vset.pattern.permute.xlu0 25
  %2601 = vperm.xlu0 %2600, %v210
  %v2602 = vpop.permute.xlu0 %2601
  %2604 = vset.pattern.permute.xlu0 25
  %2605 = vperm.xlu0 %2604, %v211
  %v2606 = vpop.permute.xlu0 %2605
  %v2608 = vmul.f32 %v2584, %v2598
  %v2609 = vmul.f32 %v2585, %v2598
  %v2610 = vmul.f32 %v2586, %v2598
  %v2611 = vmul.f32 %v2587, %v2598
  %v2612 = vmul.f32 %v2588, %v2602
  %v2613 = vmul.f32 %v2589, %v2602
  %v2614 = vmul.f32 %v2590, %v2602
  %v2615 = vmul.f32 %v2591, %v2602
  %v2616 = vmul.f32 %v2592, %v2606
  %v2617 = vmul.f32 %v2593, %v2606
  %v2618 = vmul.f32 %v2594, %v2606
  %v2619 = vmul.f32 %v2595, %v2606
  %v2620 = vadd.f32 %v2478, %v2608
  %v2621 = vadd.f32 %v2479, %v2609
  %v2622 = vadd.f32 %v2480, %v2610
  %v2623 = vadd.f32 %v2481, %v2611
  %v2624 = vadd.f32 %v2482, %v2612
  %v2625 = vadd.f32 %v2483, %v2613
  %v2626 = vadd.f32 %v2484, %v2614
  %v2627 = vadd.f32 %v2485, %v2615
  %v2628 = vadd.f32 %v2486, %v2616
  %v2629 = vadd.f32 %v2487, %v2617
  %v2630 = vadd.f32 %v2488, %v2618
  %v2631 = vadd.f32 %v2489, %v2619
  %s2632 = scalar_lea.vmem %s5, 98
  %v2633 = vld [vmem:[%s2632] ss:$8 sm:$0xf]
  %v2635 = vlaneseq
  %v2636 = vshrl.u32 %v2635, 7
  %v2637 = vsub.s32 0, %v2636
  %v2638 = vrot.slane %v2633, %v2637
  %v2639 = vlaneseq
  %v2640 = vshrl.u32 %v2639, 7
  %v2641 = vsub.s32 1, %v2640
  %v2642 = vrot.slane %v2633, %v2641
  %v2643 = vlaneseq
  %v2644 = vshrl.u32 %v2643, 7
  %v2645 = vsub.s32 2, %v2644
  %v2646 = vrot.slane %v2633, %v2645
  %v2647 = vlaneseq
  %v2648 = vshrl.u32 %v2647, 7
  %v2649 = vsub.s32 3, %v2648
  %v2650 = vrot.slane %v2633, %v2649
  %v2655 = vmul.f32 %v1087, %v2638
  %v2656 = vmul.f32 %v1084, %v2642
  %v2657 = vmul.f32 %v1081, %v2646
  %v2658 = vmul.f32 %v1090, %v2650
  %v2659 = vmul.f32 %v1088, %v2638
  %v2660 = vmul.f32 %v1085, %v2642
  %v2661 = vmul.f32 %v1082, %v2646
  %v2662 = vmul.f32 %v1091, %v2650
  %v2663 = vmul.f32 %v1089, %v2638
  %v2664 = vmul.f32 %v1086, %v2642
  %v2665 = vmul.f32 %v1083, %v2646
  %v2666 = vmul.f32 %v1092, %v2650
  %2667 = vset.pattern.permute.xlu0 26
  %2668 = vperm.xlu0 %2667, %v209
  %v2669 = vpop.permute.xlu0 %2668
  %2671 = vset.pattern.permute.xlu0 26
  %2672 = vperm.xlu0 %2671, %v210
  %v2673 = vpop.permute.xlu0 %2672
  %2675 = vset.pattern.permute.xlu0 26
  %2676 = vperm.xlu0 %2675, %v211
  %v2677 = vpop.permute.xlu0 %2676
  %v2679 = vmul.f32 %v2655, %v2669
  %v2680 = vmul.f32 %v2656, %v2669
  %v2681 = vmul.f32 %v2657, %v2669
  %v2682 = vmul.f32 %v2658, %v2669
  %v2683 = vmul.f32 %v2659, %v2673
  %v2684 = vmul.f32 %v2660, %v2673
  %v2685 = vmul.f32 %v2661, %v2673
  %v2686 = vmul.f32 %v2662, %v2673
  %v2687 = vmul.f32 %v2663, %v2677
  %v2688 = vmul.f32 %v2664, %v2677
  %v2689 = vmul.f32 %v2665, %v2677
  %v2690 = vmul.f32 %v2666, %v2677
  %v2691 = vadd.f32 %v2549, %v2679
  %v2692 = vadd.f32 %v2550, %v2680
  %v2693 = vadd.f32 %v2551, %v2681
  %v2694 = vadd.f32 %v2552, %v2682
  %v2695 = vadd.f32 %v2553, %v2683
  %v2696 = vadd.f32 %v2554, %v2684
  %v2697 = vadd.f32 %v2555, %v2685
  %v2698 = vadd.f32 %v2556, %v2686
  %v2699 = vadd.f32 %v2557, %v2687
  %v2700 = vadd.f32 %v2558, %v2688
  %v2701 = vadd.f32 %v2559, %v2689
  %v2702 = vadd.f32 %v2560, %v2690
  %v2703 = vadd.f32 %v2691, %v2620
  %v2704 = vadd.f32 %v2692, %v2621
  %v2705 = vadd.f32 %v2693, %v2622
  %v2706 = vadd.f32 %v2694, %v2623
  %v2707 = vadd.f32 %v2695, %v2624
  %v2708 = vadd.f32 %v2696, %v2625
  %v2709 = vadd.f32 %v2697, %v2626
  %v2710 = vadd.f32 %v2698, %v2627
  %v2711 = vadd.f32 %v2699, %v2628
  %v2712 = vadd.f32 %v2700, %v2629
  %v2713 = vadd.f32 %v2701, %v2630
  %v2714 = vadd.f32 %v2702, %v2631
  %v2715 = vld [vmem:[%s3] sm:$0xff]
  %v2716 = vmul.f32 %v2703, %v2703
  %v2717 = vmul.f32 %v2704, %v2704
  %v2718 = vadd.f32 %v2716, %v2717
  %2719 = vadd.xlane.f32.xlu0 %v2718
  %v2720 = vpop.xlane.xlu0 %2719
  %v2721 = vmax.f32 %v2720, 1e-24
  %v2722 = vrsqrt.pop %v2721
  %v2723 = vmul.f32 %v2722, 0.5
  %v2724 = vmul.f32 %v2721, %v2722
  %v2725 = vmul.f32 %v2724, %v2722
  %v2726 = vsub.f32 3.0, %v2725
  %v2727 = vmul.f32 %v2723, %v2726
  %v2728 = vmul.f32 %v2703, %v2727
  %v2729 = vmul.f32 %v2704, %v2727
  %v2730 = vld [vmem:[%s4] sm:$0xff]
  %2732 = vset.pattern.permute.xlu0 0
  %2733 = vperm.xlu0 %2732, %v2730
  %v2734 = vpop.permute.xlu0 %2733
  %v2736 = vmul.f32 %v2728, %v2734
  %v2737 = vmul.f32 %v2729, %v2734
  %v2738 = vmul.f32 %v2707, %v2707
  %v2739 = vmul.f32 %v2708, %v2708
  %v2740 = vadd.f32 %v2738, %v2739
  %2741 = vadd.xlane.f32.xlu0 %v2740
  %v2742 = vpop.xlane.xlu0 %2741
  %v2743 = vmax.f32 %v2742, 1e-24
  %v2744 = vrsqrt.pop %v2743
  %v2745 = vmul.f32 %v2744, 0.5
  %v2746 = vmul.f32 %v2743, %v2744
  %v2747 = vmul.f32 %v2746, %v2744
  %v2748 = vsub.f32 3.0, %v2747
  %v2749 = vmul.f32 %v2745, %v2748
  %v2750 = vmul.f32 %v2707, %v2749
  %v2751 = vmul.f32 %v2708, %v2749
  %v2752 = vld [vmem:[%s6] sm:$0xff]
  %2753 = vmatprep.subr.mxu0 %v2751
  %2754 = vmatpush1.xpose.msra.mxu0 %v2750
  %2755 = vmatprep.subr.mxu0 0.0
  %2756 = vmatpush1.xpose.msra.mxu0 0.0
  %2757 = vmatprep.subr.mxu0 0.0
  %2758 = vmatpush1.xpose.msra.mxu0 0.0
  %2759 = vmatprep.subr.mxu0 0.0
  %2760 = vmatpush1.xpose.msra.mxu0 0.0
  %2761 = vmatprep.subr.mxu0 0.0
  %2762 = vmatpush1.xpose.msra.mxu0 0.0
  %2763 = vmatprep.subr.mxu0 0.0
  %2764 = vmatpush1.xpose.msra.mxu0 0.0
  %2765 = vmatprep.subr.mxu0 0.0
  %2766 = vmatpush1.xpose.msra.mxu0 0.0
  %2767 = vmatprep.subr.mxu0 0.0
  %2768 = vmatpush1.xpose.msra.mxu0 0.0
  %2769 = vmatprep.subr.mxu0 0.0
  %2770 = vmatpush1.xpose.msra.mxu0 0.0
  %2771 = vmatprep.subr.mxu0 0.0
  %2772 = vmatpush1.xpose.msra.mxu0 0.0
  %2773 = vmatprep.subr.mxu0 0.0
  %2774 = vmatpush1.xpose.msra.mxu0 0.0
  %2775 = vmatprep.subr.mxu0 0.0
  %2776 = vmatpush1.xpose.msra.mxu0 0.0
  %2777 = vmatprep.subr.mxu0 0.0
  %2778 = vmatpush1.xpose.msra.mxu0 0.0
  %2779 = vmatprep.subr.mxu0 0.0
  %2780 = vmatpush1.xpose.msra.mxu0 0.0
  %2781 = vmatprep.subr.mxu0 0.0
  %2782 = vmatpush1.xpose.msra.mxu0 0.0
  %2783 = vmatprep.subr.mxu0 0.0
  %2784 = vmatpush1.xpose.msra.mxu0 0.0
  %2785 = vmatprep.subr.mxu0 0.0
  %2786 = vmatpush1.xpose.msra.mxu0 0.0
  %2787 = vmatprep.subr.mxu0 0.0
  %2788 = vmatpush1.xpose.msra.mxu0 0.0
  %2789 = vmatprep.subr.mxu0 0.0
  %2790 = vmatpush1.xpose.msra.mxu0 0.0
  %2791 = vmatprep.subr.mxu0 0.0
  %2792 = vmatpush1.xpose.msra.mxu0 0.0
  %2793 = vmatprep.subr.mxu0 0.0
  %2794 = vmatpush1.xpose.msra.mxu0 0.0
  %2795 = vmatprep.subr.mxu0 0.0
  %2796 = vmatpush1.xpose.msra.mxu0 0.0
  %2797 = vmatprep.subr.mxu0 0.0
  %2798 = vmatpush1.xpose.msra.mxu0 0.0
  %2799 = vmatprep.subr.mxu0 0.0
  %2800 = vmatpush1.xpose.msra.mxu0 0.0
  %2801 = vmatprep.subr.mxu0 0.0
  %2802 = vmatpush1.xpose.msra.mxu0 0.0
  %2803 = vmatprep.subr.mxu0 0.0
  %2804 = vmatpush1.xpose.msra.mxu0 0.0
  %2805 = vmatprep.subr.mxu0 0.0
  %2806 = vmatpush1.xpose.msra.mxu0 0.0
  %2807 = vmatprep.subr.mxu0 0.0
  %2808 = vmatpush1.xpose.msra.mxu0 0.0
  %2809 = vmatprep.subr.mxu0 0.0
  %2810 = vmatpush1.xpose.msra.mxu0 0.0
  %2811 = vmatprep.subr.mxu0 0.0
  %2812 = vmatpush1.xpose.msra.mxu0 0.0
  %2813 = vmatprep.subr.mxu0 0.0
  %2814 = vmatpush1.xpose.msra.mxu0 0.0
  %2815 = vmatprep.subr.mxu0 0.0
  %2816 = vmatpush1.xpose.msra.mxu0 0.0
  %2817 = vmatprep.mubr.f32.mxu0 %v2737
  %2818 = vmatmul.mubr.f32.gmra.mrb[0].mxu0 %v2736
  %v2819 = vpop.f32.mrb[0].mxu0
  %v2820 = vadd.f32 %v2752, %v2819
  %v2821 = vpop.f32.mrb[0].mxu0
  %2822 = vdwg.mxu0
  %v2823 = vsel %vm33, %v2820, -inf
  %2824 = vmax.xlane.f32.xlu0 %v2823
  %v2825 = vpop.xlane.xlu0 %2824
  %v2826 = vsub.f32 %v2820, %v2825
  %v2827 = vmul.f32 %v2826, 1.442695
  %v2828 = vpow.pop %v2827
  %v2829 = vsel %vm33, %v2828, 0.0
  %2830 = vadd.xlane.f32.xlu0 %v2829
  %v2831 = vpop.xlane.xlu0 %2830
  %v2832 = vrcp.pop %v2831
  %v2833 = vmul.f32 %v2831, %v2832
  %v2834 = vsub.f32 2.0, %v2833
  %v2835 = vmul.f32 %v2832, %v2834
  %v2836 = vmul.f32 %v2828, %v2835
  %v2838 = vsel %vm33, %v2715, 0
  %2840 = vmatprep.subr.mxu0 0.0
  %2841 = vmatpush1.msra.mxu0 %v2836
  %2842 = vmatprep.subr.mxu0 0.0
  %2843 = vmatpush1.msra.mxu0 0.0
  %2844 = vmatprep.subr.mxu0 0.0
  %2845 = vmatpush1.msra.mxu0 0.0
  %2846 = vmatprep.subr.mxu0 0.0
  %2847 = vmatpush1.msra.mxu0 0.0
  %2848 = vmatprep.subr.mxu0 0.0
  %2849 = vmatpush1.msra.mxu0 0.0
  %2850 = vmatprep.subr.mxu0 0.0
  %2851 = vmatpush1.msra.mxu0 0.0
  %2852 = vmatprep.subr.mxu0 0.0
  %2853 = vmatpush1.msra.mxu0 0.0
  %2854 = vmatprep.subr.mxu0 0.0
  %2855 = vmatpush1.msra.mxu0 0.0
  %2856 = vmatprep.subr.mxu0 0.0
  %2857 = vmatpush1.msra.mxu0 0.0
  %2858 = vmatprep.subr.mxu0 0.0
  %2859 = vmatpush1.msra.mxu0 0.0
  %2860 = vmatprep.subr.mxu0 0.0
  %2861 = vmatpush1.msra.mxu0 0.0
  %2862 = vmatprep.subr.mxu0 0.0
  %2863 = vmatpush1.msra.mxu0 0.0
  %2864 = vmatprep.subr.mxu0 0.0
  %2865 = vmatpush1.msra.mxu0 0.0
  %2866 = vmatprep.subr.mxu0 0.0
  %2867 = vmatpush1.msra.mxu0 0.0
  %2868 = vmatprep.subr.mxu0 0.0
  %2869 = vmatpush1.msra.mxu0 0.0
  %2870 = vmatprep.subr.mxu0 0.0
  %2871 = vmatpush1.msra.mxu0 0.0
  %2872 = vmatprep.subr.mxu0 0.0
  %2873 = vmatpush1.msra.mxu0 0.0
  %2874 = vmatprep.subr.mxu0 0.0
  %2875 = vmatpush1.msra.mxu0 0.0
  %2876 = vmatprep.subr.mxu0 0.0
  %2877 = vmatpush1.msra.mxu0 0.0
  %2878 = vmatprep.subr.mxu0 0.0
  %2879 = vmatpush1.msra.mxu0 0.0
  %2880 = vmatprep.subr.mxu0 0.0
  %2881 = vmatpush1.msra.mxu0 0.0
  %2882 = vmatprep.subr.mxu0 0.0
  %2883 = vmatpush1.msra.mxu0 0.0
  %2884 = vmatprep.subr.mxu0 0.0
  %2885 = vmatpush1.msra.mxu0 0.0
  %2886 = vmatprep.subr.mxu0 0.0
  %2887 = vmatpush1.msra.mxu0 0.0
  %2888 = vmatprep.subr.mxu0 0.0
  %2889 = vmatpush1.msra.mxu0 0.0
  %2890 = vmatprep.subr.mxu0 0.0
  %2891 = vmatpush1.msra.mxu0 0.0
  %2892 = vmatprep.subr.mxu0 0.0
  %2893 = vmatpush1.msra.mxu0 0.0
  %2894 = vmatprep.subr.mxu0 0.0
  %2895 = vmatpush1.msra.mxu0 0.0
  %2896 = vmatprep.subr.mxu0 0.0
  %2897 = vmatpush1.msra.mxu0 0.0
  %2898 = vmatprep.subr.mxu0 0.0
  %2899 = vmatpush1.msra.mxu0 0.0
  %2900 = vmatprep.subr.mxu0 0.0
  %2901 = vmatpush1.msra.mxu0 0.0
  %2902 = vmatprep.subr.mxu0 0.0
  %2903 = vmatpush1.msra.mxu0 0.0
  %2904 = vmatprep.mubr.f32.mxu0 0.0
  %2905 = vmatmul.mubr.f32.gmra.mrb[0].mxu0 %v2838
  %v2906 = vpop.f32.mrb[0].mxu0
  %v2907 = vadd.f32 0.0, %v2906
  %v2908 = vpop.f32.mrb[0].mxu0
  %2909 = vdwg.mxu0
  %v2911 = vsel %vm33, %v2907, 0
  %2913 = vmatprep.subr.mxu0 %v2712
  %2914 = vmatpush1.msra.mxu0 %v2711
  %2915 = vmatprep.subr.mxu0 0.0
  %2916 = vmatpush1.msra.mxu0 0.0
  %2917 = vmatprep.subr.mxu0 0.0
  %2918 = vmatpush1.msra.mxu0 0.0
  %2919 = vmatprep.subr.mxu0 0.0
  %2920 = vmatpush1.msra.mxu0 0.0
  %2921 = vmatprep.subr.mxu0 0.0
  %2922 = vmatpush1.msra.mxu0 0.0
  %2923 = vmatprep.subr.mxu0 0.0
  %2924 = vmatpush1.msra.mxu0 0.0
  %2925 = vmatprep.subr.mxu0 0.0
  %2926 = vmatpush1.msra.mxu0 0.0
  %2927 = vmatprep.subr.mxu0 0.0
  %2928 = vmatpush1.msra.mxu0 0.0
  %2929 = vmatprep.subr.mxu0 0.0
  %2930 = vmatpush1.msra.mxu0 0.0
  %2931 = vmatprep.subr.mxu0 0.0
  %2932 = vmatpush1.msra.mxu0 0.0
  %2933 = vmatprep.subr.mxu0 0.0
  %2934 = vmatpush1.msra.mxu0 0.0
  %2935 = vmatprep.subr.mxu0 0.0
  %2936 = vmatpush1.msra.mxu0 0.0
  %2937 = vmatprep.subr.mxu0 0.0
  %2938 = vmatpush1.msra.mxu0 0.0
  %2939 = vmatprep.subr.mxu0 0.0
  %2940 = vmatpush1.msra.mxu0 0.0
  %2941 = vmatprep.subr.mxu0 0.0
  %2942 = vmatpush1.msra.mxu0 0.0
  %2943 = vmatprep.subr.mxu0 0.0
  %2944 = vmatpush1.msra.mxu0 0.0
  %2945 = vmatprep.subr.mxu0 0.0
  %2946 = vmatpush1.msra.mxu0 0.0
  %2947 = vmatprep.subr.mxu0 0.0
  %2948 = vmatpush1.msra.mxu0 0.0
  %2949 = vmatprep.subr.mxu0 0.0
  %2950 = vmatpush1.msra.mxu0 0.0
  %2951 = vmatprep.subr.mxu0 0.0
  %2952 = vmatpush1.msra.mxu0 0.0
  %2953 = vmatprep.subr.mxu0 0.0
  %2954 = vmatpush1.msra.mxu0 0.0
  %2955 = vmatprep.subr.mxu0 0.0
  %2956 = vmatpush1.msra.mxu0 0.0
  %2957 = vmatprep.subr.mxu0 0.0
  %2958 = vmatpush1.msra.mxu0 0.0
  %2959 = vmatprep.subr.mxu0 0.0
  %2960 = vmatpush1.msra.mxu0 0.0
  %2961 = vmatprep.subr.mxu0 0.0
  %2962 = vmatpush1.msra.mxu0 0.0
  %2963 = vmatprep.subr.mxu0 0.0
  %2964 = vmatpush1.msra.mxu0 0.0
  %2965 = vmatprep.subr.mxu0 0.0
  %2966 = vmatpush1.msra.mxu0 0.0
  %2967 = vmatprep.subr.mxu0 0.0
  %2968 = vmatpush1.msra.mxu0 0.0
  %2969 = vmatprep.subr.mxu0 0.0
  %2970 = vmatpush1.msra.mxu0 0.0
  %2971 = vmatprep.subr.mxu0 0.0
  %2972 = vmatpush1.msra.mxu0 0.0
  %2973 = vmatprep.subr.mxu0 0.0
  %2974 = vmatpush1.msra.mxu0 0.0
  %2975 = vmatprep.subr.mxu0 0.0
  %2976 = vmatpush1.msra.mxu0 0.0
  %2977 = vmatprep.mubr.f32.mxu0 0.0
  %2978 = vmatmul.mubr.f32.gmra.mrb[0].mxu0 %v2911
  %v2979 = vpop.f32.mrb[0].mxu0
  %v2980 = vadd.f32 0.0, %v2979
  %v2981 = vpop.f32.mrb[0].mxu0
  %v2982 = vadd.f32 0.0, %v2981
  %2983 = vdwg.mxu0
  %2984 = vst [vmem:[%s7] sm:$0xff] %v2980
  %2985 = vst [vmem:[%s7 + $0x8] sm:$0xff] %v2982
  %v2986 = vmul.f32 %v2705, %v2705
  %v2987 = vmul.f32 %v2706, %v2706
  %v2988 = vadd.f32 %v2986, %v2987
  %2989 = vadd.xlane.f32.xlu0 %v2988
  %v2990 = vpop.xlane.xlu0 %2989
  %v2991 = vmax.f32 %v2990, 1e-24
  %v2992 = vrsqrt.pop %v2991
  %v2993 = vmul.f32 %v2992, 0.5
  %v2994 = vmul.f32 %v2991, %v2992
  %v2995 = vmul.f32 %v2994, %v2992
  %v2996 = vsub.f32 3.0, %v2995
  %v2997 = vmul.f32 %v2993, %v2996
  %v2998 = vmul.f32 %v2705, %v2997
  %v2999 = vmul.f32 %v2706, %v2997
  %v3000 = vld [vmem:[%s4] sm:$0xff]
  %3002 = vset.pattern.permute.xlu0 0
  %3003 = vperm.xlu0 %3002, %v3000
  %v3004 = vpop.permute.xlu0 %3003
  %v3006 = vmul.f32 %v2998, %v3004
  %v3007 = vmul.f32 %v2999, %v3004
  %v3008 = vmul.f32 %v2709, %v2709
  %v3009 = vmul.f32 %v2710, %v2710
  %v3010 = vadd.f32 %v3008, %v3009
  %3011 = vadd.xlane.f32.xlu0 %v3010
  %v3012 = vpop.xlane.xlu0 %3011
  %v3013 = vmax.f32 %v3012, 1e-24
  %v3014 = vrsqrt.pop %v3013
  %v3015 = vmul.f32 %v3014, 0.5
  %v3016 = vmul.f32 %v3013, %v3014
  %v3017 = vmul.f32 %v3016, %v3014
  %v3018 = vsub.f32 3.0, %v3017
  %v3019 = vmul.f32 %v3015, %v3018
  %v3020 = vmul.f32 %v2709, %v3019
  %v3021 = vmul.f32 %v2710, %v3019
  %v3022 = vld [vmem:[%s6] sm:$0xff]
  %3023 = vmatprep.subr.mxu0 %v3021
  %3024 = vmatpush1.xpose.msra.mxu0 %v3020
  %3025 = vmatprep.subr.mxu0 0.0
  %3026 = vmatpush1.xpose.msra.mxu0 0.0
  %3027 = vmatprep.subr.mxu0 0.0
  %3028 = vmatpush1.xpose.msra.mxu0 0.0
  %3029 = vmatprep.subr.mxu0 0.0
  %3030 = vmatpush1.xpose.msra.mxu0 0.0
  %3031 = vmatprep.subr.mxu0 0.0
  %3032 = vmatpush1.xpose.msra.mxu0 0.0
  %3033 = vmatprep.subr.mxu0 0.0
  %3034 = vmatpush1.xpose.msra.mxu0 0.0
  %3035 = vmatprep.subr.mxu0 0.0
  %3036 = vmatpush1.xpose.msra.mxu0 0.0
  %3037 = vmatprep.subr.mxu0 0.0
  %3038 = vmatpush1.xpose.msra.mxu0 0.0
  %3039 = vmatprep.subr.mxu0 0.0
  %3040 = vmatpush1.xpose.msra.mxu0 0.0
  %3041 = vmatprep.subr.mxu0 0.0
  %3042 = vmatpush1.xpose.msra.mxu0 0.0
  %3043 = vmatprep.subr.mxu0 0.0
  %3044 = vmatpush1.xpose.msra.mxu0 0.0
  %3045 = vmatprep.subr.mxu0 0.0
  %3046 = vmatpush1.xpose.msra.mxu0 0.0
  %3047 = vmatprep.subr.mxu0 0.0
  %3048 = vmatpush1.xpose.msra.mxu0 0.0
  %3049 = vmatprep.subr.mxu0 0.0
  %3050 = vmatpush1.xpose.msra.mxu0 0.0
  %3051 = vmatprep.subr.mxu0 0.0
  %3052 = vmatpush1.xpose.msra.mxu0 0.0
  %3053 = vmatprep.subr.mxu0 0.0
  %3054 = vmatpush1.xpose.msra.mxu0 0.0
  %3055 = vmatprep.subr.mxu0 0.0
  %3056 = vmatpush1.xpose.msra.mxu0 0.0
  %3057 = vmatprep.subr.mxu0 0.0
  %3058 = vmatpush1.xpose.msra.mxu0 0.0
  %3059 = vmatprep.subr.mxu0 0.0
  %3060 = vmatpush1.xpose.msra.mxu0 0.0
  %3061 = vmatprep.subr.mxu0 0.0
  %3062 = vmatpush1.xpose.msra.mxu0 0.0
  %3063 = vmatprep.subr.mxu0 0.0
  %3064 = vmatpush1.xpose.msra.mxu0 0.0
  %3065 = vmatprep.subr.mxu0 0.0
  %3066 = vmatpush1.xpose.msra.mxu0 0.0
  %3067 = vmatprep.subr.mxu0 0.0
  %3068 = vmatpush1.xpose.msra.mxu0 0.0
  %3069 = vmatprep.subr.mxu0 0.0
  %3070 = vmatpush1.xpose.msra.mxu0 0.0
  %3071 = vmatprep.subr.mxu0 0.0
  %3072 = vmatpush1.xpose.msra.mxu0 0.0
  %3073 = vmatprep.subr.mxu0 0.0
  %3074 = vmatpush1.xpose.msra.mxu0 0.0
  %3075 = vmatprep.subr.mxu0 0.0
  %3076 = vmatpush1.xpose.msra.mxu0 0.0
  %3077 = vmatprep.subr.mxu0 0.0
  %3078 = vmatpush1.xpose.msra.mxu0 0.0
  %3079 = vmatprep.subr.mxu0 0.0
  %3080 = vmatpush1.xpose.msra.mxu0 0.0
  %3081 = vmatprep.subr.mxu0 0.0
  %3082 = vmatpush1.xpose.msra.mxu0 0.0
  %3083 = vmatprep.subr.mxu0 0.0
  %3084 = vmatpush1.xpose.msra.mxu0 0.0
  %3085 = vmatprep.subr.mxu0 0.0
  %3086 = vmatpush1.xpose.msra.mxu0 0.0
  %3087 = vmatprep.mubr.f32.mxu0 %v3007
  %3088 = vmatmul.mubr.f32.gmra.mrb[0].mxu0 %v3006
  %v3089 = vpop.f32.mrb[0].mxu0
  %v3090 = vadd.f32 %v3022, %v3089
  %v3091 = vpop.f32.mrb[0].mxu0
  %3092 = vdwg.mxu0
  %v3093 = vsel %vm33, %v3090, -inf
  %3094 = vmax.xlane.f32.xlu0 %v3093
  %v3095 = vpop.xlane.xlu0 %3094
  %v3096 = vsub.f32 %v3090, %v3095
  %v3097 = vmul.f32 %v3096, 1.442695
  %v3098 = vpow.pop %v3097
  %v3099 = vsel %vm33, %v3098, 0.0
  %3100 = vadd.xlane.f32.xlu0 %v3099
  %v3101 = vpop.xlane.xlu0 %3100
  %v3102 = vrcp.pop %v3101
  %v3103 = vmul.f32 %v3101, %v3102
  %v3104 = vsub.f32 2.0, %v3103
  %v3105 = vmul.f32 %v3102, %v3104
  %v3106 = vmul.f32 %v3098, %v3105
  %3107 = vmatprep.subr.mxu0 0.0
  %3108 = vmatpush1.msra.mxu0 %v3106
  %3109 = vmatprep.subr.mxu0 0.0
  %3110 = vmatpush1.msra.mxu0 0.0
  %3111 = vmatprep.subr.mxu0 0.0
  %3112 = vmatpush1.msra.mxu0 0.0
  %3113 = vmatprep.subr.mxu0 0.0
  %3114 = vmatpush1.msra.mxu0 0.0
  %3115 = vmatprep.subr.mxu0 0.0
  %3116 = vmatpush1.msra.mxu0 0.0
  %3117 = vmatprep.subr.mxu0 0.0
  %3118 = vmatpush1.msra.mxu0 0.0
  %3119 = vmatprep.subr.mxu0 0.0
  %3120 = vmatpush1.msra.mxu0 0.0
  %3121 = vmatprep.subr.mxu0 0.0
  %3122 = vmatpush1.msra.mxu0 0.0
  %3123 = vmatprep.subr.mxu0 0.0
  %3124 = vmatpush1.msra.mxu0 0.0
  %3125 = vmatprep.subr.mxu0 0.0
  %3126 = vmatpush1.msra.mxu0 0.0
  %3127 = vmatprep.subr.mxu0 0.0
  %3128 = vmatpush1.msra.mxu0 0.0
  %3129 = vmatprep.subr.mxu0 0.0
  %3130 = vmatpush1.msra.mxu0 0.0
  %3131 = vmatprep.subr.mxu0 0.0
  %3132 = vmatpush1.msra.mxu0 0.0
  %3133 = vmatprep.subr.mxu0 0.0
  %3134 = vmatpush1.msra.mxu0 0.0
  %3135 = vmatprep.subr.mxu0 0.0
  %3136 = vmatpush1.msra.mxu0 0.0
  %3137 = vmatprep.subr.mxu0 0.0
  %3138 = vmatpush1.msra.mxu0 0.0
  %3139 = vmatprep.subr.mxu0 0.0
  %3140 = vmatpush1.msra.mxu0 0.0
  %3141 = vmatprep.subr.mxu0 0.0
  %3142 = vmatpush1.msra.mxu0 0.0
  %3143 = vmatprep.subr.mxu0 0.0
  %3144 = vmatpush1.msra.mxu0 0.0
  %3145 = vmatprep.subr.mxu0 0.0
  %3146 = vmatpush1.msra.mxu0 0.0
  %3147 = vmatprep.subr.mxu0 0.0
  %3148 = vmatpush1.msra.mxu0 0.0
  %3149 = vmatprep.subr.mxu0 0.0
  %3150 = vmatpush1.msra.mxu0 0.0
  %3151 = vmatprep.subr.mxu0 0.0
  %3152 = vmatpush1.msra.mxu0 0.0
  %3153 = vmatprep.subr.mxu0 0.0
  %3154 = vmatpush1.msra.mxu0 0.0
  %3155 = vmatprep.subr.mxu0 0.0
  %3156 = vmatpush1.msra.mxu0 0.0
  %3157 = vmatprep.subr.mxu0 0.0
  %3158 = vmatpush1.msra.mxu0 0.0
  %3159 = vmatprep.subr.mxu0 0.0
  %3160 = vmatpush1.msra.mxu0 0.0
  %3161 = vmatprep.subr.mxu0 0.0
  %3162 = vmatpush1.msra.mxu0 0.0
  %3163 = vmatprep.subr.mxu0 0.0
  %3164 = vmatpush1.msra.mxu0 0.0
  %3165 = vmatprep.subr.mxu0 0.0
  %3166 = vmatpush1.msra.mxu0 0.0
  %3167 = vmatprep.subr.mxu0 0.0
  %3168 = vmatpush1.msra.mxu0 0.0
  %3169 = vmatprep.subr.mxu0 0.0
  %3170 = vmatpush1.msra.mxu0 0.0
  %3171 = vmatprep.mubr.f32.mxu0 0.0
  %3172 = vmatmul.mubr.f32.gmra.mrb[0].mxu0 %v2838
  %v3173 = vpop.f32.mrb[0].mxu0
  %v3174 = vadd.f32 0.0, %v3173
  %v3175 = vpop.f32.mrb[0].mxu0
  %3176 = vdwg.mxu0
  %v3178 = vsel %vm33, %v3174, 0
  %3180 = vmatprep.subr.mxu0 %v2714
  %3181 = vmatpush1.msra.mxu0 %v2713
  %3182 = vmatprep.subr.mxu0 0.0
  %3183 = vmatpush1.msra.mxu0 0.0
  %3184 = vmatprep.subr.mxu0 0.0
  %3185 = vmatpush1.msra.mxu0 0.0
  %3186 = vmatprep.subr.mxu0 0.0
  %3187 = vmatpush1.msra.mxu0 0.0
  %3188 = vmatprep.subr.mxu0 0.0
  %3189 = vmatpush1.msra.mxu0 0.0
  %3190 = vmatprep.subr.mxu0 0.0
  %3191 = vmatpush1.msra.mxu0 0.0
  %3192 = vmatprep.subr.mxu0 0.0
  %3193 = vmatpush1.msra.mxu0 0.0
  %3194 = vmatprep.subr.mxu0 0.0
  %3195 = vmatpush1.msra.mxu0 0.0
  %3196 = vmatprep.subr.mxu0 0.0
  %3197 = vmatpush1.msra.mxu0 0.0
  %3198 = vmatprep.subr.mxu0 0.0
  %3199 = vmatpush1.msra.mxu0 0.0
  %3200 = vmatprep.subr.mxu0 0.0
  %3201 = vmatpush1.msra.mxu0 0.0
  %3202 = vmatprep.subr.mxu0 0.0
  %3203 = vmatpush1.msra.mxu0 0.0
  %3204 = vmatprep.subr.mxu0 0.0
  %3205 = vmatpush1.msra.mxu0 0.0
  %3206 = vmatprep.subr.mxu0 0.0
  %3207 = vmatpush1.msra.mxu0 0.0
  %3208 = vmatprep.subr.mxu0 0.0
  %3209 = vmatpush1.msra.mxu0 0.0
  %3210 = vmatprep.subr.mxu0 0.0
  %3211 = vmatpush1.msra.mxu0 0.0
  %3212 = vmatprep.subr.mxu0 0.0
  %3213 = vmatpush1.msra.mxu0 0.0
  %3214 = vmatprep.subr.mxu0 0.0
  %3215 = vmatpush1.msra.mxu0 0.0
  %3216 = vmatprep.subr.mxu0 0.0
  %3217 = vmatpush1.msra.mxu0 0.0
  %3218 = vmatprep.subr.mxu0 0.0
  %3219 = vmatpush1.msra.mxu0 0.0
  %3220 = vmatprep.subr.mxu0 0.0
  %3221 = vmatpush1.msra.mxu0 0.0
  %3222 = vmatprep.subr.mxu0 0.0
  %3223 = vmatpush1.msra.mxu0 0.0
  %3224 = vmatprep.subr.mxu0 0.0
  %3225 = vmatpush1.msra.mxu0 0.0
  %3226 = vmatprep.subr.mxu0 0.0
  %3227 = vmatpush1.msra.mxu0 0.0
  %3228 = vmatprep.subr.mxu0 0.0
  %3229 = vmatpush1.msra.mxu0 0.0
  %3230 = vmatprep.subr.mxu0 0.0
  %3231 = vmatpush1.msra.mxu0 0.0
  %3232 = vmatprep.subr.mxu0 0.0
  %3233 = vmatpush1.msra.mxu0 0.0
  %3234 = vmatprep.subr.mxu0 0.0
  %3235 = vmatpush1.msra.mxu0 0.0
  %3236 = vmatprep.subr.mxu0 0.0
  %3237 = vmatpush1.msra.mxu0 0.0
  %3238 = vmatprep.subr.mxu0 0.0
  %3239 = vmatpush1.msra.mxu0 0.0
  %3240 = vmatprep.subr.mxu0 0.0
  %3241 = vmatpush1.msra.mxu0 0.0
  %3242 = vmatprep.subr.mxu0 0.0
  %3243 = vmatpush1.msra.mxu0 0.0
  %3244 = vmatprep.mubr.f32.mxu0 0.0
  %3245 = vmatmul.mubr.f32.gmra.mrb[0].mxu0 %v3178
  %v3246 = vpop.f32.mrb[0].mxu0
  %v3247 = vadd.f32 0.0, %v3246
  %v3248 = vpop.f32.mrb[0].mxu0
  %v3249 = vadd.f32 0.0, %v3248
  %3250 = vdwg.mxu0
  %3251 = vst [vmem:[%s7 + $0x10] sm:$0xff] %v3247
  %3252 = vst [vmem:[%s7 + $0x18] sm:$0xff] %v3249
  // Predicated region
  $region30: #{chan_attention_forward.1} parent=0 // pred_check
    _
  $region31: #{chan_attention_forward.1} parent=0 // pred_check_branch
    %3254 = sbr.rel (0) target = $region33
  $region32: #{chan_attention_forward.1} parent=0 // pred_region
    _
  $region33: #{chan_attention_forward.1} parent=0 // pred_fallthru
    _
  // Predicated region
  $region34: #{chan_attention_forward.1} parent=0 // pred_check
    _
  $region35: #{chan_attention_forward.1} parent=0 // pred_check_branch
    %3256 = sbr.rel (0) target = $region37
  $region36: #{chan_attention_forward.1} parent=0 // pred_region
    _
  $region37: #{chan_attention_forward.1} parent=0 // pred_fallthru
    _

</llo_original>
